<compile_context>
chip_gen: v5e
topology: v5e:2x2
jax: 0.10.0
libtpu: 0.0.40
codegen_flags: <defaults>
</compile_context>

<pallas_src>
import functools

import jax
import jax.numpy as jnp
from jax import lax
from jax.experimental import pallas as pl
from jax.experimental.pallas import tpu as pltpu


# ----------------------------------------------------------------------------- kernel

def _upconv_kernel(xc_ref, xt_ref, xb_ref, wtp_ref, bt4_ref, wcp_ref, bc_ref,
                   o_ref, *, transpose_out):
    # xc_ref : (1, TI, W, Cin)  centre band of input rows
    # xt_ref : (1, 1,  W, Cin)  input row just above the band (clamped, masked in-kernel)
    # xb_ref : (1, 1,  W, Cin)  input row just below the band (clamped, masked in-kernel)
    # wtp_ref: (Cin, 4*Cin)     ConvTranspose2d taps packed kj-major: col block kj*2+ki
    # bt4_ref: (1, 4*Cin)       ConvTranspose2d bias tiled per tap block (f32)
    # wcp_ref: (9*Cin, Cout)    Conv2d taps packed dy*3+dx along K
    # bc_ref : (1, Cout)        Conv2d bias (f32)
    # o_ref  : (1, 4, TI*W, Cout)  or  (1, 4, Cout, TI*W) when transpose_out (lane-dense)
    b = pl.program_id(1)
    nb = pl.num_programs(1)
    _, TI, W, Cin = xc_ref.shape
    C2 = 2 * Cin
    f32 = jnp.float32
    cdt = wtp_ref.dtype                       # matmul operand dtype (f32 or bf16)

    # ---- stage 1: ConvTranspose2d(k=2, s=2), all 4 taps in ONE packed matmul ----------
    xc = xc_ref[0].reshape(TI * W, Cin)       # leading-dim collapse only (free)
    xt = xt_ref[0, 0]                         # (W, Cin)
    xb = xb_ref[0, 0]                         # (W, Cin)
    wtp = wtp_ref[...]

    uc = jnp.dot(xc, wtp, preferred_element_type=f32)        # (TI*W, 4*Cin)
    ut = jnp.dot(xt, wtp, preferred_element_type=f32)        # (W,    4*Cin)
    ub = jnp.dot(xb, wtp, preferred_element_type=f32)        # (W,    4*Cin)

    # Extended band E, flattened row-major (extended row e, image col q) -> e*W + q.
    # Extended row e corresponds to input row b*TI + e - 1.  Bias added once; rows that
    # fall outside the image are zeroed so they act as the 3x3 conv's 'SAME' zero padding.
    M = (TI + 2) * W
    e = jnp.concatenate([ut, uc, ub], axis=0) + bt4_ref[...]          # (M, 4*Cin) f32
    rows = lax.broadcasted_iota(jnp.int32, (M, 1), 0)
    row_ok = ((rows >= W) | (b > 0)) & ((rows < (TI + 1) * W) | (b < nb - 1))
    e = jnp.where(row_ok, e, 0.0).astype(cdt)

    # Column-shifted copies so every stage-2 slab read is an aligned full-tile load.
    # Tap blocks are packed kj-major, so the kj=0 taps (first 2*Cin cols of E) only ever
    # need the +1 column shift and the kj=1 taps (last 2*Cin cols) only the -1 shift.
    q = rows % W
    zrow = jnp.zeros((1, C2), cdt)
    e_l = jnp.concatenate([e[1:, :C2], zrow], axis=0)          # col j -> j+1
    e_l = jnp.where(q == W - 1, 0.0, e_l)                      # right image edge -> 0
    e_r = jnp.concatenate([zrow, e[:M - 1, C2:]], axis=0)      # col j -> j-1
    e_r = jnp.where(q == 0, 0.0, e_r)                          # left image edge -> 0

    # ---- stage 2: Conv2d(k=3, 'same'), one K-packed matmul per output parity ----------
    wcp = wcp_ref[...]                                         # (9*Cin, Cout)
    bc = bc_ref[...]                                           # (1, Cout) f32
    for py in range(2):
        for px in range(2):
            slabs = []
            for dy in range(3):
                for dx in range(3):
                    ry = py + dy - 1
                    rx = px + dx - 1
                    ki, si = ry & 1, (ry - (ry & 1)) // 2      # up-row parity / x-row shift
                    kj, sj = rx & 1, (rx - (rx & 1)) // 2      # up-col parity / x-col shift
                    r0 = (si + 1) * W                          # aligned: multiple of W
                    c0 = (kj * 2 + ki) * Cin                   # tap column block in E
                    if sj == 0:
                        src = e
                    elif sj == 1:                              # kj == 0 taps
                        src = e_l
                    else:                                      # sj == -1, kj == 1 taps
                        src, c0 = e_r, c0 - C2
                    slabs.append(src[r0:r0 + TI * W, c0:c0 + Cin])
            lhs = jnp.concatenate(slabs, axis=1)               # (TI*W, 9*Cin)
            outp = jnp.dot(lhs, wcp, preferred_element_type=f32) + bc   # (TI*W, Cout)
            p = py * 2 + px
            if transpose_out:
                o_ref[0, p] = jnp.transpose(outp).astype(o_ref.dtype)   # (Cout, TI*W)
            else:
                o_ref[0, p] = outp.astype(o_ref.dtype)


# ----------------------------------------------------------------------------- tiling

def _vmem_limit_bytes():
    # Per-generation budget (v5e/v6e: 128 MiB physical VMEM; v7x: 64 MiB).
    try:
        cap = pltpu.get_tpu_info().vmem_capacity_bytes
    except Exception:
        cap = 64 * 1024 * 1024          # conservative (v7x) fallback
    return int(min(max(cap // 2, 16 * 1024 * 1024), 96 * 1024 * 1024))


def _vmem_estimate(ti, W, Cin, Cout, opb):
    m = (ti + 2) * W
    inputs = 2 * m * Cin * opb                                  # double-buffered band + halos
    outputs = 2 * 4 * ti * W * Cout * 4                         # double-buffered f32 out block
    weights = 2 * (4 * Cin * Cin + 9 * Cin * Cout) * opb + 2 * (4 * Cin + Cout) * 4
    e_vals = m * 4 * Cin * (4 + 2 * opb)                        # E (f32 + cast) + EL/ER
    lhs = ti * W * 9 * Cin * opb + 2 * ti * W * Cout * 4        # stage-2 lhs + result tiles
    return inputs + outputs + weights + e_vals + lhs


def _pick_band(H, W, Cin, Cout, opb, budget):
    """Largest divisor of H whose VMEM estimate fits the budget (keeps (TI*W) % 8 == 0)."""
    smallest_valid = H
    for cand in range(H, 0, -1):
        if H % cand:
            continue
        if cand != H and (cand * W) % 8 != 0:
            continue
        if _vmem_estimate(cand, W, Cin, Cout, opb) <= budget:
            return cand
        smallest_valid = cand
    return smallest_valid


# ----------------------------------------------------------------------------- wrapper

def up_conv_forward(x_nchw, wt, bt, wc, bc, *, compute_dtype=jnp.float32):
    """UpConv forward (UpsampleType.CONV_TRANSPOSE path).

    x_nchw: (N, Cin, H, W)
    wt: (Cin, Cin, 2, 2), bt: (Cin,)      -- ConvTranspose2d params
    wc: (Cout, Cin, 3, 3), bc: (Cout,)    -- Conv2d params
    compute_dtype: matmul-operand dtype (jnp.float32 or jnp.bfloat16; accumulation is f32)
    returns: (N, Cout, 2H, 2W) float32
    """
    N, Cin, H, W = x_nchw.shape
    Cout = wc.shape[0]
    H2, W2 = 2 * H, 2 * W
    cdt = jnp.dtype(compute_dtype)

    vmem_limit = _vmem_limit_bytes()
    TI = _pick_band(H, W, Cin, Cout, cdt.itemsize, vmem_limit // 2)
    nb = H // TI

    # Lane-dense output layout (biggest store-side lever for sub-128 Cout).
    transpose_out = (Cout % 128 != 0) and (Cout % 8 == 0) and \
                    ((TI * W) % 128 == 0 or TI == H)

    # Layout glue on the smallest tensors only (no intermediate-sized passes).
    x_nhwc = jnp.transpose(x_nchw, (0, 2, 3, 1)).astype(cdt)                 # (N,H,W,Cin)
    wt_packed = jnp.transpose(wt, (0, 3, 2, 1)).reshape(Cin, 4 * Cin).astype(cdt)
    bt4 = jnp.tile(bt, 4).reshape(1, 4 * Cin).astype(jnp.float32)
    wc_packed = jnp.transpose(wc, (2, 3, 1, 0)).reshape(9 * Cin, Cout).astype(cdt)
    bc_row = bc.reshape(1, Cout).astype(jnp.float32)

    if transpose_out:
        out_shape = jax.ShapeDtypeStruct((N, 4, Cout, H * W), jnp.float32)
        out_spec = pl.BlockSpec((1, 4, Cout, TI * W), lambda n, b: (n, 0, 0, b))
    else:
        out_shape = jax.ShapeDtypeStruct((N, 4, H * W, Cout), jnp.float32)
        out_spec = pl.BlockSpec((1, 4, TI * W, Cout), lambda n, b: (n, 0, b, 0))

    out_p = pl.pallas_call(
        functools.partial(_upconv_kernel, transpose_out=transpose_out),
        out_shape=out_shape,
        grid=(N, nb),
        in_specs=[
            pl.BlockSpec((1, TI, W, Cin), lambda n, b: (n, b, 0, 0)),
            pl.BlockSpec((1, 1, W, Cin),
                         lambda n, b: (n, jnp.maximum(b * TI - 1, 0), 0, 0)),
            pl.BlockSpec((1, 1, W, Cin),
                         lambda n, b: (n, jnp.minimum((b + 1) * TI, H - 1), 0, 0)),
            pl.BlockSpec((Cin, 4 * Cin), lambda n, b: (0, 0)),
            pl.BlockSpec((1, 4 * Cin), lambda n, b: (0, 0)),
            pl.BlockSpec((9 * Cin, Cout), lambda n, b: (0, 0)),
            pl.BlockSpec((1, Cout), lambda n, b: (0, 0)),
        ],
        out_specs=out_spec,
        compiler_params=pltpu.CompilerParams(
            dimension_semantics=("parallel", "parallel"),
            vmem_limit_bytes=vmem_limit),
    )(x_nhwc, x_nhwc, x_nhwc, wt_packed, bt4, wc_packed, bc_row)

    # Fold the parity un-interleave (and any layout fix-up) into one output transpose.
    if transpose_out:
        out = out_p.reshape(N, 2, 2, Cout, H, W)          # (n, py, px, co, i, j)
        out = jnp.transpose(out, (0, 3, 4, 1, 5, 2))      # (n, co, i, py, j, px)
    else:
        out = out_p.reshape(N, 2, 2, H, W, Cout)          # (n, py, px, i, j, co)
        out = jnp.transpose(out, (0, 5, 3, 1, 4, 2))      # (n, co, i, py, j, px)
    return out.reshape(N, Cout, H2, W2)


# ----------------------------------------------------------------------------- reference

def _reference(x, wt, bt, wc, bc):
    # Independent pure-JAX reference of the PyTorch forward (NCHW).
    N, Cin, H, W = x.shape
    # ConvTranspose2d(k=2, s=2): out[n,d,2i+k,2j+l] = sum_c x[n,c,i,j]*wt[c,d,k,l] + bt[d]
    t = jnp.einsum('ncij,cdkl->ndikjl', x, wt)
    up = t.reshape(N, Cin, 2 * H, 2 * W) + bt[None, :, None, None]
    out = lax.conv_general_dilated(
        up, wc, window_strides=(1, 1), padding='SAME',
        dimension_numbers=('NCHW', 'OIHW', 'NCHW'))
    return out + bc[None, :, None, None]


if __name__ == "__main__":
    key = jax.random.PRNGKey(0)
    kx, k1, k2, k3, k4 = jax.random.split(key, 5)
    N, Cin, Cout, H, W = 2, 4, 8, 16, 16

    x = jax.random.normal(kx, (N, Cin, H, W), dtype=jnp.float32)
    # Deterministic synthetic parameters (shapes per nn.ConvTranspose2d / nn.Conv2d).
    wt = jax.random.normal(k1, (Cin, Cin, 2, 2), dtype=jnp.float32) * 0.2
    bt = jax.random.normal(k2, (Cin,), dtype=jnp.float32) * 0.1
    wc = jax.random.normal(k3, (Cout, Cin, 3, 3), dtype=jnp.float32) * 0.2
    bc = jax.random.normal(k4, (Cout,), dtype=jnp.float32) * 0.1

    ref = _reference(x, wt, bt, wc, bc)

    # f32-operand path (exact check vs. reference).
    out = jax.jit(up_conv_forward)(x, wt, bt, wc, bc)
    out = jax.block_until_ready(out)
    assert out.shape == (N, Cout, 2 * H, 2 * W), out.shape
    err = float(jnp.max(jnp.abs(out - ref)))
    assert err < 1e-4, err

    # bf16-operand path (MXU-native on v6e/v7x); loose tolerance sanity check.
    out_bf16 = jax.jit(
        functools.partial(up_conv_forward, compute_dtype=jnp.bfloat16)
    )(x, wt, bt, wc, bc)
    out_bf16 = jax.block_until_ready(out_bf16)
    err_bf16 = float(jnp.max(jnp.abs(out_bf16 - ref)))
    assert err_bf16 < 0.15, err_bf16

    print("KERNEL_OK")
</pallas_src>

<mosaic_0001>
module attributes {stable_mosaic.version = 11 : i64} {
  func.func @_upconv_kernel(%arg0: i32, %arg1: i32, %arg2: memref<1x16x16x4xf32, #tpu.memory_space<vmem>>, %arg3: memref<1x1x16x4xf32, #tpu.memory_space<vmem>>, %arg4: memref<1x1x16x4xf32, #tpu.memory_space<vmem>>, %arg5: memref<4x16xf32, #tpu.memory_space<vmem>>, %arg6: memref<1x16xf32, #tpu.memory_space<vmem>>, %arg7: memref<36x8xf32, #tpu.memory_space<vmem>>, %arg8: memref<1x8xf32, #tpu.memory_space<vmem>>, %arg9: memref<1x4x8x256xf32, #tpu.memory_space<vmem>>) attributes {dimension_semantics = [#tpu.dimension_semantics<parallel>, #tpu.dimension_semantics<parallel>], iteration_bounds = array<i64: 2, 1>, scalar_prefetch = 0 : i64, scratch_operands = 0 : i64, tpu.core_type = #tpu.core_type<tc>, window_params = [{transform_indices = @transform_0, window_bounds = array<i64: 1, 16, 16, 4>}, {transform_indices = @transform_1, window_bounds = array<i64: 1, 1, 16, 4>}, {transform_indices = @transform_2, window_bounds = array<i64: 1, 1, 16, 4>}, {pipeline_mode = #tpu.pipeline_mode<synchronous>, transform_indices = @transform_3, window_bounds = array<i64: 4, 16>}, {pipeline_mode = #tpu.pipeline_mode<synchronous>, transform_indices = @transform_4, window_bounds = array<i64: 1, 16>}, {pipeline_mode = #tpu.pipeline_mode<synchronous>, transform_indices = @transform_5, window_bounds = array<i64: 36, 8>}, {pipeline_mode = #tpu.pipeline_mode<synchronous>, transform_indices = @transform_6, window_bounds = array<i64: 1, 8>}, {transform_indices = @transform_7, window_bounds = array<i64: 1, 4, 8, 256>}]} {
    %c0 = arith.constant 0 : index
    %c0_0 = arith.constant 0 : index
    %c0_1 = arith.constant 0 : index
    %c0_2 = arith.constant 0 : index
    %0 = vector.load %arg2[%c0, %c0_0, %c0_1, %c0_2] : memref<1x16x16x4xf32, #tpu.memory_space<vmem>>, vector<1x16x16x4xf32>
    %1 = vector.shape_cast %0 : vector<1x16x16x4xf32> to vector<16x16x4xf32>
    %2 = vector.shape_cast %1 : vector<16x16x4xf32> to vector<256x4xf32>
    %c0_3 = arith.constant 0 : index
    %c0_4 = arith.constant 0 : index
    %c0_5 = arith.constant 0 : index
    %c0_6 = arith.constant 0 : index
    %3 = vector.load %arg3[%c0_3, %c0_4, %c0_5, %c0_6] : memref<1x1x16x4xf32, #tpu.memory_space<vmem>>, vector<1x1x16x4xf32>
    %4 = vector.shape_cast %3 : vector<1x1x16x4xf32> to vector<16x4xf32>
    %c0_7 = arith.constant 0 : index
    %c0_8 = arith.constant 0 : index
    %c0_9 = arith.constant 0 : index
    %c0_10 = arith.constant 0 : index
    %5 = vector.load %arg4[%c0_7, %c0_8, %c0_9, %c0_10] : memref<1x1x16x4xf32, #tpu.memory_space<vmem>>, vector<1x1x16x4xf32>
    %6 = vector.shape_cast %5 : vector<1x1x16x4xf32> to vector<16x4xf32>
    %c0_11 = arith.constant 0 : index
    %c0_12 = arith.constant 0 : index
    %7 = vector.load %arg5[%c0_11, %c0_12] : memref<4x16xf32, #tpu.memory_space<vmem>>, vector<4x16xf32>
    %cst = arith.constant dense<0.000000e+00> : vector<256x16xf32>
    %8 = tpu.matmul %2, %7, %cst {dimension_numbers = #tpu.dot_dimension_numbers<[1], [0], [0], [1], [0, 0, 1, 1], [], []>} : vector<256x4xf32>, vector<4x16xf32>, vector<256x16xf32> -> vector<256x16xf32>
    %cst_13 = arith.constant dense<0.000000e+00> : vector<16x16xf32>
    %9 = tpu.matmul %4, %7, %cst_13 {dimension_numbers = #tpu.dot_dimension_numbers<[1], [0], [0], [1], [0, 0, 1, 1], [], []>} : vector<16x4xf32>, vector<4x16xf32>, vector<16x16xf32> -> vector<16x16xf32>
    %cst_14 = arith.constant dense<0.000000e+00> : vector<16x16xf32>
    %10 = tpu.matmul %6, %7, %cst_14 {dimension_numbers = #tpu.dot_dimension_numbers<[1], [0], [0], [1], [0, 0, 1, 1], [], []>} : vector<16x4xf32>, vector<4x16xf32>, vector<16x16xf32> -> vector<16x16xf32>
    %11 = tpu.concatenate %9, %8, %10 in 0 : vector<16x16xf32>, vector<256x16xf32>, vector<16x16xf32> -> vector<288x16xf32>
    %c0_15 = arith.constant 0 : index
    %c0_16 = arith.constant 0 : index
    %12 = vector.load %arg6[%c0_15, %c0_16] : memref<1x16xf32, #tpu.memory_space<vmem>>, vector<1x16xf32>
    %13 = vector.broadcast %12 : vector<1x16xf32> to vector<288x16xf32>
    %14 = arith.addf %11, %13 : vector<288x16xf32>
    %15 = tpu.iota {dimensions = array<i32: 0>} : vector<288x1xi32>
    %c16_i32 = arith.constant 16 : i32
    %16 = vector.broadcast %c16_i32 : i32 to vector<288x1xi32>
    %17 = arith.cmpi sge, %15, %16 : vector<288x1xi32>
    %c0_i32 = arith.constant 0 : i32
    %18 = arith.cmpi sgt, %arg1, %c0_i32 : i32
    %19 = vector.broadcast %18 : i1 to vector<288x1xi1>
    %20 = arith.ori %17, %19 : vector<288x1xi1>
    %c272_i32 = arith.constant 272 : i32
    %21 = vector.broadcast %c272_i32 : i32 to vector<288x1xi32>
    %22 = arith.cmpi slt, %15, %21 : vector<288x1xi32>
    %c0_i32_17 = arith.constant 0 : i32
    %23 = arith.cmpi slt, %arg1, %c0_i32_17 : i32
    %24 = vector.broadcast %23 : i1 to vector<288x1xi1>
    %25 = arith.ori %22, %24 : vector<288x1xi1>
    %26 = arith.andi %20, %25 : vector<288x1xi1>
    %cst_18 = arith.constant 0.000000e+00 : f32
    %27 = vector.shape_cast %26 : vector<288x1xi1> to vector<288x1xi1>
    %28 = vector.broadcast %27 : vector<288x1xi1> to vector<288x16xi1>
    %29 = vector.broadcast %cst_18 : f32 to vector<288x16xf32>
    %30 = arith.select %28, %14, %29 : vector<288x16xi1>, vector<288x16xf32>
    %c16_i32_19 = arith.constant 16 : i32
    %c0_i32_20 = arith.constant 0 : i32
    %31 = arith.cmpi eq, %c16_i32_19, %c0_i32_20 : i32
    %c1_i32 = arith.constant 1 : i32
    %32 = arith.select %31, %c1_i32, %c16_i32_19 : i32
    %33 = vector.broadcast %32 : i32 to vector<288x1xi32>
    %34 = arith.remsi %15, %33 : vector<288x1xi32>
    %c0_i32_21 = arith.constant 0 : i32
    %35 = vector.broadcast %c0_i32_21 : i32 to vector<288x1xi32>
    %36 = arith.cmpi ne, %34, %35 : vector<288x1xi32>
    %c0_i32_22 = arith.constant 0 : i32
    %37 = vector.broadcast %c0_i32_22 : i32 to vector<288x1xi32>
    %38 = arith.cmpi slt, %34, %37 : vector<288x1xi32>
    %c0_i32_23 = arith.constant 0 : i32
    %39 = arith.cmpi slt, %32, %c0_i32_23 : i32
    %40 = vector.broadcast %39 : i1 to vector<288x1xi1>
    %41 = vector.broadcast %40 : vector<288x1xi1> to vector<288x1xi1>
    %42 = arith.xori %38, %41 : vector<288x1xi1>
    %43 = arith.andi %42, %36 : vector<288x1xi1>
    %44 = vector.broadcast %32 : i32 to vector<288x1xi32>
    %45 = arith.addi %34, %44 : vector<288x1xi32>
    %46 = arith.select %43, %45, %34 : vector<288x1xi1>, vector<288x1xi32>
    %cst_24 = arith.constant 0.000000e+00 : f32
    %47 = vector.broadcast %cst_24 : f32 to vector<1x8xf32>
    %48 = vector.extract_strided_slice %30 {offsets = [1, 0], sizes = [287, 8], strides = [1, 1]} : vector<288x16xf32> to vector<287x8xf32>
    %49 = tpu.concatenate %48, %47 in 0 : vector<287x8xf32>, vector<1x8xf32> -> vector<288x8xf32>
    %c15_i32 = arith.constant 15 : i32
    %50 = vector.broadcast %c15_i32 : i32 to vector<288x1xi32>
    %51 = arith.cmpi eq, %46, %50 : vector<288x1xi32>
    %cst_25 = arith.constant 0.000000e+00 : f32
    %52 = vector.shape_cast %51 : vector<288x1xi1> to vector<288x1xi1>
    %53 = vector.broadcast %52 : vector<288x1xi1> to vector<288x8xi1>
    %54 = vector.broadcast %cst_25 : f32 to vector<288x8xf32>
    %55 = arith.select %53, %54, %49 : vector<288x8xi1>, vector<288x8xf32>
    %56 = vector.extract_strided_slice %30 {offsets = [0, 8], sizes = [287, 8], strides = [1, 1]} : vector<288x16xf32> to vector<287x8xf32>
    %57 = tpu.concatenate %47, %56 in 0 : vector<1x8xf32>, vector<287x8xf32> -> vector<288x8xf32>
    %c0_i32_26 = arith.constant 0 : i32
    %58 = vector.broadcast %c0_i32_26 : i32 to vector<288x1xi32>
    %59 = arith.cmpi eq, %46, %58 : vector<288x1xi32>
    %cst_27 = arith.constant 0.000000e+00 : f32
    %60 = vector.shape_cast %59 : vector<288x1xi1> to vector<288x1xi1>
    %61 = vector.broadcast %60 : vector<288x1xi1> to vector<288x8xi1>
    %62 = vector.broadcast %cst_27 : f32 to vector<288x8xf32>
    %63 = arith.select %61, %62, %57 : vector<288x8xi1>, vector<288x8xf32>
    %c0_28 = arith.constant 0 : index
    %c0_29 = arith.constant 0 : index
    %64 = vector.load %arg7[%c0_28, %c0_29] : memref<36x8xf32, #tpu.memory_space<vmem>>, vector<36x8xf32>
    %c0_30 = arith.constant 0 : index
    %c0_31 = arith.constant 0 : index
    %65 = vector.load %arg8[%c0_30, %c0_31] : memref<1x8xf32, #tpu.memory_space<vmem>>, vector<1x8xf32>
    %66 = vector.extract_strided_slice %63 {offsets = [0, 4], sizes = [256, 4], strides = [1, 1]} : vector<288x8xf32> to vector<256x4xf32>
    %67 = vector.extract_strided_slice %30 {offsets = [0, 4], sizes = [256, 4], strides = [1, 1]} : vector<288x16xf32> to vector<256x4xf32>
    %68 = vector.extract_strided_slice %30 {offsets = [0, 12], sizes = [256, 4], strides = [1, 1]} : vector<288x16xf32> to vector<256x4xf32>
    %69 = vector.extract_strided_slice %63 {offsets = [16, 0], sizes = [256, 4], strides = [1, 1]} : vector<288x8xf32> to vector<256x4xf32>
    %70 = vector.extract_strided_slice %30 {offsets = [16, 0], sizes = [256, 4], strides = [1, 1]} : vector<288x16xf32> to vector<256x4xf32>
    %71 = vector.extract_strided_slice %30 {offsets = [16, 8], sizes = [256, 4], strides = [1, 1]} : vector<288x16xf32> to vector<256x4xf32>
    %72 = vector.extract_strided_slice %63 {offsets = [16, 4], sizes = [256, 4], strides = [1, 1]} : vector<288x8xf32> to vector<256x4xf32>
    %73 = vector.extract_strided_slice %30 {offsets = [16, 4], sizes = [256, 4], strides = [1, 1]} : vector<288x16xf32> to vector<256x4xf32>
    %74 = vector.extract_strided_slice %30 {offsets = [16, 12], sizes = [256, 4], strides = [1, 1]} : vector<288x16xf32> to vector<256x4xf32>
    %75 = tpu.concatenate %66, %67, %68, %69, %70, %71, %72, %73, %74 in 1 : vector<256x4xf32>, vector<256x4xf32>, vector<256x4xf32>, vector<256x4xf32>, vector<256x4xf32>, vector<256x4xf32>, vector<256x4xf32>, vector<256x4xf32>, vector<256x4xf32> -> vector<256x36xf32>
    %cst_32 = arith.constant dense<0.000000e+00> : vector<256x8xf32>
    %76 = tpu.matmul %75, %64, %cst_32 {dimension_numbers = #tpu.dot_dimension_numbers<[1], [0], [0], [1], [0, 0, 1, 1], [], []>} : vector<256x36xf32>, vector<36x8xf32>, vector<256x8xf32> -> vector<256x8xf32>
    %77 = vector.broadcast %65 : vector<1x8xf32> to vector<256x8xf32>
    %78 = arith.addf %76, %77 : vector<256x8xf32>
    %79 = tpu.transpose %78, [1, 0] : vector<256x8xf32> -> vector<8x256xf32>
    %c0_33 = arith.constant 0 : index
    %c0_34 = arith.constant 0 : index
    %c0_35 = arith.constant 0 : index
    %c0_36 = arith.constant 0 : index
    %80 = vector.load %arg9[%c0_33, %c0_34, %c0_35, %c0_36] : memref<1x4x8x256xf32, #tpu.memory_space<vmem>>, vector<1x1x8x256xf32>
    %81 = vector.shape_cast %80 : vector<1x1x8x256xf32> to vector<8x256xf32>
    %82 = vector.shape_cast %79 : vector<8x256xf32> to vector<1x1x8x256xf32>
    tpu.vector_store %arg9[%c0_33, %c0_34, %c0_35, %c0_36], %82 {strides = array<i32>} : memref<1x4x8x256xf32, #tpu.memory_space<vmem>>, vector<1x1x8x256xf32>,
    %83 = vector.extract_strided_slice %30 {offsets = [0, 4], sizes = [256, 4], strides = [1, 1]} : vector<288x16xf32> to vector<256x4xf32>
    %84 = vector.extract_strided_slice %30 {offsets = [0, 12], sizes = [256, 4], strides = [1, 1]} : vector<288x16xf32> to vector<256x4xf32>
    %85 = vector.extract_strided_slice %55 {offsets = [0, 4], sizes = [256, 4], strides = [1, 1]} : vector<288x8xf32> to vector<256x4xf32>
    %86 = vector.extract_strided_slice %30 {offsets = [16, 0], sizes = [256, 4], strides = [1, 1]} : vector<288x16xf32> to vector<256x4xf32>
    %87 = vector.extract_strided_slice %30 {offsets = [16, 8], sizes = [256, 4], strides = [1, 1]} : vector<288x16xf32> to vector<256x4xf32>
    %88 = vector.extract_strided_slice %55 {offsets = [16, 0], sizes = [256, 4], strides = [1, 1]} : vector<288x8xf32> to vector<256x4xf32>
    %89 = vector.extract_strided_slice %30 {offsets = [16, 4], sizes = [256, 4], strides = [1, 1]} : vector<288x16xf32> to vector<256x4xf32>
    %90 = vector.extract_strided_slice %30 {offsets = [16, 12], sizes = [256, 4], strides = [1, 1]} : vector<288x16xf32> to vector<256x4xf32>
    %91 = vector.extract_strided_slice %55 {offsets = [16, 4], sizes = [256, 4], strides = [1, 1]} : vector<288x8xf32> to vector<256x4xf32>
    %92 = tpu.concatenate %83, %84, %85, %86, %87, %88, %89, %90, %91 in 1 : vector<256x4xf32>, vector<256x4xf32>, vector<256x4xf32>, vector<256x4xf32>, vector<256x4xf32>, vector<256x4xf32>, vector<256x4xf32>, vector<256x4xf32>, vector<256x4xf32> -> vector<256x36xf32>
    %cst_37 = arith.constant dense<0.000000e+00> : vector<256x8xf32>
    %93 = tpu.matmul %92, %64, %cst_37 {dimension_numbers = #tpu.dot_dimension_numbers<[1], [0], [0], [1], [0, 0, 1, 1], [], []>} : vector<256x36xf32>, vector<36x8xf32>, vector<256x8xf32> -> vector<256x8xf32>
    %94 = vector.broadcast %65 : vector<1x8xf32> to vector<256x8xf32>
    %95 = arith.addf %93, %94 : vector<256x8xf32>
    %96 = tpu.transpose %95, [1, 0] : vector<256x8xf32> -> vector<8x256xf32>
    %c0_38 = arith.constant 0 : index
    %c1 = arith.constant 1 : index
    %c0_39 = arith.constant 0 : index
    %c0_40 = arith.constant 0 : index
    %97 = vector.load %arg9[%c0_38, %c1, %c0_39, %c0_40] : memref<1x4x8x256xf32, #tpu.memory_space<vmem>>, vector<1x1x8x256xf32>
    %98 = vector.shape_cast %97 : vector<1x1x8x256xf32> to vector<8x256xf32>
    %99 = vector.shape_cast %96 : vector<8x256xf32> to vector<1x1x8x256xf32>
    tpu.vector_store %arg9[%c0_38, %c1, %c0_39, %c0_40], %99 {strides = array<i32>} : memref<1x4x8x256xf32, #tpu.memory_space<vmem>>, vector<1x1x8x256xf32>,
    %100 = vector.extract_strided_slice %63 {offsets = [16, 0], sizes = [256, 4], strides = [1, 1]} : vector<288x8xf32> to vector<256x4xf32>
    %101 = vector.extract_strided_slice %30 {offsets = [16, 0], sizes = [256, 4], strides = [1, 1]} : vector<288x16xf32> to vector<256x4xf32>
    %102 = vector.extract_strided_slice %30 {offsets = [16, 8], sizes = [256, 4], strides = [1, 1]} : vector<288x16xf32> to vector<256x4xf32>
    %103 = vector.extract_strided_slice %63 {offsets = [16, 4], sizes = [256, 4], strides = [1, 1]} : vector<288x8xf32> to vector<256x4xf32>
    %104 = vector.extract_strided_slice %30 {offsets = [16, 4], sizes = [256, 4], strides = [1, 1]} : vector<288x16xf32> to vector<256x4xf32>
    %105 = vector.extract_strided_slice %30 {offsets = [16, 12], sizes = [256, 4], strides = [1, 1]} : vector<288x16xf32> to vector<256x4xf32>
    %106 = vector.extract_strided_slice %63 {offsets = [32, 0], sizes = [256, 4], strides = [1, 1]} : vector<288x8xf32> to vector<256x4xf32>
    %107 = vector.extract_strided_slice %30 {offsets = [32, 0], sizes = [256, 4], strides = [1, 1]} : vector<288x16xf32> to vector<256x4xf32>
    %108 = vector.extract_strided_slice %30 {offsets = [32, 8], sizes = [256, 4], strides = [1, 1]} : vector<288x16xf32> to vector<256x4xf32>
    %109 = tpu.concatenate %100, %101, %102, %103, %104, %105, %106, %107, %108 in 1 : vector<256x4xf32>, vector<256x4xf32>, vector<256x4xf32>, vector<256x4xf32>, vector<256x4xf32>, vector<256x4xf32>, vector<256x4xf32>, vector<256x4xf32>, vector<256x4xf32> -> vector<256x36xf32>
    %cst_41 = arith.constant dense<0.000000e+00> : vector<256x8xf32>
    %110 = tpu.matmul %109, %64, %cst_41 {dimension_numbers = #tpu.dot_dimension_numbers<[1], [0], [0], [1], [0, 0, 1, 1], [], []>} : vector<256x36xf32>, vector<36x8xf32>, vector<256x8xf32> -> vector<256x8xf32>
    %111 = vector.broadcast %65 : vector<1x8xf32> to vector<256x8xf32>
    %112 = arith.addf %110, %111 : vector<256x8xf32>
    %113 = tpu.transpose %112, [1, 0] : vector<256x8xf32> -> vector<8x256xf32>
    %c0_42 = arith.constant 0 : index
    %c2 = arith.constant 2 : index
    %c0_43 = arith.constant 0 : index
    %c0_44 = arith.constant 0 : index
    %114 = vector.load %arg9[%c0_42, %c2, %c0_43, %c0_44] : memref<1x4x8x256xf32, #tpu.memory_space<vmem>>, vector<1x1x8x256xf32>
    %115 = vector.shape_cast %114 : vector<1x1x8x256xf32> to vector<8x256xf32>
    %116 = vector.shape_cast %113 : vector<8x256xf32> to vector<1x1x8x256xf32>
    tpu.vector_store %arg9[%c0_42, %c2, %c0_43, %c0_44], %116 {strides = array<i32>} : memref<1x4x8x256xf32, #tpu.memory_space<vmem>>, vector<1x1x8x256xf32>,
    %117 = vector.extract_strided_slice %30 {offsets = [16, 0], sizes = [256, 4], strides = [1, 1]} : vector<288x16xf32> to vector<256x4xf32>
    %118 = vector.extract_strided_slice %30 {offsets = [16, 8], sizes = [256, 4], strides = [1, 1]} : vector<288x16xf32> to vector<256x4xf32>
    %119 = vector.extract_strided_slice %55 {offsets = [16, 0], sizes = [256, 4], strides = [1, 1]} : vector<288x8xf32> to vector<256x4xf32>
    %120 = vector.extract_strided_slice %30 {offsets = [16, 4], sizes = [256, 4], strides = [1, 1]} : vector<288x16xf32> to vector<256x4xf32>
    %121 = vector.extract_strided_slice %30 {offsets = [16, 12], sizes = [256, 4], strides = [1, 1]} : vector<288x16xf32> to vector<256x4xf32>
    %122 = vector.extract_strided_slice %55 {offsets = [16, 4], sizes = [256, 4], strides = [1, 1]} : vector<288x8xf32> to vector<256x4xf32>
    %123 = vector.extract_strided_slice %30 {offsets = [32, 0], sizes = [256, 4], strides = [1, 1]} : vector<288x16xf32> to vector<256x4xf32>
    %124 = vector.extract_strided_slice %30 {offsets = [32, 8], sizes = [256, 4], strides = [1, 1]} : vector<288x16xf32> to vector<256x4xf32>
    %125 = vector.extract_strided_slice %55 {offsets = [32, 0], sizes = [256, 4], strides = [1, 1]} : vector<288x8xf32> to vector<256x4xf32>
    %126 = tpu.concatenate %117, %118, %119, %120, %121, %122, %123, %124, %125 in 1 : vector<256x4xf32>, vector<256x4xf32>, vector<256x4xf32>, vector<256x4xf32>, vector<256x4xf32>, vector<256x4xf32>, vector<256x4xf32>, vector<256x4xf32>, vector<256x4xf32> -> vector<256x36xf32>
    %cst_45 = arith.constant dense<0.000000e+00> : vector<256x8xf32>
    %127 = tpu.matmul %126, %64, %cst_45 {dimension_numbers = #tpu.dot_dimension_numbers<[1], [0], [0], [1], [0, 0, 1, 1], [], []>} : vector<256x36xf32>, vector<36x8xf32>, vector<256x8xf32> -> vector<256x8xf32>
    %128 = vector.broadcast %65 : vector<1x8xf32> to vector<256x8xf32>
    %129 = arith.addf %127, %128 : vector<256x8xf32>
    %130 = tpu.transpose %129, [1, 0] : vector<256x8xf32> -> vector<8x256xf32>
    %c0_46 = arith.constant 0 : index
    %c3 = arith.constant 3 : index
    %c0_47 = arith.constant 0 : index
    %c0_48 = arith.constant 0 : index
    %131 = vector.load %arg9[%c0_46, %c3, %c0_47, %c0_48] : memref<1x4x8x256xf32, #tpu.memory_space<vmem>>, vector<1x1x8x256xf32>
    %132 = vector.shape_cast %131 : vector<1x1x8x256xf32> to vector<8x256xf32>
    %133 = vector.shape_cast %130 : vector<8x256xf32> to vector<1x1x8x256xf32>
    tpu.vector_store %arg9[%c0_46, %c3, %c0_47, %c0_48], %133 {strides = array<i32>} : memref<1x4x8x256xf32, #tpu.memory_space<vmem>>, vector<1x1x8x256xf32>,
    return
  }
  func.func @transform_0(%arg0: i32, %arg1: i32) -> (i32, i32, i32, i32) {
    %c0_i32 = arith.constant 0 : i32
    %c0_i32_0 = arith.constant 0 : i32
    %c0_i32_1 = arith.constant 0 : i32
    return %arg0, %arg1, %c0_i32, %c0_i32_0 : i32, i32, i32, i32
  }
  func.func @transform_1(%arg0: i32, %arg1: i32) -> (i32, i32, i32, i32) {
    %c16_i32 = arith.constant 16 : i32
    %0 = arith.muli %arg1, %c16_i32 : i32
    %c1_i32 = arith.constant 1 : i32
    %1 = arith.subi %0, %c1_i32 : i32
    %c0_i32 = arith.constant 0 : i32
    %2 = arith.maxsi %1, %c0_i32 : i32
    %c0_i32_0 = arith.constant 0 : i32
    %c0_i32_1 = arith.constant 0 : i32
    %c0_i32_2 = arith.constant 0 : i32
    return %arg0, %2, %c0_i32_0, %c0_i32_1 : i32, i32, i32, i32
  }
  func.func @transform_2(%arg0: i32, %arg1: i32) -> (i32, i32, i32, i32) {
    %c1_i32 = arith.constant 1 : i32
    %0 = arith.addi %arg1, %c1_i32 : i32
    %c16_i32 = arith.constant 16 : i32
    %1 = arith.muli %0, %c16_i32 : i32
    %c15_i32 = arith.constant 15 : i32
    %2 = arith.minsi %1, %c15_i32 : i32
    %c0_i32 = arith.constant 0 : i32
    %c0_i32_0 = arith.constant 0 : i32
    %c0_i32_1 = arith.constant 0 : i32
    return %arg0, %2, %c0_i32, %c0_i32_0 : i32, i32, i32, i32
  }
  func.func @transform_3(%arg0: i32, %arg1: i32) -> (i32, i32) {
    %c0_i32 = arith.constant 0 : i32
    %c0_i32_0 = arith.constant 0 : i32
    %c0_i32_1 = arith.constant 0 : i32
    return %c0_i32, %c0_i32_0 : i32, i32
  }
  func.func @transform_4(%arg0: i32, %arg1: i32) -> (i32, i32) {
    %c0_i32 = arith.constant 0 : i32
    %c0_i32_0 = arith.constant 0 : i32
    %c0_i32_1 = arith.constant 0 : i32
    return %c0_i32, %c0_i32_0 : i32, i32
  }
  func.func @transform_5(%arg0: i32, %arg1: i32) -> (i32, i32) {
    %c0_i32 = arith.constant 0 : i32
    %c0_i32_0 = arith.constant 0 : i32
    %c0_i32_1 = arith.constant 0 : i32
    return %c0_i32, %c0_i32_0 : i32, i32
  }
  func.func @transform_6(%arg0: i32, %arg1: i32) -> (i32, i32) {
    %c0_i32 = arith.constant 0 : i32
    %c0_i32_0 = arith.constant 0 : i32
    %c0_i32_1 = arith.constant 0 : i32
    return %c0_i32, %c0_i32_0 : i32, i32
  }
  func.func @transform_7(%arg0: i32, %arg1: i32) -> (i32, i32, i32, i32) {
    %c0_i32 = arith.constant 0 : i32
    %c0_i32_0 = arith.constant 0 : i32
    %c0_i32_1 = arith.constant 0 : i32
    return %arg0, %c0_i32, %c0_i32_0, %arg1 : i32, i32, i32, i32
  }
}

</mosaic_0001>

<llo_original>
// kernel: tile.9
$region0: #{tile.9}
  %s0 = inlined_call_operand.vmem [shape: f32[4,4], index: 0, kind: input, shape index: {}]
  %s1 = inlined_call_operand.vmem [shape: f32[1,16], index: 1, kind: output, shape index: {}]
  $region1: #{tile.9} parent=0
    #allocation0 [shape = 'u8[4096]{0}', space=vmem, size = 0x1000, scoped, tag = 'scoped mem for output reshape']
    #allocation1 [shape = 'u8[4096]{0}', space=vmem, size = 0x1000, scoped, tag = 'scoped mem for input reshape']
    %s3 = ssub.s32 16, 1
    %v4 = vld [vmem:[%s0] sm:%s3]
    %5 = vst [vmem:[#allocation1] sm:%s3] %v4
    %v6 = vld [vmem:[#allocation1] sm:$0x1]
    %vm7 = vcmask 31744
    %8 = vst.msk [vmem:[#allocation0] sm:$0x1] %vm7, %v6
    %s9 = scalar_lea.vmem [#allocation1], 3
    %v10 = vld [vmem:[%s9] sm:$0x1]
    %11 = vrot.lane.b32.xlu0 %v10, 12
    %v12 = vpop.permute.xlu0 %11
    %vm13 = vcmask 130144
    %14 = vst.msk [vmem:[#allocation0] sm:$0x1] %vm13, %v12
    %s15 = scalar_lea.vmem [#allocation1], 2
    %v16 = vld [vmem:[%s15] sm:$0x1]
    %17 = vrot.lane.b32.xlu0 %v16, 8
    %v18 = vpop.permute.xlu0 %17
    %vm19 = vcmask 97344
    %20 = vst.msk [vmem:[#allocation0] sm:$0x1] %vm19, %v18
    %s21 = scalar_lea.vmem [#allocation1], 1
    %v22 = vld [vmem:[%s21] sm:$0x1]
    %23 = vrot.lane.b32.xlu0 %v22, 4
    %v24 = vpop.permute.xlu0 %23
    %vm25 = vcmask 64544
    %26 = vst.msk [vmem:[#allocation0] sm:$0x1] %vm25, %v24
    %s28 = ssub.s32 2, 1
    %v29 = vld [vmem:[#allocation0] sm:%s28]
    %s31 = ssub.s32 2, 1
    %32 = vst [vmem:[%s1] sm:%s31] %v29

// kernel: tile.8
$region0: #{tile.8}
  #allocation0 [shape = 's32[1]{0}', space=sflag, size = 0x4, scoped, tag = 'scoped memory for tile.8']
  %s0 = inlined_call_operand.vmem [shape: f32[4], index: 0, kind: input, shape index: {}]
  %s1 = inlined_call_operand.vmem [shape: f32[4,4], index: 1, kind: output, shape index: {}]
  // Predicated region
  $region2: #{tile.8} parent=0 // pred_check
    _
  $region3: #{tile.8} parent=0 // pred_check_branch
    %3 = sbr.rel (0) target = $region5
  $region4: #{tile.8} parent=0 // pred_region
    _
  $region5: #{tile.8} parent=0 // pred_fallthru
    _
  %v4 = vld [vmem:[%s0] ss:$0 sm:$0xff]
  %5 = vst [vmem:[%s1] sm:$0xf] %v4

// kernel: up_conv_forward.1
$region0: #{up_conv_forward.1}
  #allocation0 [shape = 'u32[]', space=smem, size = 0x4, offset = 0x4, fixed_abs, tag = 'smem constant byte address 0x4 - core index']
  #allocation1 [shape = 'u32[72,128]{1,0:T(1,128)}', space=vmem, size = 0x9000, scoped, tag = 'internal scratch']
  %s0 = inlined_call_operand.vmem [shape: f32[2,16,16,4], index: 0, kind: input, shape index: {}, may-alias: {0,1,2}]
  %s1 = inlined_call_operand.vmem [shape: f32[2,16,16,4], index: 1, kind: input, shape index: {}, may-alias: {0,1,2}]
  %s2 = inlined_call_operand.vmem [shape: f32[2,16,16,4], index: 2, kind: input, shape index: {}, may-alias: {0,1,2}]
  %s3 = inlined_call_operand.vmem [shape: f32[4,16], index: 3, kind: input, shape index: {}]
  %s4 = inlined_call_operand.vmem [shape: f32[1,16], index: 4, kind: input, shape index: {}]
  %s5 = inlined_call_operand.vmem [shape: f32[36,8], index: 5, kind: input, shape index: {}]
  %s6 = inlined_call_operand.vmem [shape: f32[1,8], index: 6, kind: input, shape index: {}]
  %s7 = inlined_call_operand.vmem [shape: f32[2,4,8,256], index: 7, kind: output, shape index: {}]
  %s8 = sld [smem:[#allocation0]]
  $region61: #{up_conv_forward.1} parent=0
    _
  %s10 = ssub.s32 1, %s8
  %s11 = scalar_select 0, %s10, %s8
  loop: start=0, step=1, limit=4
  $region2: #{up_conv_forward.1} parent=0 // loop_pre_header
    _
  $region3: #{up_conv_forward.1} parent=0 // loop_header
    %s13 = sphi 0, %s17
    %p14 = scmp.ge.s32.totalorder %s13, 4
    %s20 = sphi 0, %s32
    %s21 = sphi 0, %s28
    %s22 = sphi 0, %s20
    %s23 = sphi 0, %s21
    %s24 = sphi 0, %s22
    %s25 = sphi 0, %s23
    %s37 = sphi 0, %s39
    %s40 = sphi 0, %s37
    %s41 = sphi 0, %s40
    %s57 = sphi 0, %s41
    %s73 = sphi 0, %s75
    %s76 = sphi 0, %s73
    %s77 = sphi 0, %s76
    %s93 = sphi 0, %s77
    %s109 = sphi 0, %s111
    %s112 = sphi 0, %s109
    %s113 = sphi 0, %s112
    %s129 = sphi 0, %s113
    %s133 = sphi 0, %s133
    %s135 = sphi 0, %s133
    %s136 = sphi 0, %s135
    %s150 = sphi 0, %s136
    %s154 = sphi 0, %s154
    %s156 = sphi 0, %s154
    %s157 = sphi 0, %s156
    %s171 = sphi 0, %s157
    %s175 = sphi 0, %s175
    %s177 = sphi 0, %s175
    %s178 = sphi 0, %s177
    %s192 = sphi 0, %s178
    %s196 = sphi 0, %s196
    %s198 = sphi 0, %s196
    %s199 = sphi 0, %s198
    %s213 = sphi 0, %s199
    %s221 = sphi 0, %s223
    %s224 = sphi 0, %s221
    %s225 = sphi 0, %s224
    %s241 = sphi 0, %s225
  $region4: #{up_conv_forward.1} parent=0 // loop_header_branch
    %16 = sbr.rel (%p14) target = $region8
  $region5: #{up_conv_forward.1} parent=0 // loop_body
    %s18 = ssub.s32 %s13, 1
    %s19 = ssub.s32 %s13, 2
    %s26 = sadd.s32 1, %s21
    %p27 = scmp.ge.s32.totalorder %s26, 1
    %s28 = scalar_select %p27, 0, %s26
    %s29 = sadd.s32 1, %s20
    %s30 = scalar_select %p27, %s29, %s20
    %p31 = scmp.ge.s32.totalorder %s30, 2
    %s32 = scalar_select %p31, 0, %s30
    %s33 = ssub.s32 %s20, %s32
    %s34 = ssub.s32 %s21, %s28
    %s35 = sor.u32 %s33, %s34
    %p36 = scmp.eq.s32.totalorder %s35, 0
    %s38 = sadd.s32 %s37, 1
    %s39 = scalar_select %p36, %s37, %s38
    %p42 = pneg %p36
    %p43 = scmp.eq.s32.totalorder %s13, 1
    %p44 = por %p42, %p43
    %p45 = scmp.ne.s32.totalorder %s37, %s40
    %p46 = scmp.eq.s32.totalorder %s13, 0
    %p47 = por %p45, %p46
    %p48 = scmp.ne.s32.totalorder %s37, %s40
    %p49 = scmp.eq.s32.totalorder %s18, 1
    %p50 = por %p48, %p49
    %p51 = scmp.ne.s32.totalorder %s40, %s41
    %p52 = scmp.eq.s32.totalorder %s18, 0
    %p53 = por %p51, %p52
    %p54 = scmp.ne.s32.totalorder %s40, %s41
    %p55 = scmp.eq.s32.totalorder %s19, 1
    %p56 = por %p54, %p55
    %p58 = scmp.ne.s32.totalorder %s41, %s57
    %p59 = scmp.eq.s32.totalorder %s19, 0
    %p60 = por %p58, %p59
    %s61 = smul.u32 %s21, 16
    %s62 = ssub.s32 %s61, 1
    %p63 = scmp.gt.s32.totalorder %s62, 0
    %s64 = scalar_select %p63, %s62, 0
    %s65 = smul.u32 %s28, 16
    %s66 = ssub.s32 %s65, 1
    %p67 = scmp.gt.s32.totalorder %s66, 0
    %s68 = scalar_select %p67, %s66, 0
    %s69 = ssub.s32 %s20, %s32
    %s70 = ssub.s32 %s64, %s68
    %s71 = sor.u32 %s69, %s70
    %p72 = scmp.eq.s32.totalorder %s71, 0
    %s74 = sadd.s32 %s73, 1
    %s75 = scalar_select %p72, %s73, %s74
    %p78 = pneg %p72
    %p79 = scmp.eq.s32.totalorder %s13, 1
    %p80 = por %p78, %p79
    %p81 = scmp.ne.s32.totalorder %s73, %s76
    %p82 = scmp.eq.s32.totalorder %s13, 0
    %p83 = por %p81, %p82
    %p84 = scmp.ne.s32.totalorder %s73, %s76
    %p85 = scmp.eq.s32.totalorder %s18, 1
    %p86 = por %p84, %p85
    %p87 = scmp.ne.s32.totalorder %s76, %s77
    %p88 = scmp.eq.s32.totalorder %s18, 0
    %p89 = por %p87, %p88
    %p90 = scmp.ne.s32.totalorder %s76, %s77
    %p91 = scmp.eq.s32.totalorder %s19, 1
    %p92 = por %p90, %p91
    %p94 = scmp.ne.s32.totalorder %s77, %s93
    %p95 = scmp.eq.s32.totalorder %s19, 0
    %p96 = por %p94, %p95
    %s97 = sadd.s32 %s21, 1
    %s98 = smul.u32 %s97, 16
    %p99 = scmp.lt.s32.totalorder %s98, 15
    %s100 = scalar_select %p99, %s98, 15
    %s101 = sadd.s32 %s28, 1
    %s102 = smul.u32 %s101, 16
    %p103 = scmp.lt.s32.totalorder %s102, 15
    %s104 = scalar_select %p103, %s102, 15
    %s105 = ssub.s32 %s20, %s32
    %s106 = ssub.s32 %s100, %s104
    %s107 = sor.u32 %s105, %s106
    %p108 = scmp.eq.s32.totalorder %s107, 0
    %s110 = sadd.s32 %s109, 1
    %s111 = scalar_select %p108, %s109, %s110
    %p114 = pneg %p108
    %p115 = scmp.eq.s32.totalorder %s13, 1
    %p116 = por %p114, %p115
    %p117 = scmp.ne.s32.totalorder %s109, %s112
    %p118 = scmp.eq.s32.totalorder %s13, 0
    %p119 = por %p117, %p118
    %p120 = scmp.ne.s32.totalorder %s109, %s112
    %p121 = scmp.eq.s32.totalorder %s18, 1
    %p122 = por %p120, %p121
    %p123 = scmp.ne.s32.totalorder %s112, %s113
    %p124 = scmp.eq.s32.totalorder %s18, 0
    %p125 = por %p123, %p124
    %p126 = scmp.ne.s32.totalorder %s112, %s113
    %p127 = scmp.eq.s32.totalorder %s19, 1
    %p128 = por %p126, %p127
    %p130 = scmp.ne.s32.totalorder %s113, %s129
    %p131 = scmp.eq.s32.totalorder %s19, 0
    %p132 = por %p130, %p131
    %s134 = sadd.s32 %s133, 1
    %p137 = scmp.eq.s32.totalorder %s13, 1
    %p138 = scmp.ne.s32.totalorder %s133, %s135
    %p139 = scmp.eq.s32.totalorder %s13, 0
    %p140 = por %p138, %p139
    %p141 = scmp.ne.s32.totalorder %s133, %s135
    %p142 = scmp.eq.s32.totalorder %s18, 1
    %p143 = por %p141, %p142
    %p144 = scmp.ne.s32.totalorder %s135, %s136
    %p145 = scmp.eq.s32.totalorder %s18, 0
    %p146 = por %p144, %p145
    %p147 = scmp.ne.s32.totalorder %s135, %s136
    %p148 = scmp.eq.s32.totalorder %s19, 1
    %p149 = por %p147, %p148
    %p151 = scmp.ne.s32.totalorder %s136, %s150
    %p152 = scmp.eq.s32.totalorder %s19, 0
    %p153 = por %p151, %p152
    %s155 = sadd.s32 %s154, 1
    %p158 = scmp.eq.s32.totalorder %s13, 1
    %p159 = scmp.ne.s32.totalorder %s154, %s156
    %p160 = scmp.eq.s32.totalorder %s13, 0
    %p161 = por %p159, %p160
    %p162 = scmp.ne.s32.totalorder %s154, %s156
    %p163 = scmp.eq.s32.totalorder %s18, 1
    %p164 = por %p162, %p163
    %p165 = scmp.ne.s32.totalorder %s156, %s157
    %p166 = scmp.eq.s32.totalorder %s18, 0
    %p167 = por %p165, %p166
    %p168 = scmp.ne.s32.totalorder %s156, %s157
    %p169 = scmp.eq.s32.totalorder %s19, 1
    %p170 = por %p168, %p169
    %p172 = scmp.ne.s32.totalorder %s157, %s171
    %p173 = scmp.eq.s32.totalorder %s19, 0
    %p174 = por %p172, %p173
    %s176 = sadd.s32 %s175, 1
    %p179 = scmp.eq.s32.totalorder %s13, 1
    %p180 = scmp.ne.s32.totalorder %s175, %s177
    %p181 = scmp.eq.s32.totalorder %s13, 0
    %p182 = por %p180, %p181
    %p183 = scmp.ne.s32.totalorder %s175, %s177
    %p184 = scmp.eq.s32.totalorder %s18, 1
    %p185 = por %p183, %p184
    %p186 = scmp.ne.s32.totalorder %s177, %s178
    %p187 = scmp.eq.s32.totalorder %s18, 0
    %p188 = por %p186, %p187
    %p189 = scmp.ne.s32.totalorder %s177, %s178
    %p190 = scmp.eq.s32.totalorder %s19, 1
    %p191 = por %p189, %p190
    %p193 = scmp.ne.s32.totalorder %s178, %s192
    %p194 = scmp.eq.s32.totalorder %s19, 0
    %p195 = por %p193, %p194
    %s197 = sadd.s32 %s196, 1
    %p200 = scmp.eq.s32.totalorder %s13, 1
    %p201 = scmp.ne.s32.totalorder %s196, %s198
    %p202 = scmp.eq.s32.totalorder %s13, 0
    %p203 = por %p201, %p202
    %p204 = scmp.ne.s32.totalorder %s196, %s198
    %p205 = scmp.eq.s32.totalorder %s18, 1
    %p206 = por %p204, %p205
    %p207 = scmp.ne.s32.totalorder %s198, %s199
    %p208 = scmp.eq.s32.totalorder %s18, 0
    %p209 = por %p207, %p208
    %p210 = scmp.ne.s32.totalorder %s198, %s199
    %p211 = scmp.eq.s32.totalorder %s19, 1
    %p212 = por %p210, %p211
    %p214 = scmp.ne.s32.totalorder %s199, %s213
    %p215 = scmp.eq.s32.totalorder %s19, 0
    %p216 = por %p214, %p215
    %s217 = ssub.s32 %s20, %s32
    %s218 = ssub.s32 %s21, %s28
    %s219 = sor.u32 %s217, %s218
    %p220 = scmp.eq.s32.totalorder %s219, 0
    %s222 = sadd.s32 %s221, 1
    %s223 = scalar_select %p220, %s221, %s222
    %p226 = pneg %p220
    %p227 = scmp.eq.s32.totalorder %s13, 1
    %p228 = por %p226, %p227
    %p229 = scmp.ne.s32.totalorder %s221, %s224
    %p230 = scmp.eq.s32.totalorder %s13, 0
    %p231 = por %p229, %p230
    %p232 = scmp.ne.s32.totalorder %s221, %s224
    %p233 = scmp.eq.s32.totalorder %s18, 1
    %p234 = por %p232, %p233
    %p235 = scmp.ne.s32.totalorder %s224, %s225
    %p236 = scmp.eq.s32.totalorder %s18, 0
    %p237 = por %p235, %p236
    %p238 = scmp.ne.s32.totalorder %s224, %s225
    %p239 = scmp.eq.s32.totalorder %s19, 1
    %p240 = por %p238, %p239
    %p242 = scmp.ne.s32.totalorder %s225, %s241
    %p243 = scmp.eq.s32.totalorder %s19, 0
    %p244 = por %p242, %p243
    %p245 = scmp.le.s32.totalorder 1, %s13
    %p246 = scmp.lt.s32.totalorder %s13, 3
    %p247 = pnand %p245, %p246
    %p248 = pneg %p247
    // Predicated region
    $region9: #{up_conv_forward.1} parent=5 // pred_check
      _
    $region10: #{up_conv_forward.1} parent=5 // pred_check_branch
      %250 = sbr.rel (%p247) target = $region12
    $region11: #{up_conv_forward.1} parent=5 // pred_region
      %s251 = ssub.s32 %s13, 1
      // Predicated region
      $region13: #{up_conv_forward.1} parent=11 // pred_check
        %p252 = pneg %p146
      $region14: #{up_conv_forward.1} parent=11 // pred_check_branch
        %254 = sbr.rel (%p252) target = $region16
      $region15: #{up_conv_forward.1} parent=11 // pred_region
        _
      $region16: #{up_conv_forward.1} parent=11 // pred_fallthru
        _
      // Predicated region
      $region17: #{up_conv_forward.1} parent=11 // pred_check
        %p255 = pneg %p167
      $region18: #{up_conv_forward.1} parent=11 // pred_check_branch
        %257 = sbr.rel (%p255) target = $region20
      $region19: #{up_conv_forward.1} parent=11 // pred_region
        _
      $region20: #{up_conv_forward.1} parent=11 // pred_fallthru
        _
      // Predicated region
      $region21: #{up_conv_forward.1} parent=11 // pred_check
        %p258 = pneg %p188
      $region22: #{up_conv_forward.1} parent=11 // pred_check_branch
        %260 = sbr.rel (%p258) target = $region24
      $region23: #{up_conv_forward.1} parent=11 // pred_region
        _
      $region24: #{up_conv_forward.1} parent=11 // pred_fallthru
        _
      // Predicated region
      $region25: #{up_conv_forward.1} parent=11 // pred_check
        %p261 = pneg %p209
      $region26: #{up_conv_forward.1} parent=11 // pred_check_branch
        %263 = sbr.rel (%p261) target = $region28
      $region27: #{up_conv_forward.1} parent=11 // pred_region
        _
      $region28: #{up_conv_forward.1} parent=11 // pred_fallthru
        _
    $region12: #{up_conv_forward.1} parent=5 // pred_fallthru
      _
    %p264 = scmp.lt.s32.totalorder %s13, 2
    // Predicated region
    $region29: #{up_conv_forward.1} parent=5 // pred_check
      %p265 = pneg %p264
    $region30: #{up_conv_forward.1} parent=5 // pred_check_branch
      %267 = sbr.rel (%p265) target = $region32
    $region31: #{up_conv_forward.1} parent=5 // pred_region
      // Predicated region
      $region33: #{up_conv_forward.1} parent=31 // pred_check
        %p268 = pneg %p47
      $region34: #{up_conv_forward.1} parent=31 // pred_check_branch
        %270 = sbr.rel (%p268) target = $region36
      $region35: #{up_conv_forward.1} parent=31 // pred_region
        %s271 = smul.u32 16, %s21
        %p272 = scmp.lt.s32.totalorder %s20, 1
        %s273 = scalar_select %p272, %s20, 1
        %p274 = scmp.lt.s32.totalorder %s271, 15
        %s275 = scalar_select %p274, %s271, 15
        %s276 = smul.addr %s275, 2
        %s277 = smul.addr %s273, 32
        %s278 = sadd.s32 %s276, %s277
        %s279 = smul.addr %s278, 8
        %s280 = scalar_lea.vmem %s0, %s279
        %s281 = smul.u32 16, %s21
      $region36: #{up_conv_forward.1} parent=31 // pred_fallthru
        _
      // Predicated region
      $region37: #{up_conv_forward.1} parent=31 // pred_check
        %p282 = pneg %p83
      $region38: #{up_conv_forward.1} parent=31 // pred_check_branch
        %284 = sbr.rel (%p282) target = $region40
      $region39: #{up_conv_forward.1} parent=31 // pred_region
        %s285 = smul.u32 %s21, 16
        %s286 = ssub.s32 %s285, 1
        %p287 = scmp.gt.s32.totalorder %s286, 0
        %s288 = scalar_select %p287, %s286, 0
        %p289 = scmp.lt.s32.totalorder %s20, 1
        %s290 = scalar_select %p289, %s20, 1
        %p291 = scmp.lt.s32.totalorder %s288, 15
        %s292 = scalar_select %p291, %s288, 15
        %s293 = smul.addr %s292, 2
        %s294 = smul.addr %s290, 32
        %s295 = sadd.s32 %s293, %s294
        %s296 = smul.addr %s295, 8
        %s297 = scalar_lea.vmem %s1, %s296
        %s298 = smul.u32 %s21, 16
        %s299 = ssub.s32 %s298, 1
        %p300 = scmp.gt.s32.totalorder %s299, 0
        %s301 = scalar_select %p300, %s299, 0
      $region40: #{up_conv_forward.1} parent=31 // pred_fallthru
        _
      // Predicated region
      $region41: #{up_conv_forward.1} parent=31 // pred_check
        %p302 = pneg %p119
      $region42: #{up_conv_forward.1} parent=31 // pred_check_branch
        %304 = sbr.rel (%p302) target = $region44
      $region43: #{up_conv_forward.1} parent=31 // pred_region
        %s305 = sadd.s32 %s21, 1
        %s306 = smul.u32 %s305, 16
        %p307 = scmp.lt.s32.totalorder %s306, 15
        %s308 = scalar_select %p307, %s306, 15
        %p309 = scmp.lt.s32.totalorder %s20, 1
        %s310 = scalar_select %p309, %s20, 1
        %p311 = scmp.lt.s32.totalorder %s308, 15
        %s312 = scalar_select %p311, %s308, 15
        %s313 = smul.addr %s312, 2
        %s314 = smul.addr %s310, 32
        %s315 = sadd.s32 %s313, %s314
        %s316 = smul.addr %s315, 8
        %s317 = scalar_lea.vmem %s2, %s316
        %s318 = sadd.s32 %s21, 1
        %s319 = smul.u32 %s318, 16
        %p320 = scmp.lt.s32.totalorder %s319, 15
        %s321 = scalar_select %p320, %s319, 15
      $region44: #{up_conv_forward.1} parent=31 // pred_fallthru
        _
    $region32: #{up_conv_forward.1} parent=5 // pred_fallthru
      _
    %p322 = scmp.le.s32.totalorder 1, %s13
    %p323 = scmp.lt.s32.totalorder %s13, 3
    %p324 = pnand %p322, %p323
    %p325 = pneg %p324
    // Predicated region
    $region45: #{up_conv_forward.1} parent=5 // pred_check
      _
    $region46: #{up_conv_forward.1} parent=5 // pred_check_branch
      %327 = sbr.rel (%p324) target = $region48
    $region47: #{up_conv_forward.1} parent=5 // pred_region
      %s328 = ssub.s32 %s13, 1
      %s329 = smul.u32 16, %s23
      %p330 = scmp.lt.s32.totalorder %s22, 1
      %s331 = scalar_select %p330, %s22, 1
      %p332 = scmp.lt.s32.totalorder %s329, 15
      %s333 = scalar_select %p332, %s329, 15
      %s334 = smul.addr %s333, 2
      %s335 = smul.addr %s331, 32
      %s336 = sadd.s32 %s334, %s335
      %s337 = smul.addr %s336, 8
      %s338 = scalar_lea.vmem %s0, %s337
      %p339 = pneg %p53
      %p340 = pneg %p50
      %s341 = smul.u32 %s23, 16
      %s342 = ssub.s32 %s341, 1
      %p343 = scmp.gt.s32.totalorder %s342, 0
      %s344 = scalar_select %p343, %s342, 0
      %p345 = scmp.lt.s32.totalorder %s22, 1
      %s346 = scalar_select %p345, %s22, 1
      %p347 = scmp.lt.s32.totalorder %s344, 15
      %s348 = scalar_select %p347, %s344, 15
      %s349 = smul.addr %s348, 2
      %s350 = smul.addr %s346, 32
      %s351 = sadd.s32 %s349, %s350
      %s352 = smul.addr %s351, 8
      %s353 = scalar_lea.vmem %s1, %s352
      %p354 = pneg %p89
      %p355 = pneg %p86
      %s356 = sadd.s32 %s23, 1
      %s357 = smul.u32 %s356, 16
      %p358 = scmp.lt.s32.totalorder %s357, 15
      %s359 = scalar_select %p358, %s357, 15
      %p360 = scmp.lt.s32.totalorder %s22, 1
      %s361 = scalar_select %p360, %s22, 1
      %p362 = scmp.lt.s32.totalorder %s359, 15
      %s363 = scalar_select %p362, %s359, 15
      %s364 = smul.addr %s363, 2
      %s365 = smul.addr %s361, 32
      %s366 = sadd.s32 %s364, %s365
      %s367 = smul.addr %s366, 8
      %s368 = scalar_lea.vmem %s2, %s367
      %p369 = pneg %p125
      %p370 = pneg %p122
      %p371 = pneg %p146
      %p372 = pneg %p143
      %p373 = pneg %p167
      %p374 = pneg %p164
      %p375 = pneg %p188
      %p376 = pneg %p185
      %p377 = pneg %p209
      %p378 = pneg %p206
      %p379 = pneg %p237
      %p380 = pneg %p234
      %s381 = smul.u32 2, %s23
      %p382 = scmp.lt.s32.totalorder %s22, 1
      %s383 = scalar_select %p382, %s22, 1
      %p384 = scmp.lt.s32.totalorder %s381, 1
      %s385 = scalar_select %p384, %s381, 1
      %s386 = smul.addr %s383, 8
      %s387 = sadd.s32 %s385, %s386
      %s388 = smul.addr %s387, 8
      %s389 = scalar_lea.vmem %s7, %s388
      %s390 = smul.u32 16, %s23
      %p391 = scmp.lt.s32.totalorder %s22, 1
      %s392 = scalar_select %p391, %s22, 1
      %p393 = scmp.lt.s32.totalorder %s390, 15
      %s394 = scalar_select %p393, %s390, 15
      %s395 = smul.addr %s394, 2
      %s396 = smul.addr %s392, 32
      %s397 = sadd.s32 %s395, %s396
      %s398 = smul.addr %s397, 8
      %s399 = scalar_lea.vmem %s0, %s398
      %s400 = smul.u32 16, %s23
      %s401 = smul.u32 %s23, 16
      %s402 = ssub.s32 %s401, 1
      %p403 = scmp.gt.s32.totalorder %s402, 0
      %s404 = scalar_select %p403, %s402, 0
      %p405 = scmp.lt.s32.totalorder %s22, 1
      %s406 = scalar_select %p405, %s22, 1
      %p407 = scmp.lt.s32.totalorder %s404, 15
      %s408 = scalar_select %p407, %s404, 15
      %s409 = smul.addr %s408, 2
      %s410 = smul.addr %s406, 32
      %s411 = sadd.s32 %s409, %s410
      %s412 = smul.addr %s411, 8
      %s413 = scalar_lea.vmem %s1, %s412
      %s414 = smul.u32 %s23, 16
      %s415 = ssub.s32 %s414, 1
      %p416 = scmp.gt.s32.totalorder %s415, 0
      %s417 = scalar_select %p416, %s415, 0
      %s418 = sadd.s32 %s23, 1
      %s419 = smul.u32 %s418, 16
      %p420 = scmp.lt.s32.totalorder %s419, 15
      %s421 = scalar_select %p420, %s419, 15
      %p422 = scmp.lt.s32.totalorder %s22, 1
      %s423 = scalar_select %p422, %s22, 1
      %p424 = scmp.lt.s32.totalorder %s421, 15
      %s425 = scalar_select %p424, %s421, 15
      %s426 = smul.addr %s425, 2
      %s427 = smul.addr %s423, 32
      %s428 = sadd.s32 %s426, %s427
      %s429 = smul.addr %s428, 8
      %s430 = scalar_lea.vmem %s2, %s429
      %s431 = sadd.s32 %s23, 1
      %s432 = smul.u32 %s431, 16
      %p433 = scmp.lt.s32.totalorder %s432, 15
      %s434 = scalar_select %p433, %s432, 15
      %s435 = smul.u32 2, %s23
      %p436 = scmp.lt.s32.totalorder %s22, 1
      %s437 = scalar_select %p436, %s22, 1
      %p438 = scmp.lt.s32.totalorder %s435, 1
      %s439 = scalar_select %p438, %s435, 1
      %s440 = smul.addr %s437, 8
      %s441 = sadd.s32 %s439, %s440
      %s442 = smul.addr %s441, 8
      %s443 = scalar_lea.vmem %s7, %s442
      %s444 = smul.u32 2, %s23
      %v445 = vld [vmem:[%s399] sm:$0xff]
      %v446 = vld [vmem:[%s399 + $0x8] sm:$0xff]
      %v447 = vld [vmem:[%s399 + $0x10] sm:$0xff]
      %v448 = vld [vmem:[%s399 + $0x18] sm:$0xff]
      %v449 = vld [vmem:[%s399 + $0x20] sm:$0xff]
      %v450 = vld [vmem:[%s399 + $0x28] sm:$0xff]
      %v451 = vld [vmem:[%s399 + $0x30] sm:$0xff]
      %v452 = vld [vmem:[%s399 + $0x38] sm:$0xff]
      %v453 = vld [vmem:[%s399 + $0x40] sm:$0xff]
      %v454 = vld [vmem:[%s399 + $0x48] sm:$0xff]
      %v455 = vld [vmem:[%s399 + $0x50] sm:$0xff]
      %v456 = vld [vmem:[%s399 + $0x58] sm:$0xff]
      %v457 = vld [vmem:[%s399 + $0x60] sm:$0xff]
      %v458 = vld [vmem:[%s399 + $0x68] sm:$0xff]
      %v459 = vld [vmem:[%s399 + $0x70] sm:$0xff]
      %v460 = vld [vmem:[%s399 + $0x78] sm:$0xff]
      %v461 = vld [vmem:[%s399 + $0x80] sm:$0xff]
      %v462 = vld [vmem:[%s399 + $0x88] sm:$0xff]
      %v463 = vld [vmem:[%s399 + $0x90] sm:$0xff]
      %v464 = vld [vmem:[%s399 + $0x98] sm:$0xff]
      %v465 = vld [vmem:[%s399 + $0xa0] sm:$0xff]
      %v466 = vld [vmem:[%s399 + $0xa8] sm:$0xff]
      %v467 = vld [vmem:[%s399 + $0xb0] sm:$0xff]
      %v468 = vld [vmem:[%s399 + $0xb8] sm:$0xff]
      %v469 = vld [vmem:[%s399 + $0xc0] sm:$0xff]
      %v470 = vld [vmem:[%s399 + $0xc8] sm:$0xff]
      %v471 = vld [vmem:[%s399 + $0xd0] sm:$0xff]
      %v472 = vld [vmem:[%s399 + $0xd8] sm:$0xff]
      %v473 = vld [vmem:[%s399 + $0xe0] sm:$0xff]
      %v474 = vld [vmem:[%s399 + $0xe8] sm:$0xff]
      %v475 = vld [vmem:[%s399 + $0xf0] sm:$0xff]
      %v476 = vld [vmem:[%s399 + $0xf8] sm:$0xff]
      %v477 = vld [vmem:[%s413] sm:$0xff]
      %v478 = vld [vmem:[%s413 + $0x8] sm:$0xff]
      %v479 = vld [vmem:[%s430] sm:$0xff]
      %v480 = vld [vmem:[%s430 + $0x8] sm:$0xff]
      %v481 = vld [vmem:[%s3] sm:$0xf]
      %vm482 = vcmask 31744
      %v484 = vsel %vm482, %v445, 0
      %v487 = vsel %vm482, %v446, 0
      %v490 = vsel %vm482, %v447, 0
      %v493 = vsel %vm482, %v448, 0
      %v496 = vsel %vm482, %v449, 0
      %v499 = vsel %vm482, %v450, 0
      %v502 = vsel %vm482, %v451, 0
      %v505 = vsel %vm482, %v452, 0
      %v508 = vsel %vm482, %v453, 0
      %v511 = vsel %vm482, %v454, 0
      %v514 = vsel %vm482, %v455, 0
      %v517 = vsel %vm482, %v456, 0
      %v520 = vsel %vm482, %v457, 0
      %v523 = vsel %vm482, %v458, 0
      %v526 = vsel %vm482, %v459, 0
      %v529 = vsel %vm482, %v460, 0
      %v532 = vsel %vm482, %v461, 0
      %v535 = vsel %vm482, %v462, 0
      %v538 = vsel %vm482, %v463, 0
      %v541 = vsel %vm482, %v464, 0
      %v544 = vsel %vm482, %v465, 0
      %v547 = vsel %vm482, %v466, 0
      %v550 = vsel %vm482, %v467, 0
      %v553 = vsel %vm482, %v468, 0
      %v556 = vsel %vm482, %v469, 0
      %v559 = vsel %vm482, %v470, 0
      %v562 = vsel %vm482, %v471, 0
      %v565 = vsel %vm482, %v472, 0
      %v568 = vsel %vm482, %v473, 0
      %v571 = vsel %vm482, %v474, 0
      %v574 = vsel %vm482, %v475, 0
      %v577 = vsel %vm482, %v476, 0
      %vm579 = vcmask 1043456
      %v581 = vsel %vm579, %v481, 0
      %583 = vmatpush.msra.mxu0 0.0
      %584 = vmatpush.msra.mxu0 0.0
      %585 = vmatpush.msra.mxu0 0.0
      %586 = vmatpush.msra.mxu0 0.0
      %587 = vmatpush.msra.mxu0 0.0
      %588 = vmatpush.msra.mxu0 0.0
      %589 = vmatpush.msra.mxu0 0.0
      %590 = vmatpush.msra.mxu0 0.0
      %591 = vmatpush.msra.mxu0 0.0
      %592 = vmatpush.msra.mxu0 0.0
      %593 = vmatpush.msra.mxu0 0.0
      %594 = vmatpush.msra.mxu0 0.0
      %595 = vmatpush.msra.mxu0 0.0
      %596 = vmatpush.msra.mxu0 0.0
      %597 = vmatpush.msra.mxu0 0.0
      %598 = vmatpush.msra.mxu0 %v581
      %599 = vmatmul.f32.gmra.mxu0 %v484
      %v600 = vpop.f32.mrf.mxu0
      %v601 = vadd.f32 0.0, %v600
      %602 = vmatmul.f32.gmra.mxu0 %v487
      %v603 = vpop.f32.mrf.mxu0
      %v604 = vadd.f32 0.0, %v603
      %605 = vmatmul.f32.gmra.mxu0 %v490
      %v606 = vpop.f32.mrf.mxu0
      %v607 = vadd.f32 0.0, %v606
      %608 = vmatmul.f32.gmra.mxu0 %v493
      %v609 = vpop.f32.mrf.mxu0
      %v610 = vadd.f32 0.0, %v609
      %611 = vmatmul.f32.gmra.mxu0 %v496
      %v612 = vpop.f32.mrf.mxu0
      %v613 = vadd.f32 0.0, %v612
      %614 = vmatmul.f32.gmra.mxu0 %v499
      %v615 = vpop.f32.mrf.mxu0
      %v616 = vadd.f32 0.0, %v615
      %617 = vmatmul.f32.gmra.mxu0 %v502
      %v618 = vpop.f32.mrf.mxu0
      %v619 = vadd.f32 0.0, %v618
      %620 = vmatmul.f32.gmra.mxu0 %v505
      %v621 = vpop.f32.mrf.mxu0
      %v622 = vadd.f32 0.0, %v621
      %623 = vmatmul.f32.gmra.mxu0 %v508
      %v624 = vpop.f32.mrf.mxu0
      %v625 = vadd.f32 0.0, %v624
      %626 = vmatmul.f32.gmra.mxu0 %v511
      %v627 = vpop.f32.mrf.mxu0
      %v628 = vadd.f32 0.0, %v627
      %629 = vmatmul.f32.gmra.mxu0 %v514
      %v630 = vpop.f32.mrf.mxu0
      %v631 = vadd.f32 0.0, %v630
      %632 = vmatmul.f32.gmra.mxu0 %v517
      %v633 = vpop.f32.mrf.mxu0
      %v634 = vadd.f32 0.0, %v633
      %635 = vmatmul.f32.gmra.mxu0 %v520
      %v636 = vpop.f32.mrf.mxu0
      %v637 = vadd.f32 0.0, %v636
      %638 = vmatmul.f32.gmra.mxu0 %v523
      %v639 = vpop.f32.mrf.mxu0
      %v640 = vadd.f32 0.0, %v639
      %641 = vmatmul.f32.gmra.mxu0 %v526
      %v642 = vpop.f32.mrf.mxu0
      %v643 = vadd.f32 0.0, %v642
      %644 = vmatmul.f32.gmra.mxu0 %v529
      %v645 = vpop.f32.mrf.mxu0
      %v646 = vadd.f32 0.0, %v645
      %647 = vmatmul.f32.gmra.mxu0 %v532
      %v648 = vpop.f32.mrf.mxu0
      %v649 = vadd.f32 0.0, %v648
      %650 = vmatmul.f32.gmra.mxu0 %v535
      %v651 = vpop.f32.mrf.mxu0
      %v652 = vadd.f32 0.0, %v651
      %653 = vmatmul.f32.gmra.mxu0 %v538
      %v654 = vpop.f32.mrf.mxu0
      %v655 = vadd.f32 0.0, %v654
      %656 = vmatmul.f32.gmra.mxu0 %v541
      %v657 = vpop.f32.mrf.mxu0
      %v658 = vadd.f32 0.0, %v657
      %659 = vmatmul.f32.gmra.mxu0 %v544
      %v660 = vpop.f32.mrf.mxu0
      %v661 = vadd.f32 0.0, %v660
      %662 = vmatmul.f32.gmra.mxu0 %v547
      %v663 = vpop.f32.mrf.mxu0
      %v664 = vadd.f32 0.0, %v663
      %665 = vmatmul.f32.gmra.mxu0 %v550
      %v666 = vpop.f32.mrf.mxu0
      %v667 = vadd.f32 0.0, %v666
      %668 = vmatmul.f32.gmra.mxu0 %v553
      %v669 = vpop.f32.mrf.mxu0
      %v670 = vadd.f32 0.0, %v669
      %671 = vmatmul.f32.gmra.mxu0 %v556
      %v672 = vpop.f32.mrf.mxu0
      %v673 = vadd.f32 0.0, %v672
      %674 = vmatmul.f32.gmra.mxu0 %v559
      %v675 = vpop.f32.mrf.mxu0
      %v676 = vadd.f32 0.0, %v675
      %677 = vmatmul.f32.gmra.mxu0 %v562
      %v678 = vpop.f32.mrf.mxu0
      %v679 = vadd.f32 0.0, %v678
      %680 = vmatmul.f32.gmra.mxu0 %v565
      %v681 = vpop.f32.mrf.mxu0
      %v682 = vadd.f32 0.0, %v681
      %683 = vmatmul.f32.gmra.mxu0 %v568
      %v684 = vpop.f32.mrf.mxu0
      %v685 = vadd.f32 0.0, %v684
      %686 = vmatmul.f32.gmra.mxu0 %v571
      %v687 = vpop.f32.mrf.mxu0
      %v688 = vadd.f32 0.0, %v687
      %689 = vmatmul.f32.gmra.mxu0 %v574
      %v690 = vpop.f32.mrf.mxu0
      %v691 = vadd.f32 0.0, %v690
      %692 = vmatmul.f32.gmra.mxu0 %v577
      %v693 = vpop.f32.mrf.mxu0
      %v694 = vadd.f32 0.0, %v693
      %695 = vdwg.mxu0
      %v697 = vsel %vm482, %v477, 0
      %v700 = vsel %vm482, %v478, 0
      %702 = vmatpush.msra.mxu0 0.0
      %703 = vmatpush.msra.mxu0 0.0
      %704 = vmatpush.msra.mxu0 0.0
      %705 = vmatpush.msra.mxu0 0.0
      %706 = vmatpush.msra.mxu0 0.0
      %707 = vmatpush.msra.mxu0 0.0
      %708 = vmatpush.msra.mxu0 0.0
      %709 = vmatpush.msra.mxu0 0.0
      %710 = vmatpush.msra.mxu0 0.0
      %711 = vmatpush.msra.mxu0 0.0
      %712 = vmatpush.msra.mxu0 0.0
      %713 = vmatpush.msra.mxu0 0.0
      %714 = vmatpush.msra.mxu0 0.0
      %715 = vmatpush.msra.mxu0 0.0
      %716 = vmatpush.msra.mxu0 0.0
      %717 = vmatpush.msra.mxu0 %v581
      %718 = vmatmul.f32.gmra.mxu0 %v697
      %v719 = vpop.f32.mrf.mxu0
      %v720 = vadd.f32 0.0, %v719
      %721 = vmatmul.f32.gmra.mxu0 %v700
      %v722 = vpop.f32.mrf.mxu0
      %v723 = vadd.f32 0.0, %v722
      %724 = vdwg.mxu0
      %v726 = vsel %vm482, %v479, 0
      %v729 = vsel %vm482, %v480, 0
      %731 = vmatpush.msra.mxu0 0.0
      %732 = vmatpush.msra.mxu0 0.0
      %733 = vmatpush.msra.mxu0 0.0
      %734 = vmatpush.msra.mxu0 0.0
      %735 = vmatpush.msra.mxu0 0.0
      %736 = vmatpush.msra.mxu0 0.0
      %737 = vmatpush.msra.mxu0 0.0
      %738 = vmatpush.msra.mxu0 0.0
      %739 = vmatpush.msra.mxu0 0.0
      %740 = vmatpush.msra.mxu0 0.0
      %741 = vmatpush.msra.mxu0 0.0
      %742 = vmatpush.msra.mxu0 0.0
      %743 = vmatpush.msra.mxu0 0.0
      %744 = vmatpush.msra.mxu0 0.0
      %745 = vmatpush.msra.mxu0 0.0
      %746 = vmatpush.msra.mxu0 %v581
      %747 = vmatmul.f32.gmra.mxu0 %v726
      %v748 = vpop.f32.mrf.mxu0
      %v749 = vadd.f32 0.0, %v748
      %750 = vmatmul.f32.gmra.mxu0 %v729
      %v751 = vpop.f32.mrf.mxu0
      %v752 = vadd.f32 0.0, %v751
      %753 = vdwg.mxu0
      %v754 = vld [vmem:[%s4] sm:$0x1]
      %v756 = vperm.slane %v754, 0
      %v758 = vadd.f32 %v720, %v756
      %v759 = vadd.f32 %v723, %v756
      %v760 = vadd.f32 %v601, %v756
      %v761 = vadd.f32 %v604, %v756
      %v762 = vadd.f32 %v607, %v756
      %v763 = vadd.f32 %v610, %v756
      %v764 = vadd.f32 %v613, %v756
      %v765 = vadd.f32 %v616, %v756
      %v766 = vadd.f32 %v619, %v756
      %v767 = vadd.f32 %v622, %v756
      %v768 = vadd.f32 %v625, %v756
      %v769 = vadd.f32 %v628, %v756
      %v770 = vadd.f32 %v631, %v756
      %v771 = vadd.f32 %v634, %v756
      %v772 = vadd.f32 %v637, %v756
      %v773 = vadd.f32 %v640, %v756
      %v774 = vadd.f32 %v643, %v756
      %v775 = vadd.f32 %v646, %v756
      %v776 = vadd.f32 %v649, %v756
      %v777 = vadd.f32 %v652, %v756
      %v778 = vadd.f32 %v655, %v756
      %v779 = vadd.f32 %v658, %v756
      %v780 = vadd.f32 %v661, %v756
      %v781 = vadd.f32 %v664, %v756
      %v782 = vadd.f32 %v667, %v756
      %v783 = vadd.f32 %v670, %v756
      %v784 = vadd.f32 %v673, %v756
      %v785 = vadd.f32 %v676, %v756
      %v786 = vadd.f32 %v679, %v756
      %v787 = vadd.f32 %v682, %v756
      %v788 = vadd.f32 %v685, %v756
      %v789 = vadd.f32 %v688, %v756
      %v790 = vadd.f32 %v691, %v756
      %v791 = vadd.f32 %v694, %v756
      %v792 = vadd.f32 %v749, %v756
      %v793 = vadd.f32 %v752, %v756
      %v794 = vlaneseq
      %v795 = vshrl.u32 %v794, 7
      %v796 = vadd.s32 %v795, 8
      %v797 = vadd.s32 %v795, 16
      %v798 = vadd.s32 %v795, 24
      %v799 = vadd.s32 %v795, 32
      %v800 = vadd.s32 %v795, 40
      %v801 = vadd.s32 %v795, 48
      %v802 = vadd.s32 %v795, 56
      %v803 = vadd.s32 %v795, 64
      %v804 = vadd.s32 %v795, 72
      %v805 = vadd.s32 %v795, 80
      %v806 = vadd.s32 %v795, 88
      %v807 = vadd.s32 %v795, 96
      %v808 = vadd.s32 %v795, 104
      %v809 = vadd.s32 %v795, 112
      %v810 = vadd.s32 %v795, 120
      %v811 = vadd.s32 %v795, 128
      %v812 = vadd.s32 %v795, 136
      %v813 = vadd.s32 %v795, 144
      %v814 = vadd.s32 %v795, 152
      %v815 = vadd.s32 %v795, 160
      %v816 = vadd.s32 %v795, 168
      %v817 = vadd.s32 %v795, 176
      %v818 = vadd.s32 %v795, 184
      %v819 = vadd.s32 %v795, 192
      %v820 = vadd.s32 %v795, 200
      %v821 = vadd.s32 %v795, 208
      %v822 = vadd.s32 %v795, 216
      %v823 = vadd.s32 %v795, 224
      %v824 = vadd.s32 %v795, 232
      %v825 = vadd.s32 %v795, 240
      %v826 = vadd.s32 %v795, 248
      %v827 = vadd.s32 %v795, 256
      %v828 = vadd.s32 %v795, 264
      %v829 = vadd.s32 %v795, 272
      %v830 = vadd.s32 %v795, 280
      %vm831 = vcmp.ge.s32.totalorder %v795, 16
      %vm832 = vcmp.ge.s32.totalorder %v796, 16
      %vm833 = vcmp.ge.s32.totalorder %v797, 16
      %vm834 = vcmp.ge.s32.totalorder %v798, 16
      %vm835 = vcmp.ge.s32.totalorder %v799, 16
      %vm836 = vcmp.ge.s32.totalorder %v800, 16
      %vm837 = vcmp.ge.s32.totalorder %v801, 16
      %vm838 = vcmp.ge.s32.totalorder %v802, 16
      %vm839 = vcmp.ge.s32.totalorder %v803, 16
      %vm840 = vcmp.ge.s32.totalorder %v804, 16
      %vm841 = vcmp.ge.s32.totalorder %v805, 16
      %vm842 = vcmp.ge.s32.totalorder %v806, 16
      %vm843 = vcmp.ge.s32.totalorder %v807, 16
      %vm844 = vcmp.ge.s32.totalorder %v808, 16
      %vm845 = vcmp.ge.s32.totalorder %v809, 16
      %vm846 = vcmp.ge.s32.totalorder %v810, 16
      %vm847 = vcmp.ge.s32.totalorder %v811, 16
      %vm848 = vcmp.ge.s32.totalorder %v812, 16
      %vm849 = vcmp.ge.s32.totalorder %v813, 16
      %vm850 = vcmp.ge.s32.totalorder %v814, 16
      %vm851 = vcmp.ge.s32.totalorder %v815, 16
      %vm852 = vcmp.ge.s32.totalorder %v816, 16
      %vm853 = vcmp.ge.s32.totalorder %v817, 16
      %vm854 = vcmp.ge.s32.totalorder %v818, 16
      %vm855 = vcmp.ge.s32.totalorder %v819, 16
      %vm856 = vcmp.ge.s32.totalorder %v820, 16
      %vm857 = vcmp.ge.s32.totalorder %v821, 16
      %vm858 = vcmp.ge.s32.totalorder %v822, 16
      %vm859 = vcmp.ge.s32.totalorder %v823, 16
      %vm860 = vcmp.ge.s32.totalorder %v824, 16
      %vm861 = vcmp.ge.s32.totalorder %v825, 16
      %vm862 = vcmp.ge.s32.totalorder %v826, 16
      %vm863 = vcmp.ge.s32.totalorder %v827, 16
      %vm864 = vcmp.ge.s32.totalorder %v828, 16
      %vm865 = vcmp.ge.s32.totalorder %v829, 16
      %vm866 = vcmp.ge.s32.totalorder %v830, 16
      %p867 = scmp.gt.s32.totalorder %s23, 0
      %s868 = scalar_select %p867, 1, 0
      %v869 = vstv %s868
      %vm870 = vcmp.eq.s32.totalorder %v869, 1
      %vm871 = vmor %vm831, %vm870
      %vm872 = vmor %vm832, %vm870
      %vm873 = vmor %vm833, %vm870
      %vm874 = vmor %vm834, %vm870
      %vm875 = vmor %vm835, %vm870
      %vm876 = vmor %vm836, %vm870
      %vm877 = vmor %vm837, %vm870
      %vm878 = vmor %vm838, %vm870
      %vm879 = vmor %vm839, %vm870
      %vm880 = vmor %vm840, %vm870
      %vm881 = vmor %vm841, %vm870
      %vm882 = vmor %vm842, %vm870
      %vm883 = vmor %vm843, %vm870
      %vm884 = vmor %vm844, %vm870
      %vm885 = vmor %vm845, %vm870
      %vm886 = vmor %vm846, %vm870
      %vm887 = vmor %vm847, %vm870
      %vm888 = vmor %vm848, %vm870
      %vm889 = vmor %vm849, %vm870
      %vm890 = vmor %vm850, %vm870
      %vm891 = vmor %vm851, %vm870
      %vm892 = vmor %vm852, %vm870
      %vm893 = vmor %vm853, %vm870
      %vm894 = vmor %vm854, %vm870
      %vm895 = vmor %vm855, %vm870
      %vm896 = vmor %vm856, %vm870
      %vm897 = vmor %vm857, %vm870
      %vm898 = vmor %vm858, %vm870
      %vm899 = vmor %vm859, %vm870
      %vm900 = vmor %vm860, %vm870
      %vm901 = vmor %vm861, %vm870
      %vm902 = vmor %vm862, %vm870
      %vm903 = vmor %vm863, %vm870
      %vm904 = vmor %vm864, %vm870
      %vm905 = vmor %vm865, %vm870
      %vm906 = vmor %vm866, %vm870
      %vm907 = vcmp.lt.s32.totalorder %v795, 272
      %vm908 = vcmp.lt.s32.totalorder %v796, 272
      %vm909 = vcmp.lt.s32.totalorder %v797, 272
      %vm910 = vcmp.lt.s32.totalorder %v798, 272
      %vm911 = vcmp.lt.s32.totalorder %v799, 272
      %vm912 = vcmp.lt.s32.totalorder %v800, 272
      %vm913 = vcmp.lt.s32.totalorder %v801, 272
      %vm914 = vcmp.lt.s32.totalorder %v802, 272
      %vm915 = vcmp.lt.s32.totalorder %v803, 272
      %vm916 = vcmp.lt.s32.totalorder %v804, 272
      %vm917 = vcmp.lt.s32.totalorder %v805, 272
      %vm918 = vcmp.lt.s32.totalorder %v806, 272
      %vm919 = vcmp.lt.s32.totalorder %v807, 272
      %vm920 = vcmp.lt.s32.totalorder %v808, 272
      %vm921 = vcmp.lt.s32.totalorder %v809, 272
      %vm922 = vcmp.lt.s32.totalorder %v810, 272
      %vm923 = vcmp.lt.s32.totalorder %v811, 272
      %vm924 = vcmp.lt.s32.totalorder %v812, 272
      %vm925 = vcmp.lt.s32.totalorder %v813, 272
      %vm926 = vcmp.lt.s32.totalorder %v814, 272
      %vm927 = vcmp.lt.s32.totalorder %v815, 272
      %vm928 = vcmp.lt.s32.totalorder %v816, 272
      %vm929 = vcmp.lt.s32.totalorder %v817, 272
      %vm930 = vcmp.lt.s32.totalorder %v818, 272
      %vm931 = vcmp.lt.s32.totalorder %v819, 272
      %vm932 = vcmp.lt.s32.totalorder %v820, 272
      %vm933 = vcmp.lt.s32.totalorder %v821, 272
      %vm934 = vcmp.lt.s32.totalorder %v822, 272
      %vm935 = vcmp.lt.s32.totalorder %v823, 272
      %vm936 = vcmp.lt.s32.totalorder %v824, 272
      %vm937 = vcmp.lt.s32.totalorder %v825, 272
      %vm938 = vcmp.lt.s32.totalorder %v826, 272
      %vm939 = vcmp.lt.s32.totalorder %v827, 272
      %vm940 = vcmp.lt.s32.totalorder %v828, 272
      %vm941 = vcmp.lt.s32.totalorder %v829, 272
      %vm942 = vcmp.lt.s32.totalorder %v830, 272
      %p943 = scmp.lt.s32.totalorder %s23, 0
      %s944 = scalar_select %p943, 1, 0
      %v945 = vstv %s944
      %vm946 = vcmp.eq.s32.totalorder %v945, 1
      %vm947 = vmor %vm907, %vm946
      %vm948 = vmor %vm908, %vm946
      %vm949 = vmor %vm909, %vm946
      %vm950 = vmor %vm910, %vm946
      %vm951 = vmor %vm911, %vm946
      %vm952 = vmor %vm912, %vm946
      %vm953 = vmor %vm913, %vm946
      %vm954 = vmor %vm914, %vm946
      %vm955 = vmor %vm915, %vm946
      %vm956 = vmor %vm916, %vm946
      %vm957 = vmor %vm917, %vm946
      %vm958 = vmor %vm918, %vm946
      %vm959 = vmor %vm919, %vm946
      %vm960 = vmor %vm920, %vm946
      %vm961 = vmor %vm921, %vm946
      %vm962 = vmor %vm922, %vm946
      %vm963 = vmor %vm923, %vm946
      %vm964 = vmor %vm924, %vm946
      %vm965 = vmor %vm925, %vm946
      %vm966 = vmor %vm926, %vm946
      %vm967 = vmor %vm927, %vm946
      %vm968 = vmor %vm928, %vm946
      %vm969 = vmor %vm929, %vm946
      %vm970 = vmor %vm930, %vm946
      %vm971 = vmor %vm931, %vm946
      %vm972 = vmor %vm932, %vm946
      %vm973 = vmor %vm933, %vm946
      %vm974 = vmor %vm934, %vm946
      %vm975 = vmor %vm935, %vm946
      %vm976 = vmor %vm936, %vm946
      %vm977 = vmor %vm937, %vm946
      %vm978 = vmor %vm938, %vm946
      %vm979 = vmor %vm939, %vm946
      %vm980 = vmor %vm940, %vm946
      %vm981 = vmor %vm941, %vm946
      %vm982 = vmor %vm942, %vm946
      %vm983 = vmand %vm871, %vm947
      %vm984 = vmand %vm872, %vm948
      %vm985 = vmand %vm873, %vm949
      %vm986 = vmand %vm874, %vm950
      %vm987 = vmand %vm875, %vm951
      %vm988 = vmand %vm876, %vm952
      %vm989 = vmand %vm877, %vm953
      %vm990 = vmand %vm878, %vm954
      %vm991 = vmand %vm879, %vm955
      %vm992 = vmand %vm880, %vm956
      %vm993 = vmand %vm881, %vm957
      %vm994 = vmand %vm882, %vm958
      %vm995 = vmand %vm883, %vm959
      %vm996 = vmand %vm884, %vm960
      %vm997 = vmand %vm885, %vm961
      %vm998 = vmand %vm886, %vm962
      %vm999 = vmand %vm887, %vm963
      %vm1000 = vmand %vm888, %vm964
      %vm1001 = vmand %vm889, %vm965
      %vm1002 = vmand %vm890, %vm966
      %vm1003 = vmand %vm891, %vm967
      %vm1004 = vmand %vm892, %vm968
      %vm1005 = vmand %vm893, %vm969
      %vm1006 = vmand %vm894, %vm970
      %vm1007 = vmand %vm895, %vm971
      %vm1008 = vmand %vm896, %vm972
      %vm1009 = vmand %vm897, %vm973
      %vm1010 = vmand %vm898, %vm974
      %vm1011 = vmand %vm899, %vm975
      %vm1012 = vmand %vm900, %vm976
      %vm1013 = vmand %vm901, %vm977
      %vm1014 = vmand %vm902, %vm978
      %vm1015 = vmand %vm903, %vm979
      %vm1016 = vmand %vm904, %vm980
      %vm1017 = vmand %vm905, %vm981
      %vm1018 = vmand %vm906, %vm982
      %v1019 = vsel %vm983, 1, 0
      %v1020 = vsel %vm984, 1, 0
      %v1021 = vsel %vm985, 1, 0
      %v1022 = vsel %vm986, 1, 0
      %v1023 = vsel %vm987, 1, 0
      %v1024 = vsel %vm988, 1, 0
      %v1025 = vsel %vm989, 1, 0
      %v1026 = vsel %vm990, 1, 0
      %v1027 = vsel %vm991, 1, 0
      %v1028 = vsel %vm992, 1, 0
      %v1029 = vsel %vm993, 1, 0
      %v1030 = vsel %vm994, 1, 0
      %v1031 = vsel %vm995, 1, 0
      %v1032 = vsel %vm996, 1, 0
      %v1033 = vsel %vm997, 1, 0
      %v1034 = vsel %vm998, 1, 0
      %v1035 = vsel %vm999, 1, 0
      %v1036 = vsel %vm1000, 1, 0
      %v1037 = vsel %vm1001, 1, 0
      %v1038 = vsel %vm1002, 1, 0
      %v1039 = vsel %vm1003, 1, 0
      %v1040 = vsel %vm1004, 1, 0
      %v1041 = vsel %vm1005, 1, 0
      %v1042 = vsel %vm1006, 1, 0
      %v1043 = vsel %vm1007, 1, 0
      %v1044 = vsel %vm1008, 1, 0
      %v1045 = vsel %vm1009, 1, 0
      %v1046 = vsel %vm1010, 1, 0
      %v1047 = vsel %vm1011, 1, 0
      %v1048 = vsel %vm1012, 1, 0
      %v1049 = vsel %vm1013, 1, 0
      %v1050 = vsel %vm1014, 1, 0
      %v1051 = vsel %vm1015, 1, 0
      %v1052 = vsel %vm1016, 1, 0
      %v1053 = vsel %vm1017, 1, 0
      %v1054 = vsel %vm1018, 1, 0
      %vm1055 = vcmp.eq.s32.totalorder %v1019, 1
      %vm1056 = vcmp.eq.s32.totalorder %v1020, 1
      %vm1057 = vcmp.eq.s32.totalorder %v1021, 1
      %vm1058 = vcmp.eq.s32.totalorder %v1022, 1
      %vm1059 = vcmp.eq.s32.totalorder %v1023, 1
      %vm1060 = vcmp.eq.s32.totalorder %v1024, 1
      %vm1061 = vcmp.eq.s32.totalorder %v1025, 1
      %vm1062 = vcmp.eq.s32.totalorder %v1026, 1
      %vm1063 = vcmp.eq.s32.totalorder %v1027, 1
      %vm1064 = vcmp.eq.s32.totalorder %v1028, 1
      %vm1065 = vcmp.eq.s32.totalorder %v1029, 1
      %vm1066 = vcmp.eq.s32.totalorder %v1030, 1
      %vm1067 = vcmp.eq.s32.totalorder %v1031, 1
      %vm1068 = vcmp.eq.s32.totalorder %v1032, 1
      %vm1069 = vcmp.eq.s32.totalorder %v1033, 1
      %vm1070 = vcmp.eq.s32.totalorder %v1034, 1
      %vm1071 = vcmp.eq.s32.totalorder %v1035, 1
      %vm1072 = vcmp.eq.s32.totalorder %v1036, 1
      %vm1073 = vcmp.eq.s32.totalorder %v1037, 1
      %vm1074 = vcmp.eq.s32.totalorder %v1038, 1
      %vm1075 = vcmp.eq.s32.totalorder %v1039, 1
      %vm1076 = vcmp.eq.s32.totalorder %v1040, 1
      %vm1077 = vcmp.eq.s32.totalorder %v1041, 1
      %vm1078 = vcmp.eq.s32.totalorder %v1042, 1
      %vm1079 = vcmp.eq.s32.totalorder %v1043, 1
      %vm1080 = vcmp.eq.s32.totalorder %v1044, 1
      %vm1081 = vcmp.eq.s32.totalorder %v1045, 1
      %vm1082 = vcmp.eq.s32.totalorder %v1046, 1
      %vm1083 = vcmp.eq.s32.totalorder %v1047, 1
      %vm1084 = vcmp.eq.s32.totalorder %v1048, 1
      %vm1085 = vcmp.eq.s32.totalorder %v1049, 1
      %vm1086 = vcmp.eq.s32.totalorder %v1050, 1
      %vm1087 = vcmp.eq.s32.totalorder %v1051, 1
      %vm1088 = vcmp.eq.s32.totalorder %v1052, 1
      %vm1089 = vcmp.eq.s32.totalorder %v1053, 1
      %vm1090 = vcmp.eq.s32.totalorder %v1054, 1
      %v1091 = vsel %vm1055, %v758, 0.0
      %v1092 = vsel %vm1056, %v759, 0.0
      %v1093 = vsel %vm1057, %v760, 0.0
      %v1094 = vsel %vm1058, %v761, 0.0
      %v1095 = vsel %vm1059, %v762, 0.0
      %v1096 = vsel %vm1060, %v763, 0.0
      %v1097 = vsel %vm1061, %v764, 0.0
      %v1098 = vsel %vm1062, %v765, 0.0
      %v1099 = vsel %vm1063, %v766, 0.0
      %v1100 = vsel %vm1064, %v767, 0.0
      %v1101 = vsel %vm1065, %v768, 0.0
      %v1102 = vsel %vm1066, %v769, 0.0
      %v1103 = vsel %vm1067, %v770, 0.0
      %v1104 = vsel %vm1068, %v771, 0.0
      %v1105 = vsel %vm1069, %v772, 0.0
      %v1106 = vsel %vm1070, %v773, 0.0
      %v1107 = vsel %vm1071, %v774, 0.0
      %v1108 = vsel %vm1072, %v775, 0.0
      %v1109 = vsel %vm1073, %v776, 0.0
      %v1110 = vsel %vm1074, %v777, 0.0
      %v1111 = vsel %vm1075, %v778, 0.0
      %v1112 = vsel %vm1076, %v779, 0.0
      %v1113 = vsel %vm1077, %v780, 0.0
      %v1114 = vsel %vm1078, %v781, 0.0
      %v1115 = vsel %vm1079, %v782, 0.0
      %v1116 = vsel %vm1080, %v783, 0.0
      %v1117 = vsel %vm1081, %v784, 0.0
      %v1118 = vsel %vm1082, %v785, 0.0
      %v1119 = vsel %vm1083, %v786, 0.0
      %v1120 = vsel %vm1084, %v787, 0.0
      %v1121 = vsel %vm1085, %v788, 0.0
      %v1122 = vsel %vm1086, %v789, 0.0
      %v1123 = vsel %vm1087, %v790, 0.0
      %v1124 = vsel %vm1088, %v791, 0.0
      %v1125 = vsel %vm1089, %v792, 0.0
      %v1126 = vsel %vm1090, %v793, 0.0
      %vm1127 = vcmp.lt.s32.totalorder %v795, 0
      %v1128 = vsub.s32 0, %v795
      %v1129 = vsel %vm1127, %v1128, %v795
      %v1130 = vshrl.u32 %v1129, 4
      %v1131 = vand.u32 %v1129, 15
      %v1132 = vsub.s32 0, %v1131
      %v1133 = vsel %vm1127, %v1132, %v1131
      %vm1134 = vcmp.lt.s32.totalorder %v796, 0
      %v1135 = vsub.s32 0, %v796
      %v1136 = vsel %vm1134, %v1135, %v796
      %v1137 = vshrl.u32 %v1136, 4
      %v1138 = vand.u32 %v1136, 15
      %v1139 = vsub.s32 0, %v1138
      %v1140 = vsel %vm1134, %v1139, %v1138
      %vm1141 = vcmp.lt.s32.totalorder %v797, 0
      %v1142 = vsub.s32 0, %v797
      %v1143 = vsel %vm1141, %v1142, %v797
      %v1144 = vshrl.u32 %v1143, 4
      %v1145 = vand.u32 %v1143, 15
      %v1146 = vsub.s32 0, %v1145
      %v1147 = vsel %vm1141, %v1146, %v1145
      %vm1148 = vcmp.lt.s32.totalorder %v798, 0
      %v1149 = vsub.s32 0, %v798
      %v1150 = vsel %vm1148, %v1149, %v798
      %v1151 = vshrl.u32 %v1150, 4
      %v1152 = vand.u32 %v1150, 15
      %v1153 = vsub.s32 0, %v1152
      %v1154 = vsel %vm1148, %v1153, %v1152
      %vm1155 = vcmp.lt.s32.totalorder %v799, 0
      %v1156 = vsub.s32 0, %v799
      %v1157 = vsel %vm1155, %v1156, %v799
      %v1158 = vshrl.u32 %v1157, 4
      %v1159 = vand.u32 %v1157, 15
      %v1160 = vsub.s32 0, %v1159
      %v1161 = vsel %vm1155, %v1160, %v1159
      %vm1162 = vcmp.lt.s32.totalorder %v800, 0
      %v1163 = vsub.s32 0, %v800
      %v1164 = vsel %vm1162, %v1163, %v800
      %v1165 = vshrl.u32 %v1164, 4
      %v1166 = vand.u32 %v1164, 15
      %v1167 = vsub.s32 0, %v1166
      %v1168 = vsel %vm1162, %v1167, %v1166
      %vm1169 = vcmp.lt.s32.totalorder %v801, 0
      %v1170 = vsub.s32 0, %v801
      %v1171 = vsel %vm1169, %v1170, %v801
      %v1172 = vshrl.u32 %v1171, 4
      %v1173 = vand.u32 %v1171, 15
      %v1174 = vsub.s32 0, %v1173
      %v1175 = vsel %vm1169, %v1174, %v1173
      %vm1176 = vcmp.lt.s32.totalorder %v802, 0
      %v1177 = vsub.s32 0, %v802
      %v1178 = vsel %vm1176, %v1177, %v802
      %v1179 = vshrl.u32 %v1178, 4
      %v1180 = vand.u32 %v1178, 15
      %v1181 = vsub.s32 0, %v1180
      %v1182 = vsel %vm1176, %v1181, %v1180
      %vm1183 = vcmp.lt.s32.totalorder %v803, 0
      %v1184 = vsub.s32 0, %v803
      %v1185 = vsel %vm1183, %v1184, %v803
      %v1186 = vshrl.u32 %v1185, 4
      %v1187 = vand.u32 %v1185, 15
      %v1188 = vsub.s32 0, %v1187
      %v1189 = vsel %vm1183, %v1188, %v1187
      %vm1190 = vcmp.lt.s32.totalorder %v804, 0
      %v1191 = vsub.s32 0, %v804
      %v1192 = vsel %vm1190, %v1191, %v804
      %v1193 = vshrl.u32 %v1192, 4
      %v1194 = vand.u32 %v1192, 15
      %v1195 = vsub.s32 0, %v1194
      %v1196 = vsel %vm1190, %v1195, %v1194
      %vm1197 = vcmp.lt.s32.totalorder %v805, 0
      %v1198 = vsub.s32 0, %v805
      %v1199 = vsel %vm1197, %v1198, %v805
      %v1200 = vshrl.u32 %v1199, 4
      %v1201 = vand.u32 %v1199, 15
      %v1202 = vsub.s32 0, %v1201
      %v1203 = vsel %vm1197, %v1202, %v1201
      %vm1204 = vcmp.lt.s32.totalorder %v806, 0
      %v1205 = vsub.s32 0, %v806
      %v1206 = vsel %vm1204, %v1205, %v806
      %v1207 = vshrl.u32 %v1206, 4
      %v1208 = vand.u32 %v1206, 15
      %v1209 = vsub.s32 0, %v1208
      %v1210 = vsel %vm1204, %v1209, %v1208
      %vm1211 = vcmp.lt.s32.totalorder %v807, 0
      %v1212 = vsub.s32 0, %v807
      %v1213 = vsel %vm1211, %v1212, %v807
      %v1214 = vshrl.u32 %v1213, 4
      %v1215 = vand.u32 %v1213, 15
      %v1216 = vsub.s32 0, %v1215
      %v1217 = vsel %vm1211, %v1216, %v1215
      %vm1218 = vcmp.lt.s32.totalorder %v808, 0
      %v1219 = vsub.s32 0, %v808
      %v1220 = vsel %vm1218, %v1219, %v808
      %v1221 = vshrl.u32 %v1220, 4
      %v1222 = vand.u32 %v1220, 15
      %v1223 = vsub.s32 0, %v1222
      %v1224 = vsel %vm1218, %v1223, %v1222
      %vm1225 = vcmp.lt.s32.totalorder %v809, 0
      %v1226 = vsub.s32 0, %v809
      %v1227 = vsel %vm1225, %v1226, %v809
      %v1228 = vshrl.u32 %v1227, 4
      %v1229 = vand.u32 %v1227, 15
      %v1230 = vsub.s32 0, %v1229
      %v1231 = vsel %vm1225, %v1230, %v1229
      %vm1232 = vcmp.lt.s32.totalorder %v810, 0
      %v1233 = vsub.s32 0, %v810
      %v1234 = vsel %vm1232, %v1233, %v810
      %v1235 = vshrl.u32 %v1234, 4
      %v1236 = vand.u32 %v1234, 15
      %v1237 = vsub.s32 0, %v1236
      %v1238 = vsel %vm1232, %v1237, %v1236
      %vm1239 = vcmp.lt.s32.totalorder %v811, 0
      %v1240 = vsub.s32 0, %v811
      %v1241 = vsel %vm1239, %v1240, %v811
      %v1242 = vshrl.u32 %v1241, 4
      %v1243 = vand.u32 %v1241, 15
      %v1244 = vsub.s32 0, %v1243
      %v1245 = vsel %vm1239, %v1244, %v1243
      %vm1246 = vcmp.lt.s32.totalorder %v812, 0
      %v1247 = vsub.s32 0, %v812
      %v1248 = vsel %vm1246, %v1247, %v812
      %v1249 = vshrl.u32 %v1248, 4
      %v1250 = vand.u32 %v1248, 15
      %v1251 = vsub.s32 0, %v1250
      %v1252 = vsel %vm1246, %v1251, %v1250
      %vm1253 = vcmp.lt.s32.totalorder %v813, 0
      %v1254 = vsub.s32 0, %v813
      %v1255 = vsel %vm1253, %v1254, %v813
      %v1256 = vshrl.u32 %v1255, 4
      %v1257 = vand.u32 %v1255, 15
      %v1258 = vsub.s32 0, %v1257
      %v1259 = vsel %vm1253, %v1258, %v1257
      %vm1260 = vcmp.lt.s32.totalorder %v814, 0
      %v1261 = vsub.s32 0, %v814
      %v1262 = vsel %vm1260, %v1261, %v814
      %v1263 = vshrl.u32 %v1262, 4
      %v1264 = vand.u32 %v1262, 15
      %v1265 = vsub.s32 0, %v1264
      %v1266 = vsel %vm1260, %v1265, %v1264
      %vm1267 = vcmp.lt.s32.totalorder %v815, 0
      %v1268 = vsub.s32 0, %v815
      %v1269 = vsel %vm1267, %v1268, %v815
      %v1270 = vshrl.u32 %v1269, 4
      %v1271 = vand.u32 %v1269, 15
      %v1272 = vsub.s32 0, %v1271
      %v1273 = vsel %vm1267, %v1272, %v1271
      %vm1274 = vcmp.lt.s32.totalorder %v816, 0
      %v1275 = vsub.s32 0, %v816
      %v1276 = vsel %vm1274, %v1275, %v816
      %v1277 = vshrl.u32 %v1276, 4
      %v1278 = vand.u32 %v1276, 15
      %v1279 = vsub.s32 0, %v1278
      %v1280 = vsel %vm1274, %v1279, %v1278
      %vm1281 = vcmp.lt.s32.totalorder %v817, 0
      %v1282 = vsub.s32 0, %v817
      %v1283 = vsel %vm1281, %v1282, %v817
      %v1284 = vshrl.u32 %v1283, 4
      %v1285 = vand.u32 %v1283, 15
      %v1286 = vsub.s32 0, %v1285
      %v1287 = vsel %vm1281, %v1286, %v1285
      %vm1288 = vcmp.lt.s32.totalorder %v818, 0
      %v1289 = vsub.s32 0, %v818
      %v1290 = vsel %vm1288, %v1289, %v818
      %v1291 = vshrl.u32 %v1290, 4
      %v1292 = vand.u32 %v1290, 15
      %v1293 = vsub.s32 0, %v1292
      %v1294 = vsel %vm1288, %v1293, %v1292
      %vm1295 = vcmp.lt.s32.totalorder %v819, 0
      %v1296 = vsub.s32 0, %v819
      %v1297 = vsel %vm1295, %v1296, %v819
      %v1298 = vshrl.u32 %v1297, 4
      %v1299 = vand.u32 %v1297, 15
      %v1300 = vsub.s32 0, %v1299
      %v1301 = vsel %vm1295, %v1300, %v1299
      %vm1302 = vcmp.lt.s32.totalorder %v820, 0
      %v1303 = vsub.s32 0, %v820
      %v1304 = vsel %vm1302, %v1303, %v820
      %v1305 = vshrl.u32 %v1304, 4
      %v1306 = vand.u32 %v1304, 15
      %v1307 = vsub.s32 0, %v1306
      %v1308 = vsel %vm1302, %v1307, %v1306
      %vm1309 = vcmp.lt.s32.totalorder %v821, 0
      %v1310 = vsub.s32 0, %v821
      %v1311 = vsel %vm1309, %v1310, %v821
      %v1312 = vshrl.u32 %v1311, 4
      %v1313 = vand.u32 %v1311, 15
      %v1314 = vsub.s32 0, %v1313
      %v1315 = vsel %vm1309, %v1314, %v1313
      %vm1316 = vcmp.lt.s32.totalorder %v822, 0
      %v1317 = vsub.s32 0, %v822
      %v1318 = vsel %vm1316, %v1317, %v822
      %v1319 = vshrl.u32 %v1318, 4
      %v1320 = vand.u32 %v1318, 15
      %v1321 = vsub.s32 0, %v1320
      %v1322 = vsel %vm1316, %v1321, %v1320
      %vm1323 = vcmp.lt.s32.totalorder %v823, 0
      %v1324 = vsub.s32 0, %v823
      %v1325 = vsel %vm1323, %v1324, %v823
      %v1326 = vshrl.u32 %v1325, 4
      %v1327 = vand.u32 %v1325, 15
      %v1328 = vsub.s32 0, %v1327
      %v1329 = vsel %vm1323, %v1328, %v1327
      %vm1330 = vcmp.lt.s32.totalorder %v824, 0
      %v1331 = vsub.s32 0, %v824
      %v1332 = vsel %vm1330, %v1331, %v824
      %v1333 = vshrl.u32 %v1332, 4
      %v1334 = vand.u32 %v1332, 15
      %v1335 = vsub.s32 0, %v1334
      %v1336 = vsel %vm1330, %v1335, %v1334
      %vm1337 = vcmp.lt.s32.totalorder %v825, 0
      %v1338 = vsub.s32 0, %v825
      %v1339 = vsel %vm1337, %v1338, %v825
      %v1340 = vshrl.u32 %v1339, 4
      %v1341 = vand.u32 %v1339, 15
      %v1342 = vsub.s32 0, %v1341
      %v1343 = vsel %vm1337, %v1342, %v1341
      %vm1344 = vcmp.lt.s32.totalorder %v826, 0
      %v1345 = vsub.s32 0, %v826
      %v1346 = vsel %vm1344, %v1345, %v826
      %v1347 = vshrl.u32 %v1346, 4
      %v1348 = vand.u32 %v1346, 15
      %v1349 = vsub.s32 0, %v1348
      %v1350 = vsel %vm1344, %v1349, %v1348
      %vm1351 = vcmp.lt.s32.totalorder %v827, 0
      %v1352 = vsub.s32 0, %v827
      %v1353 = vsel %vm1351, %v1352, %v827
      %v1354 = vshrl.u32 %v1353, 4
      %v1355 = vand.u32 %v1353, 15
      %v1356 = vsub.s32 0, %v1355
      %v1357 = vsel %vm1351, %v1356, %v1355
      %vm1358 = vcmp.lt.s32.totalorder %v828, 0
      %v1359 = vsub.s32 0, %v828
      %v1360 = vsel %vm1358, %v1359, %v828
      %v1361 = vshrl.u32 %v1360, 4
      %v1362 = vand.u32 %v1360, 15
      %v1363 = vsub.s32 0, %v1362
      %v1364 = vsel %vm1358, %v1363, %v1362
      %vm1365 = vcmp.lt.s32.totalorder %v829, 0
      %v1366 = vsub.s32 0, %v829
      %v1367 = vsel %vm1365, %v1366, %v829
      %v1368 = vshrl.u32 %v1367, 4
      %v1369 = vand.u32 %v1367, 15
      %v1370 = vsub.s32 0, %v1369
      %v1371 = vsel %vm1365, %v1370, %v1369
      %vm1372 = vcmp.lt.s32.totalorder %v830, 0
      %v1373 = vsub.s32 0, %v830
      %v1374 = vsel %vm1372, %v1373, %v830
      %v1375 = vshrl.u32 %v1374, 4
      %v1376 = vand.u32 %v1374, 15
      %v1377 = vsub.s32 0, %v1376
      %v1378 = vsel %vm1372, %v1377, %v1376
      %vm1379 = vcmp.ne.s32.totalorder %v1133, 0
      %vm1380 = vcmp.ne.s32.totalorder %v1140, 0
      %vm1381 = vcmp.ne.s32.totalorder %v1147, 0
      %vm1382 = vcmp.ne.s32.totalorder %v1154, 0
      %vm1383 = vcmp.ne.s32.totalorder %v1161, 0
      %vm1384 = vcmp.ne.s32.totalorder %v1168, 0
      %vm1385 = vcmp.ne.s32.totalorder %v1175, 0
      %vm1386 = vcmp.ne.s32.totalorder %v1182, 0
      %vm1387 = vcmp.ne.s32.totalorder %v1189, 0
      %vm1388 = vcmp.ne.s32.totalorder %v1196, 0
      %vm1389 = vcmp.ne.s32.totalorder %v1203, 0
      %vm1390 = vcmp.ne.s32.totalorder %v1210, 0
      %vm1391 = vcmp.ne.s32.totalorder %v1217, 0
      %vm1392 = vcmp.ne.s32.totalorder %v1224, 0
      %vm1393 = vcmp.ne.s32.totalorder %v1231, 0
      %vm1394 = vcmp.ne.s32.totalorder %v1238, 0
      %vm1395 = vcmp.ne.s32.totalorder %v1245, 0
      %vm1396 = vcmp.ne.s32.totalorder %v1252, 0
      %vm1397 = vcmp.ne.s32.totalorder %v1259, 0
      %vm1398 = vcmp.ne.s32.totalorder %v1266, 0
      %vm1399 = vcmp.ne.s32.totalorder %v1273, 0
      %vm1400 = vcmp.ne.s32.totalorder %v1280, 0
      %vm1401 = vcmp.ne.s32.totalorder %v1287, 0
      %vm1402 = vcmp.ne.s32.totalorder %v1294, 0
      %vm1403 = vcmp.ne.s32.totalorder %v1301, 0
      %vm1404 = vcmp.ne.s32.totalorder %v1308, 0
      %vm1405 = vcmp.ne.s32.totalorder %v1315, 0
      %vm1406 = vcmp.ne.s32.totalorder %v1322, 0
      %vm1407 = vcmp.ne.s32.totalorder %v1329, 0
      %vm1408 = vcmp.ne.s32.totalorder %v1336, 0
      %vm1409 = vcmp.ne.s32.totalorder %v1343, 0
      %vm1410 = vcmp.ne.s32.totalorder %v1350, 0
      %vm1411 = vcmp.ne.s32.totalorder %v1357, 0
      %vm1412 = vcmp.ne.s32.totalorder %v1364, 0
      %vm1413 = vcmp.ne.s32.totalorder %v1371, 0
      %vm1414 = vcmp.ne.s32.totalorder %v1378, 0
      %vm1415 = vcmp.lt.s32.totalorder %v1133, 0
      %vm1416 = vcmp.lt.s32.totalorder %v1140, 0
      %vm1417 = vcmp.lt.s32.totalorder %v1147, 0
      %vm1418 = vcmp.lt.s32.totalorder %v1154, 0
      %vm1419 = vcmp.lt.s32.totalorder %v1161, 0
      %vm1420 = vcmp.lt.s32.totalorder %v1168, 0
      %vm1421 = vcmp.lt.s32.totalorder %v1175, 0
      %vm1422 = vcmp.lt.s32.totalorder %v1182, 0
      %vm1423 = vcmp.lt.s32.totalorder %v1189, 0
      %vm1424 = vcmp.lt.s32.totalorder %v1196, 0
      %vm1425 = vcmp.lt.s32.totalorder %v1203, 0
      %vm1426 = vcmp.lt.s32.totalorder %v1210, 0
      %vm1427 = vcmp.lt.s32.totalorder %v1217, 0
      %vm1428 = vcmp.lt.s32.totalorder %v1224, 0
      %vm1429 = vcmp.lt.s32.totalorder %v1231, 0
      %vm1430 = vcmp.lt.s32.totalorder %v1238, 0
      %vm1431 = vcmp.lt.s32.totalorder %v1245, 0
      %vm1432 = vcmp.lt.s32.totalorder %v1252, 0
      %vm1433 = vcmp.lt.s32.totalorder %v1259, 0
      %vm1434 = vcmp.lt.s32.totalorder %v1266, 0
      %vm1435 = vcmp.lt.s32.totalorder %v1273, 0
      %vm1436 = vcmp.lt.s32.totalorder %v1280, 0
      %vm1437 = vcmp.lt.s32.totalorder %v1287, 0
      %vm1438 = vcmp.lt.s32.totalorder %v1294, 0
      %vm1439 = vcmp.lt.s32.totalorder %v1301, 0
      %vm1440 = vcmp.lt.s32.totalorder %v1308, 0
      %vm1441 = vcmp.lt.s32.totalorder %v1315, 0
      %vm1442 = vcmp.lt.s32.totalorder %v1322, 0
      %vm1443 = vcmp.lt.s32.totalorder %v1329, 0
      %vm1444 = vcmp.lt.s32.totalorder %v1336, 0
      %vm1445 = vcmp.lt.s32.totalorder %v1343, 0
      %vm1446 = vcmp.lt.s32.totalorder %v1350, 0
      %vm1447 = vcmp.lt.s32.totalorder %v1357, 0
      %vm1448 = vcmp.lt.s32.totalorder %v1364, 0
      %vm1449 = vcmp.lt.s32.totalorder %v1371, 0
      %vm1450 = vcmp.lt.s32.totalorder %v1378, 0
      %vm1451 = vmand %vm1415, %vm1379
      %vm1452 = vmand %vm1416, %vm1380
      %vm1453 = vmand %vm1417, %vm1381
      %vm1454 = vmand %vm1418, %vm1382
      %vm1455 = vmand %vm1419, %vm1383
      %vm1456 = vmand %vm1420, %vm1384
      %vm1457 = vmand %vm1421, %vm1385
      %vm1458 = vmand %vm1422, %vm1386
      %vm1459 = vmand %vm1423, %vm1387
      %vm1460 = vmand %vm1424, %vm1388
      %vm1461 = vmand %vm1425, %vm1389
      %vm1462 = vmand %vm1426, %vm1390
      %vm1463 = vmand %vm1427, %vm1391
      %vm1464 = vmand %vm1428, %vm1392
      %vm1465 = vmand %vm1429, %vm1393
      %vm1466 = vmand %vm1430, %vm1394
      %vm1467 = vmand %vm1431, %vm1395
      %vm1468 = vmand %vm1432, %vm1396
      %vm1469 = vmand %vm1433, %vm1397
      %vm1470 = vmand %vm1434, %vm1398
      %vm1471 = vmand %vm1435, %vm1399
      %vm1472 = vmand %vm1436, %vm1400
      %vm1473 = vmand %vm1437, %vm1401
      %vm1474 = vmand %vm1438, %vm1402
      %vm1475 = vmand %vm1439, %vm1403
      %vm1476 = vmand %vm1440, %vm1404
      %vm1477 = vmand %vm1441, %vm1405
      %vm1478 = vmand %vm1442, %vm1406
      %vm1479 = vmand %vm1443, %vm1407
      %vm1480 = vmand %vm1444, %vm1408
      %vm1481 = vmand %vm1445, %vm1409
      %vm1482 = vmand %vm1446, %vm1410
      %vm1483 = vmand %vm1447, %vm1411
      %vm1484 = vmand %vm1448, %vm1412
      %vm1485 = vmand %vm1449, %vm1413
      %vm1486 = vmand %vm1450, %vm1414
      %v1487 = vadd.s32 %v1133, 16
      %v1488 = vadd.s32 %v1140, 16
      %v1489 = vadd.s32 %v1147, 16
      %v1490 = vadd.s32 %v1154, 16
      %v1491 = vadd.s32 %v1161, 16
      %v1492 = vadd.s32 %v1168, 16
      %v1493 = vadd.s32 %v1175, 16
      %v1494 = vadd.s32 %v1182, 16
      %v1495 = vadd.s32 %v1189, 16
      %v1496 = vadd.s32 %v1196, 16
      %v1497 = vadd.s32 %v1203, 16
      %v1498 = vadd.s32 %v1210, 16
      %v1499 = vadd.s32 %v1217, 16
      %v1500 = vadd.s32 %v1224, 16
      %v1501 = vadd.s32 %v1231, 16
      %v1502 = vadd.s32 %v1238, 16
      %v1503 = vadd.s32 %v1245, 16
      %v1504 = vadd.s32 %v1252, 16
      %v1505 = vadd.s32 %v1259, 16
      %v1506 = vadd.s32 %v1266, 16
      %v1507 = vadd.s32 %v1273, 16
      %v1508 = vadd.s32 %v1280, 16
      %v1509 = vadd.s32 %v1287, 16
      %v1510 = vadd.s32 %v1294, 16
      %v1511 = vadd.s32 %v1301, 16
      %v1512 = vadd.s32 %v1308, 16
      %v1513 = vadd.s32 %v1315, 16
      %v1514 = vadd.s32 %v1322, 16
      %v1515 = vadd.s32 %v1329, 16
      %v1516 = vadd.s32 %v1336, 16
      %v1517 = vadd.s32 %v1343, 16
      %v1518 = vadd.s32 %v1350, 16
      %v1519 = vadd.s32 %v1357, 16
      %v1520 = vadd.s32 %v1364, 16
      %v1521 = vadd.s32 %v1371, 16
      %v1522 = vadd.s32 %v1378, 16
      %v1523 = vsel %vm1451, %v1487, %v1133
      %v1524 = vsel %vm1452, %v1488, %v1140
      %v1525 = vsel %vm1453, %v1489, %v1147
      %v1526 = vsel %vm1454, %v1490, %v1154
      %v1527 = vsel %vm1455, %v1491, %v1161
      %v1528 = vsel %vm1456, %v1492, %v1168
      %v1529 = vsel %vm1457, %v1493, %v1175
      %v1530 = vsel %vm1458, %v1494, %v1182
      %v1531 = vsel %vm1459, %v1495, %v1189
      %v1532 = vsel %vm1460, %v1496, %v1196
      %v1533 = vsel %vm1461, %v1497, %v1203
      %v1534 = vsel %vm1462, %v1498, %v1210
      %v1535 = vsel %vm1463, %v1499, %v1217
      %v1536 = vsel %vm1464, %v1500, %v1224
      %v1537 = vsel %vm1465, %v1501, %v1231
      %v1538 = vsel %vm1466, %v1502, %v1238
      %v1539 = vsel %vm1467, %v1503, %v1245
      %v1540 = vsel %vm1468, %v1504, %v1252
      %v1541 = vsel %vm1469, %v1505, %v1259
      %v1542 = vsel %vm1470, %v1506, %v1266
      %v1543 = vsel %vm1471, %v1507, %v1273
      %v1544 = vsel %vm1472, %v1508, %v1280
      %v1545 = vsel %vm1473, %v1509, %v1287
      %v1546 = vsel %vm1474, %v1510, %v1294
      %v1547 = vsel %vm1475, %v1511, %v1301
      %v1548 = vsel %vm1476, %v1512, %v1308
      %v1549 = vsel %vm1477, %v1513, %v1315
      %v1550 = vsel %vm1478, %v1514, %v1322
      %v1551 = vsel %vm1479, %v1515, %v1329
      %v1552 = vsel %vm1480, %v1516, %v1336
      %v1553 = vsel %vm1481, %v1517, %v1343
      %v1554 = vsel %vm1482, %v1518, %v1350
      %v1555 = vsel %vm1483, %v1519, %v1357
      %v1556 = vsel %vm1484, %v1520, %v1364
      %v1557 = vsel %vm1485, %v1521, %v1371
      %v1558 = vsel %vm1486, %v1522, %v1378
      %vm1595 = vcmask 1046528
      %v1596 = vrot.slane %v1091, 1
      %v1597 = vrot.slane %v1092, 1
      %v1598 = vsel %vm1595, %v1596, %v1597
      %v1599 = vrot.slane %v1093, 1
      %v1600 = vsel %vm1595, %v1597, %v1599
      %v1601 = vrot.slane %v1094, 1
      %v1602 = vsel %vm1595, %v1599, %v1601
      %v1603 = vrot.slane %v1095, 1
      %v1604 = vsel %vm1595, %v1601, %v1603
      %v1605 = vrot.slane %v1096, 1
      %v1606 = vsel %vm1595, %v1603, %v1605
      %v1607 = vrot.slane %v1097, 1
      %v1608 = vsel %vm1595, %v1605, %v1607
      %v1609 = vrot.slane %v1098, 1
      %v1610 = vsel %vm1595, %v1607, %v1609
      %v1611 = vrot.slane %v1099, 1
      %v1612 = vsel %vm1595, %v1609, %v1611
      %v1613 = vrot.slane %v1100, 1
      %v1614 = vsel %vm1595, %v1611, %v1613
      %v1615 = vrot.slane %v1101, 1
      %v1616 = vsel %vm1595, %v1613, %v1615
      %v1617 = vrot.slane %v1102, 1
      %v1618 = vsel %vm1595, %v1615, %v1617
      %v1619 = vrot.slane %v1103, 1
      %v1620 = vsel %vm1595, %v1617, %v1619
      %v1621 = vrot.slane %v1104, 1
      %v1622 = vsel %vm1595, %v1619, %v1621
      %v1623 = vrot.slane %v1105, 1
      %v1624 = vsel %vm1595, %v1621, %v1623
      %v1625 = vrot.slane %v1106, 1
      %v1626 = vsel %vm1595, %v1623, %v1625
      %v1627 = vrot.slane %v1107, 1
      %v1628 = vsel %vm1595, %v1625, %v1627
      %v1629 = vrot.slane %v1108, 1
      %v1630 = vsel %vm1595, %v1627, %v1629
      %v1631 = vrot.slane %v1109, 1
      %v1632 = vsel %vm1595, %v1629, %v1631
      %v1633 = vrot.slane %v1110, 1
      %v1634 = vsel %vm1595, %v1631, %v1633
      %v1635 = vrot.slane %v1111, 1
      %v1636 = vsel %vm1595, %v1633, %v1635
      %v1637 = vrot.slane %v1112, 1
      %v1638 = vsel %vm1595, %v1635, %v1637
      %v1639 = vrot.slane %v1113, 1
      %v1640 = vsel %vm1595, %v1637, %v1639
      %v1641 = vrot.slane %v1114, 1
      %v1642 = vsel %vm1595, %v1639, %v1641
      %v1643 = vrot.slane %v1115, 1
      %v1644 = vsel %vm1595, %v1641, %v1643
      %v1645 = vrot.slane %v1116, 1
      %v1646 = vsel %vm1595, %v1643, %v1645
      %v1647 = vrot.slane %v1117, 1
      %v1648 = vsel %vm1595, %v1645, %v1647
      %v1649 = vrot.slane %v1118, 1
      %v1650 = vsel %vm1595, %v1647, %v1649
      %v1651 = vrot.slane %v1119, 1
      %v1652 = vsel %vm1595, %v1649, %v1651
      %v1653 = vrot.slane %v1120, 1
      %v1654 = vsel %vm1595, %v1651, %v1653
      %v1655 = vrot.slane %v1121, 1
      %v1656 = vsel %vm1595, %v1653, %v1655
      %v1657 = vrot.slane %v1122, 1
      %v1658 = vsel %vm1595, %v1655, %v1657
      %v1659 = vrot.slane %v1123, 1
      %v1660 = vsel %vm1595, %v1657, %v1659
      %v1661 = vrot.slane %v1124, 1
      %v1662 = vsel %vm1595, %v1659, %v1661
      %v1663 = vrot.slane %v1125, 1
      %v1664 = vsel %vm1595, %v1661, %v1663
      %v1665 = vrot.slane %v1126, 1
      %v1666 = vsel %vm1595, %v1663, %v1665
      %v1703 = vsel %vm1595, %v1665, 0.0
      %vm1704 = vcmp.eq.s32.totalorder %v1523, 15
      %vm1705 = vcmp.eq.s32.totalorder %v1524, 15
      %vm1706 = vcmp.eq.s32.totalorder %v1525, 15
      %vm1707 = vcmp.eq.s32.totalorder %v1526, 15
      %vm1708 = vcmp.eq.s32.totalorder %v1527, 15
      %vm1709 = vcmp.eq.s32.totalorder %v1528, 15
      %vm1710 = vcmp.eq.s32.totalorder %v1529, 15
      %vm1711 = vcmp.eq.s32.totalorder %v1530, 15
      %vm1712 = vcmp.eq.s32.totalorder %v1531, 15
      %vm1713 = vcmp.eq.s32.totalorder %v1532, 15
      %vm1714 = vcmp.eq.s32.totalorder %v1533, 15
      %vm1715 = vcmp.eq.s32.totalorder %v1534, 15
      %vm1716 = vcmp.eq.s32.totalorder %v1535, 15
      %vm1717 = vcmp.eq.s32.totalorder %v1536, 15
      %vm1718 = vcmp.eq.s32.totalorder %v1537, 15
      %vm1719 = vcmp.eq.s32.totalorder %v1538, 15
      %vm1720 = vcmp.eq.s32.totalorder %v1539, 15
      %vm1721 = vcmp.eq.s32.totalorder %v1540, 15
      %vm1722 = vcmp.eq.s32.totalorder %v1541, 15
      %vm1723 = vcmp.eq.s32.totalorder %v1542, 15
      %vm1724 = vcmp.eq.s32.totalorder %v1543, 15
      %vm1725 = vcmp.eq.s32.totalorder %v1544, 15
      %vm1726 = vcmp.eq.s32.totalorder %v1545, 15
      %vm1727 = vcmp.eq.s32.totalorder %v1546, 15
      %vm1728 = vcmp.eq.s32.totalorder %v1547, 15
      %vm1729 = vcmp.eq.s32.totalorder %v1548, 15
      %vm1730 = vcmp.eq.s32.totalorder %v1549, 15
      %vm1731 = vcmp.eq.s32.totalorder %v1550, 15
      %vm1732 = vcmp.eq.s32.totalorder %v1551, 15
      %vm1733 = vcmp.eq.s32.totalorder %v1552, 15
      %vm1734 = vcmp.eq.s32.totalorder %v1553, 15
      %vm1735 = vcmp.eq.s32.totalorder %v1554, 15
      %vm1736 = vcmp.eq.s32.totalorder %v1555, 15
      %vm1737 = vcmp.eq.s32.totalorder %v1556, 15
      %vm1738 = vcmp.eq.s32.totalorder %v1557, 15
      %vm1739 = vcmp.eq.s32.totalorder %v1558, 15
      %v1740 = vsel %vm1704, 1, 0
      %v1741 = vsel %vm1705, 1, 0
      %v1742 = vsel %vm1706, 1, 0
      %v1743 = vsel %vm1707, 1, 0
      %v1744 = vsel %vm1708, 1, 0
      %v1745 = vsel %vm1709, 1, 0
      %v1746 = vsel %vm1710, 1, 0
      %v1747 = vsel %vm1711, 1, 0
      %v1748 = vsel %vm1712, 1, 0
      %v1749 = vsel %vm1713, 1, 0
      %v1750 = vsel %vm1714, 1, 0
      %v1751 = vsel %vm1715, 1, 0
      %v1752 = vsel %vm1716, 1, 0
      %v1753 = vsel %vm1717, 1, 0
      %v1754 = vsel %vm1718, 1, 0
      %v1755 = vsel %vm1719, 1, 0
      %v1756 = vsel %vm1720, 1, 0
      %v1757 = vsel %vm1721, 1, 0
      %v1758 = vsel %vm1722, 1, 0
      %v1759 = vsel %vm1723, 1, 0
      %v1760 = vsel %vm1724, 1, 0
      %v1761 = vsel %vm1725, 1, 0
      %v1762 = vsel %vm1726, 1, 0
      %v1763 = vsel %vm1727, 1, 0
      %v1764 = vsel %vm1728, 1, 0
      %v1765 = vsel %vm1729, 1, 0
      %v1766 = vsel %vm1730, 1, 0
      %v1767 = vsel %vm1731, 1, 0
      %v1768 = vsel %vm1732, 1, 0
      %v1769 = vsel %vm1733, 1, 0
      %v1770 = vsel %vm1734, 1, 0
      %v1771 = vsel %vm1735, 1, 0
      %v1772 = vsel %vm1736, 1, 0
      %v1773 = vsel %vm1737, 1, 0
      %v1774 = vsel %vm1738, 1, 0
      %v1775 = vsel %vm1739, 1, 0
      %vm1776 = vcmp.eq.s32.totalorder %v1740, 1
      %vm1777 = vcmp.eq.s32.totalorder %v1741, 1
      %vm1778 = vcmp.eq.s32.totalorder %v1742, 1
      %vm1779 = vcmp.eq.s32.totalorder %v1743, 1
      %vm1780 = vcmp.eq.s32.totalorder %v1744, 1
      %vm1781 = vcmp.eq.s32.totalorder %v1745, 1
      %vm1782 = vcmp.eq.s32.totalorder %v1746, 1
      %vm1783 = vcmp.eq.s32.totalorder %v1747, 1
      %vm1784 = vcmp.eq.s32.totalorder %v1748, 1
      %vm1785 = vcmp.eq.s32.totalorder %v1749, 1
      %vm1786 = vcmp.eq.s32.totalorder %v1750, 1
      %vm1787 = vcmp.eq.s32.totalorder %v1751, 1
      %vm1788 = vcmp.eq.s32.totalorder %v1752, 1
      %vm1789 = vcmp.eq.s32.totalorder %v1753, 1
      %vm1790 = vcmp.eq.s32.totalorder %v1754, 1
      %vm1791 = vcmp.eq.s32.totalorder %v1755, 1
      %vm1792 = vcmp.eq.s32.totalorder %v1756, 1
      %vm1793 = vcmp.eq.s32.totalorder %v1757, 1
      %vm1794 = vcmp.eq.s32.totalorder %v1758, 1
      %vm1795 = vcmp.eq.s32.totalorder %v1759, 1
      %vm1796 = vcmp.eq.s32.totalorder %v1760, 1
      %vm1797 = vcmp.eq.s32.totalorder %v1761, 1
      %vm1798 = vcmp.eq.s32.totalorder %v1762, 1
      %vm1799 = vcmp.eq.s32.totalorder %v1763, 1
      %vm1800 = vcmp.eq.s32.totalorder %v1764, 1
      %vm1801 = vcmp.eq.s32.totalorder %v1765, 1
      %vm1802 = vcmp.eq.s32.totalorder %v1766, 1
      %vm1803 = vcmp.eq.s32.totalorder %v1767, 1
      %vm1804 = vcmp.eq.s32.totalorder %v1768, 1
      %vm1805 = vcmp.eq.s32.totalorder %v1769, 1
      %vm1806 = vcmp.eq.s32.totalorder %v1770, 1
      %vm1807 = vcmp.eq.s32.totalorder %v1771, 1
      %vm1808 = vcmp.eq.s32.totalorder %v1772, 1
      %vm1809 = vcmp.eq.s32.totalorder %v1773, 1
      %vm1810 = vcmp.eq.s32.totalorder %v1774, 1
      %vm1811 = vcmp.eq.s32.totalorder %v1775, 1
      %v1812 = vsel %vm1776, 0.0, %v1598
      %v1813 = vsel %vm1777, 0.0, %v1600
      %v1814 = vsel %vm1778, 0.0, %v1602
      %v1815 = vsel %vm1779, 0.0, %v1604
      %v1816 = vsel %vm1780, 0.0, %v1606
      %v1817 = vsel %vm1781, 0.0, %v1608
      %v1818 = vsel %vm1782, 0.0, %v1610
      %v1819 = vsel %vm1783, 0.0, %v1612
      %v1820 = vsel %vm1784, 0.0, %v1614
      %v1821 = vsel %vm1785, 0.0, %v1616
      %v1822 = vsel %vm1786, 0.0, %v1618
      %v1823 = vsel %vm1787, 0.0, %v1620
      %v1824 = vsel %vm1788, 0.0, %v1622
      %v1825 = vsel %vm1789, 0.0, %v1624
      %v1826 = vsel %vm1790, 0.0, %v1626
      %v1827 = vsel %vm1791, 0.0, %v1628
      %v1828 = vsel %vm1792, 0.0, %v1630
      %v1829 = vsel %vm1793, 0.0, %v1632
      %v1830 = vsel %vm1794, 0.0, %v1634
      %v1831 = vsel %vm1795, 0.0, %v1636
      %v1832 = vsel %vm1796, 0.0, %v1638
      %v1833 = vsel %vm1797, 0.0, %v1640
      %v1834 = vsel %vm1798, 0.0, %v1642
      %v1835 = vsel %vm1799, 0.0, %v1644
      %v1836 = vsel %vm1800, 0.0, %v1646
      %v1837 = vsel %vm1801, 0.0, %v1648
      %v1838 = vsel %vm1802, 0.0, %v1650
      %v1839 = vsel %vm1803, 0.0, %v1652
      %v1840 = vsel %vm1804, 0.0, %v1654
      %v1841 = vsel %vm1805, 0.0, %v1656
      %v1842 = vsel %vm1806, 0.0, %v1658
      %v1843 = vsel %vm1807, 0.0, %v1660
      %v1844 = vsel %vm1808, 0.0, %v1662
      %v1845 = vsel %vm1809, 0.0, %v1664
      %v1846 = vsel %vm1810, 0.0, %v1666
      %v1847 = vsel %vm1811, 0.0, %v1703
      %vm1848 = vcmask 1040384
      %v1849 = vrot.slane %v1091, 7
      %v1850 = vrot.slane %v1092, 7
      %v1851 = vsel %vm1848, %v1849, %v1850
      %v1852 = vrot.slane %v1093, 7
      %v1853 = vsel %vm1848, %v1850, %v1852
      %v1854 = vrot.slane %v1094, 7
      %v1855 = vsel %vm1848, %v1852, %v1854
      %v1856 = vrot.slane %v1095, 7
      %v1857 = vsel %vm1848, %v1854, %v1856
      %v1858 = vrot.slane %v1096, 7
      %v1859 = vsel %vm1848, %v1856, %v1858
      %v1860 = vrot.slane %v1097, 7
      %v1861 = vsel %vm1848, %v1858, %v1860
      %v1862 = vrot.slane %v1098, 7
      %v1863 = vsel %vm1848, %v1860, %v1862
      %v1864 = vrot.slane %v1099, 7
      %v1865 = vsel %vm1848, %v1862, %v1864
      %v1866 = vrot.slane %v1100, 7
      %v1867 = vsel %vm1848, %v1864, %v1866
      %v1868 = vrot.slane %v1101, 7
      %v1869 = vsel %vm1848, %v1866, %v1868
      %v1870 = vrot.slane %v1102, 7
      %v1871 = vsel %vm1848, %v1868, %v1870
      %v1872 = vrot.slane %v1103, 7
      %v1873 = vsel %vm1848, %v1870, %v1872
      %v1874 = vrot.slane %v1104, 7
      %v1875 = vsel %vm1848, %v1872, %v1874
      %v1876 = vrot.slane %v1105, 7
      %v1877 = vsel %vm1848, %v1874, %v1876
      %v1878 = vrot.slane %v1106, 7
      %v1879 = vsel %vm1848, %v1876, %v1878
      %v1880 = vrot.slane %v1107, 7
      %v1881 = vsel %vm1848, %v1878, %v1880
      %v1882 = vrot.slane %v1108, 7
      %v1883 = vsel %vm1848, %v1880, %v1882
      %v1884 = vrot.slane %v1109, 7
      %v1885 = vsel %vm1848, %v1882, %v1884
      %v1886 = vrot.slane %v1110, 7
      %v1887 = vsel %vm1848, %v1884, %v1886
      %v1888 = vrot.slane %v1111, 7
      %v1889 = vsel %vm1848, %v1886, %v1888
      %v1890 = vrot.slane %v1112, 7
      %v1891 = vsel %vm1848, %v1888, %v1890
      %v1892 = vrot.slane %v1113, 7
      %v1893 = vsel %vm1848, %v1890, %v1892
      %v1894 = vrot.slane %v1114, 7
      %v1895 = vsel %vm1848, %v1892, %v1894
      %v1896 = vrot.slane %v1115, 7
      %v1897 = vsel %vm1848, %v1894, %v1896
      %v1898 = vrot.slane %v1116, 7
      %v1899 = vsel %vm1848, %v1896, %v1898
      %v1900 = vrot.slane %v1117, 7
      %v1901 = vsel %vm1848, %v1898, %v1900
      %v1902 = vrot.slane %v1118, 7
      %v1903 = vsel %vm1848, %v1900, %v1902
      %v1904 = vrot.slane %v1119, 7
      %v1905 = vsel %vm1848, %v1902, %v1904
      %v1906 = vrot.slane %v1120, 7
      %v1907 = vsel %vm1848, %v1904, %v1906
      %v1908 = vrot.slane %v1121, 7
      %v1909 = vsel %vm1848, %v1906, %v1908
      %v1910 = vrot.slane %v1122, 7
      %v1911 = vsel %vm1848, %v1908, %v1910
      %v1912 = vrot.slane %v1123, 7
      %v1913 = vsel %vm1848, %v1910, %v1912
      %v1914 = vrot.slane %v1124, 7
      %v1915 = vsel %vm1848, %v1912, %v1914
      %v1916 = vrot.slane %v1125, 7
      %v1917 = vsel %vm1848, %v1914, %v1916
      %v1918 = vrot.slane %v1126, 7
      %v1919 = vsel %vm1848, %v1916, %v1918
      %1920 = vrot.lane.b32.xlu0 %v1849, 120
      %v1921 = vpop.permute.xlu0 %1920
      %1922 = vrot.lane.b32.xlu0 %v1851, 120
      %v1923 = vpop.permute.xlu0 %1922
      %1924 = vrot.lane.b32.xlu0 %v1853, 120
      %v1925 = vpop.permute.xlu0 %1924
      %1926 = vrot.lane.b32.xlu0 %v1855, 120
      %v1927 = vpop.permute.xlu0 %1926
      %1928 = vrot.lane.b32.xlu0 %v1857, 120
      %v1929 = vpop.permute.xlu0 %1928
      %1930 = vrot.lane.b32.xlu0 %v1859, 120
      %v1931 = vpop.permute.xlu0 %1930
      %1932 = vrot.lane.b32.xlu0 %v1861, 120
      %v1933 = vpop.permute.xlu0 %1932
      %1934 = vrot.lane.b32.xlu0 %v1863, 120
      %v1935 = vpop.permute.xlu0 %1934
      %1936 = vrot.lane.b32.xlu0 %v1865, 120
      %v1937 = vpop.permute.xlu0 %1936
      %1938 = vrot.lane.b32.xlu0 %v1867, 120
      %v1939 = vpop.permute.xlu0 %1938
      %1940 = vrot.lane.b32.xlu0 %v1869, 120
      %v1941 = vpop.permute.xlu0 %1940
      %1942 = vrot.lane.b32.xlu0 %v1871, 120
      %v1943 = vpop.permute.xlu0 %1942
      %1944 = vrot.lane.b32.xlu0 %v1873, 120
      %v1945 = vpop.permute.xlu0 %1944
      %1946 = vrot.lane.b32.xlu0 %v1875, 120
      %v1947 = vpop.permute.xlu0 %1946
      %1948 = vrot.lane.b32.xlu0 %v1877, 120
      %v1949 = vpop.permute.xlu0 %1948
      %1950 = vrot.lane.b32.xlu0 %v1879, 120
      %v1951 = vpop.permute.xlu0 %1950
      %1952 = vrot.lane.b32.xlu0 %v1881, 120
      %v1953 = vpop.permute.xlu0 %1952
      %1954 = vrot.lane.b32.xlu0 %v1883, 120
      %v1955 = vpop.permute.xlu0 %1954
      %1956 = vrot.lane.b32.xlu0 %v1885, 120
      %v1957 = vpop.permute.xlu0 %1956
      %1958 = vrot.lane.b32.xlu0 %v1887, 120
      %v1959 = vpop.permute.xlu0 %1958
      %1960 = vrot.lane.b32.xlu0 %v1889, 120
      %v1961 = vpop.permute.xlu0 %1960
      %1962 = vrot.lane.b32.xlu0 %v1891, 120
      %v1963 = vpop.permute.xlu0 %1962
      %1964 = vrot.lane.b32.xlu0 %v1893, 120
      %v1965 = vpop.permute.xlu0 %1964
      %1966 = vrot.lane.b32.xlu0 %v1895, 120
      %v1967 = vpop.permute.xlu0 %1966
      %1968 = vrot.lane.b32.xlu0 %v1897, 120
      %v1969 = vpop.permute.xlu0 %1968
      %1970 = vrot.lane.b32.xlu0 %v1899, 120
      %v1971 = vpop.permute.xlu0 %1970
      %1972 = vrot.lane.b32.xlu0 %v1901, 120
      %v1973 = vpop.permute.xlu0 %1972
      %1974 = vrot.lane.b32.xlu0 %v1903, 120
      %v1975 = vpop.permute.xlu0 %1974
      %1976 = vrot.lane.b32.xlu0 %v1905, 120
      %v1977 = vpop.permute.xlu0 %1976
      %1978 = vrot.lane.b32.xlu0 %v1907, 120
      %v1979 = vpop.permute.xlu0 %1978
      %1980 = vrot.lane.b32.xlu0 %v1909, 120
      %v1981 = vpop.permute.xlu0 %1980
      %1982 = vrot.lane.b32.xlu0 %v1911, 120
      %v1983 = vpop.permute.xlu0 %1982
      %1984 = vrot.lane.b32.xlu0 %v1913, 120
      %v1985 = vpop.permute.xlu0 %1984
      %1986 = vrot.lane.b32.xlu0 %v1915, 120
      %v1987 = vpop.permute.xlu0 %1986
      %1988 = vrot.lane.b32.xlu0 %v1917, 120
      %v1989 = vpop.permute.xlu0 %1988
      %1990 = vrot.lane.b32.xlu0 %v1919, 120
      %v1991 = vpop.permute.xlu0 %1990
      %v2028 = vsel %vm1848, 0.0, %v1921
      %vm2029 = vcmp.eq.s32.totalorder %v1523, 0
      %vm2030 = vcmp.eq.s32.totalorder %v1524, 0
      %vm2031 = vcmp.eq.s32.totalorder %v1525, 0
      %vm2032 = vcmp.eq.s32.totalorder %v1526, 0
      %vm2033 = vcmp.eq.s32.totalorder %v1527, 0
      %vm2034 = vcmp.eq.s32.totalorder %v1528, 0
      %vm2035 = vcmp.eq.s32.totalorder %v1529, 0
      %vm2036 = vcmp.eq.s32.totalorder %v1530, 0
      %vm2037 = vcmp.eq.s32.totalorder %v1531, 0
      %vm2038 = vcmp.eq.s32.totalorder %v1532, 0
      %vm2039 = vcmp.eq.s32.totalorder %v1533, 0
      %vm2040 = vcmp.eq.s32.totalorder %v1534, 0
      %vm2041 = vcmp.eq.s32.totalorder %v1535, 0
      %vm2042 = vcmp.eq.s32.totalorder %v1536, 0
      %vm2043 = vcmp.eq.s32.totalorder %v1537, 0
      %vm2044 = vcmp.eq.s32.totalorder %v1538, 0
      %vm2045 = vcmp.eq.s32.totalorder %v1539, 0
      %vm2046 = vcmp.eq.s32.totalorder %v1540, 0
      %vm2047 = vcmp.eq.s32.totalorder %v1541, 0
      %vm2048 = vcmp.eq.s32.totalorder %v1542, 0
      %vm2049 = vcmp.eq.s32.totalorder %v1543, 0
      %vm2050 = vcmp.eq.s32.totalorder %v1544, 0
      %vm2051 = vcmp.eq.s32.totalorder %v1545, 0
      %vm2052 = vcmp.eq.s32.totalorder %v1546, 0
      %vm2053 = vcmp.eq.s32.totalorder %v1547, 0
      %vm2054 = vcmp.eq.s32.totalorder %v1548, 0
      %vm2055 = vcmp.eq.s32.totalorder %v1549, 0
      %vm2056 = vcmp.eq.s32.totalorder %v1550, 0
      %vm2057 = vcmp.eq.s32.totalorder %v1551, 0
      %vm2058 = vcmp.eq.s32.totalorder %v1552, 0
      %vm2059 = vcmp.eq.s32.totalorder %v1553, 0
      %vm2060 = vcmp.eq.s32.totalorder %v1554, 0
      %vm2061 = vcmp.eq.s32.totalorder %v1555, 0
      %vm2062 = vcmp.eq.s32.totalorder %v1556, 0
      %vm2063 = vcmp.eq.s32.totalorder %v1557, 0
      %vm2064 = vcmp.eq.s32.totalorder %v1558, 0
      %v2065 = vsel %vm2029, 1, 0
      %v2066 = vsel %vm2030, 1, 0
      %v2067 = vsel %vm2031, 1, 0
      %v2068 = vsel %vm2032, 1, 0
      %v2069 = vsel %vm2033, 1, 0
      %v2070 = vsel %vm2034, 1, 0
      %v2071 = vsel %vm2035, 1, 0
      %v2072 = vsel %vm2036, 1, 0
      %v2073 = vsel %vm2037, 1, 0
      %v2074 = vsel %vm2038, 1, 0
      %v2075 = vsel %vm2039, 1, 0
      %v2076 = vsel %vm2040, 1, 0
      %v2077 = vsel %vm2041, 1, 0
      %v2078 = vsel %vm2042, 1, 0
      %v2079 = vsel %vm2043, 1, 0
      %v2080 = vsel %vm2044, 1, 0
      %v2081 = vsel %vm2045, 1, 0
      %v2082 = vsel %vm2046, 1, 0
      %v2083 = vsel %vm2047, 1, 0
      %v2084 = vsel %vm2048, 1, 0
      %v2085 = vsel %vm2049, 1, 0
      %v2086 = vsel %vm2050, 1, 0
      %v2087 = vsel %vm2051, 1, 0
      %v2088 = vsel %vm2052, 1, 0
      %v2089 = vsel %vm2053, 1, 0
      %v2090 = vsel %vm2054, 1, 0
      %v2091 = vsel %vm2055, 1, 0
      %v2092 = vsel %vm2056, 1, 0
      %v2093 = vsel %vm2057, 1, 0
      %v2094 = vsel %vm2058, 1, 0
      %v2095 = vsel %vm2059, 1, 0
      %v2096 = vsel %vm2060, 1, 0
      %v2097 = vsel %vm2061, 1, 0
      %v2098 = vsel %vm2062, 1, 0
      %v2099 = vsel %vm2063, 1, 0
      %v2100 = vsel %vm2064, 1, 0
      %vm2101 = vcmp.eq.s32.totalorder %v2065, 1
      %vm2102 = vcmp.eq.s32.totalorder %v2066, 1
      %vm2103 = vcmp.eq.s32.totalorder %v2067, 1
      %vm2104 = vcmp.eq.s32.totalorder %v2068, 1
      %vm2105 = vcmp.eq.s32.totalorder %v2069, 1
      %vm2106 = vcmp.eq.s32.totalorder %v2070, 1
      %vm2107 = vcmp.eq.s32.totalorder %v2071, 1
      %vm2108 = vcmp.eq.s32.totalorder %v2072, 1
      %vm2109 = vcmp.eq.s32.totalorder %v2073, 1
      %vm2110 = vcmp.eq.s32.totalorder %v2074, 1
      %vm2111 = vcmp.eq.s32.totalorder %v2075, 1
      %vm2112 = vcmp.eq.s32.totalorder %v2076, 1
      %vm2113 = vcmp.eq.s32.totalorder %v2077, 1
      %vm2114 = vcmp.eq.s32.totalorder %v2078, 1
      %vm2115 = vcmp.eq.s32.totalorder %v2079, 1
      %vm2116 = vcmp.eq.s32.totalorder %v2080, 1
      %vm2117 = vcmp.eq.s32.totalorder %v2081, 1
      %vm2118 = vcmp.eq.s32.totalorder %v2082, 1
      %vm2119 = vcmp.eq.s32.totalorder %v2083, 1
      %vm2120 = vcmp.eq.s32.totalorder %v2084, 1
      %vm2121 = vcmp.eq.s32.totalorder %v2085, 1
      %vm2122 = vcmp.eq.s32.totalorder %v2086, 1
      %vm2123 = vcmp.eq.s32.totalorder %v2087, 1
      %vm2124 = vcmp.eq.s32.totalorder %v2088, 1
      %vm2125 = vcmp.eq.s32.totalorder %v2089, 1
      %vm2126 = vcmp.eq.s32.totalorder %v2090, 1
      %vm2127 = vcmp.eq.s32.totalorder %v2091, 1
      %vm2128 = vcmp.eq.s32.totalorder %v2092, 1
      %vm2129 = vcmp.eq.s32.totalorder %v2093, 1
      %vm2130 = vcmp.eq.s32.totalorder %v2094, 1
      %vm2131 = vcmp.eq.s32.totalorder %v2095, 1
      %vm2132 = vcmp.eq.s32.totalorder %v2096, 1
      %vm2133 = vcmp.eq.s32.totalorder %v2097, 1
      %vm2134 = vcmp.eq.s32.totalorder %v2098, 1
      %vm2135 = vcmp.eq.s32.totalorder %v2099, 1
      %vm2136 = vcmp.eq.s32.totalorder %v2100, 1
      %v2137 = vsel %vm2101, 0.0, %v2028
      %v2138 = vsel %vm2102, 0.0, %v1923
      %v2139 = vsel %vm2103, 0.0, %v1925
      %v2140 = vsel %vm2104, 0.0, %v1927
      %v2141 = vsel %vm2105, 0.0, %v1929
      %v2142 = vsel %vm2106, 0.0, %v1931
      %v2143 = vsel %vm2107, 0.0, %v1933
      %v2144 = vsel %vm2108, 0.0, %v1935
      %v2145 = vsel %vm2109, 0.0, %v1937
      %v2146 = vsel %vm2110, 0.0, %v1939
      %v2147 = vsel %vm2111, 0.0, %v1941
      %v2148 = vsel %vm2112, 0.0, %v1943
      %v2149 = vsel %vm2113, 0.0, %v1945
      %v2150 = vsel %vm2114, 0.0, %v1947
      %v2151 = vsel %vm2115, 0.0, %v1949
      %v2152 = vsel %vm2116, 0.0, %v1951
      %v2153 = vsel %vm2117, 0.0, %v1953
      %v2154 = vsel %vm2118, 0.0, %v1955
      %v2155 = vsel %vm2119, 0.0, %v1957
      %v2156 = vsel %vm2120, 0.0, %v1959
      %v2157 = vsel %vm2121, 0.0, %v1961
      %v2158 = vsel %vm2122, 0.0, %v1963
      %v2159 = vsel %vm2123, 0.0, %v1965
      %v2160 = vsel %vm2124, 0.0, %v1967
      %v2161 = vsel %vm2125, 0.0, %v1969
      %v2162 = vsel %vm2126, 0.0, %v1971
      %v2163 = vsel %vm2127, 0.0, %v1973
      %v2164 = vsel %vm2128, 0.0, %v1975
      %v2165 = vsel %vm2129, 0.0, %v1977
      %v2166 = vsel %vm2130, 0.0, %v1979
      %v2167 = vsel %vm2131, 0.0, %v1981
      %v2168 = vsel %vm2132, 0.0, %v1983
      %v2169 = vsel %vm2133, 0.0, %v1985
      %v2170 = vsel %vm2134, 0.0, %v1987
      %v2171 = vsel %vm2135, 0.0, %v1989
      %v2172 = vsel %vm2136, 0.0, %v1991
      %v2173 = vld [vmem:[%s5] sm:$0xff]
      %v2174 = vld [vmem:[%s5 + $0x8] sm:$0xff]
      %v2175 = vld [vmem:[%s5 + $0x10] sm:$0xff]
      %v2176 = vld [vmem:[%s5 + $0x18] sm:$0xff]
      %v2177 = vld [vmem:[%s5 + $0x20] sm:$0xf]
      %v2178 = vld [vmem:[%s6] sm:$0x1]
      %2211 = vrot.lane.b32.xlu0 %v2137, 124
      %v2212 = vpop.permute.xlu0 %2211
      %2213 = vrot.lane.b32.xlu0 %v2138, 124
      %v2214 = vpop.permute.xlu0 %2213
      %2215 = vrot.lane.b32.xlu0 %v2139, 124
      %v2216 = vpop.permute.xlu0 %2215
      %2217 = vrot.lane.b32.xlu0 %v2140, 124
      %v2218 = vpop.permute.xlu0 %2217
      %2219 = vrot.lane.b32.xlu0 %v2141, 124
      %v2220 = vpop.permute.xlu0 %2219
      %2221 = vrot.lane.b32.xlu0 %v2142, 124
      %v2222 = vpop.permute.xlu0 %2221
      %2223 = vrot.lane.b32.xlu0 %v2143, 124
      %v2224 = vpop.permute.xlu0 %2223
      %2225 = vrot.lane.b32.xlu0 %v2144, 124
      %v2226 = vpop.permute.xlu0 %2225
      %2227 = vrot.lane.b32.xlu0 %v2145, 124
      %v2228 = vpop.permute.xlu0 %2227
      %2229 = vrot.lane.b32.xlu0 %v2146, 124
      %v2230 = vpop.permute.xlu0 %2229
      %2231 = vrot.lane.b32.xlu0 %v2147, 124
      %v2232 = vpop.permute.xlu0 %2231
      %2233 = vrot.lane.b32.xlu0 %v2148, 124
      %v2234 = vpop.permute.xlu0 %2233
      %2235 = vrot.lane.b32.xlu0 %v2149, 124
      %v2236 = vpop.permute.xlu0 %2235
      %2237 = vrot.lane.b32.xlu0 %v2150, 124
      %v2238 = vpop.permute.xlu0 %2237
      %2239 = vrot.lane.b32.xlu0 %v2151, 124
      %v2240 = vpop.permute.xlu0 %2239
      %2241 = vrot.lane.b32.xlu0 %v2152, 124
      %v2242 = vpop.permute.xlu0 %2241
      %2243 = vrot.lane.b32.xlu0 %v2153, 124
      %v2244 = vpop.permute.xlu0 %2243
      %2245 = vrot.lane.b32.xlu0 %v2154, 124
      %v2246 = vpop.permute.xlu0 %2245
      %2247 = vrot.lane.b32.xlu0 %v2155, 124
      %v2248 = vpop.permute.xlu0 %2247
      %2249 = vrot.lane.b32.xlu0 %v2156, 124
      %v2250 = vpop.permute.xlu0 %2249
      %2251 = vrot.lane.b32.xlu0 %v2157, 124
      %v2252 = vpop.permute.xlu0 %2251
      %2253 = vrot.lane.b32.xlu0 %v2158, 124
      %v2254 = vpop.permute.xlu0 %2253
      %2255 = vrot.lane.b32.xlu0 %v2159, 124
      %v2256 = vpop.permute.xlu0 %2255
      %2257 = vrot.lane.b32.xlu0 %v2160, 124
      %v2258 = vpop.permute.xlu0 %2257
      %2259 = vrot.lane.b32.xlu0 %v2161, 124
      %v2260 = vpop.permute.xlu0 %2259
      %2261 = vrot.lane.b32.xlu0 %v2162, 124
      %v2262 = vpop.permute.xlu0 %2261
      %2263 = vrot.lane.b32.xlu0 %v2163, 124
      %v2264 = vpop.permute.xlu0 %2263
      %2265 = vrot.lane.b32.xlu0 %v2164, 124
      %v2266 = vpop.permute.xlu0 %2265
      %2267 = vrot.lane.b32.xlu0 %v2165, 124
      %v2268 = vpop.permute.xlu0 %2267
      %2269 = vrot.lane.b32.xlu0 %v2166, 124
      %v2270 = vpop.permute.xlu0 %2269
      %2271 = vrot.lane.b32.xlu0 %v2167, 124
      %v2272 = vpop.permute.xlu0 %2271
      %2273 = vrot.lane.b32.xlu0 %v2168, 124
      %v2274 = vpop.permute.xlu0 %2273
      %2307 = vrot.lane.b32.xlu0 %v1091, 124
      %v2308 = vpop.permute.xlu0 %2307
      %2309 = vrot.lane.b32.xlu0 %v1092, 124
      %v2310 = vpop.permute.xlu0 %2309
      %2311 = vrot.lane.b32.xlu0 %v1093, 124
      %v2312 = vpop.permute.xlu0 %2311
      %2313 = vrot.lane.b32.xlu0 %v1094, 124
      %v2314 = vpop.permute.xlu0 %2313
      %2315 = vrot.lane.b32.xlu0 %v1095, 124
      %v2316 = vpop.permute.xlu0 %2315
      %2317 = vrot.lane.b32.xlu0 %v1096, 124
      %v2318 = vpop.permute.xlu0 %2317
      %2319 = vrot.lane.b32.xlu0 %v1097, 124
      %v2320 = vpop.permute.xlu0 %2319
      %2321 = vrot.lane.b32.xlu0 %v1098, 124
      %v2322 = vpop.permute.xlu0 %2321
      %2323 = vrot.lane.b32.xlu0 %v1099, 124
      %v2324 = vpop.permute.xlu0 %2323
      %2325 = vrot.lane.b32.xlu0 %v1100, 124
      %v2326 = vpop.permute.xlu0 %2325
      %2327 = vrot.lane.b32.xlu0 %v1101, 124
      %v2328 = vpop.permute.xlu0 %2327
      %2329 = vrot.lane.b32.xlu0 %v1102, 124
      %v2330 = vpop.permute.xlu0 %2329
      %2331 = vrot.lane.b32.xlu0 %v1103, 124
      %v2332 = vpop.permute.xlu0 %2331
      %2333 = vrot.lane.b32.xlu0 %v1104, 124
      %v2334 = vpop.permute.xlu0 %2333
      %2335 = vrot.lane.b32.xlu0 %v1105, 124
      %v2336 = vpop.permute.xlu0 %2335
      %2337 = vrot.lane.b32.xlu0 %v1106, 124
      %v2338 = vpop.permute.xlu0 %2337
      %2339 = vrot.lane.b32.xlu0 %v1107, 124
      %v2340 = vpop.permute.xlu0 %2339
      %2341 = vrot.lane.b32.xlu0 %v1108, 124
      %v2342 = vpop.permute.xlu0 %2341
      %2343 = vrot.lane.b32.xlu0 %v1109, 124
      %v2344 = vpop.permute.xlu0 %2343
      %2345 = vrot.lane.b32.xlu0 %v1110, 124
      %v2346 = vpop.permute.xlu0 %2345
      %2347 = vrot.lane.b32.xlu0 %v1111, 124
      %v2348 = vpop.permute.xlu0 %2347
      %2349 = vrot.lane.b32.xlu0 %v1112, 124
      %v2350 = vpop.permute.xlu0 %2349
      %2351 = vrot.lane.b32.xlu0 %v1113, 124
      %v2352 = vpop.permute.xlu0 %2351
      %2353 = vrot.lane.b32.xlu0 %v1114, 124
      %v2354 = vpop.permute.xlu0 %2353
      %2355 = vrot.lane.b32.xlu0 %v1115, 124
      %v2356 = vpop.permute.xlu0 %2355
      %2357 = vrot.lane.b32.xlu0 %v1116, 124
      %v2358 = vpop.permute.xlu0 %2357
      %2359 = vrot.lane.b32.xlu0 %v1117, 124
      %v2360 = vpop.permute.xlu0 %2359
      %2361 = vrot.lane.b32.xlu0 %v1118, 124
      %v2362 = vpop.permute.xlu0 %2361
      %2363 = vrot.lane.b32.xlu0 %v1119, 124
      %v2364 = vpop.permute.xlu0 %2363
      %2365 = vrot.lane.b32.xlu0 %v1120, 124
      %v2366 = vpop.permute.xlu0 %2365
      %2367 = vrot.lane.b32.xlu0 %v1121, 124
      %v2368 = vpop.permute.xlu0 %2367
      %2369 = vrot.lane.b32.xlu0 %v1122, 124
      %v2370 = vpop.permute.xlu0 %2369
      %2405 = vrot.lane.b32.xlu0 %v2139, 12
      %v2406 = vpop.permute.xlu0 %2405
      %2407 = vrot.lane.b32.xlu0 %v2140, 12
      %v2408 = vpop.permute.xlu0 %2407
      %2409 = vrot.lane.b32.xlu0 %v2141, 12
      %v2410 = vpop.permute.xlu0 %2409
      %2411 = vrot.lane.b32.xlu0 %v2142, 12
      %v2412 = vpop.permute.xlu0 %2411
      %2413 = vrot.lane.b32.xlu0 %v2143, 12
      %v2414 = vpop.permute.xlu0 %2413
      %2415 = vrot.lane.b32.xlu0 %v2144, 12
      %v2416 = vpop.permute.xlu0 %2415
      %2417 = vrot.lane.b32.xlu0 %v2145, 12
      %v2418 = vpop.permute.xlu0 %2417
      %2419 = vrot.lane.b32.xlu0 %v2146, 12
      %v2420 = vpop.permute.xlu0 %2419
      %2421 = vrot.lane.b32.xlu0 %v2147, 12
      %v2422 = vpop.permute.xlu0 %2421
      %2423 = vrot.lane.b32.xlu0 %v2148, 12
      %v2424 = vpop.permute.xlu0 %2423
      %2425 = vrot.lane.b32.xlu0 %v2149, 12
      %v2426 = vpop.permute.xlu0 %2425
      %2427 = vrot.lane.b32.xlu0 %v2150, 12
      %v2428 = vpop.permute.xlu0 %2427
      %2429 = vrot.lane.b32.xlu0 %v2151, 12
      %v2430 = vpop.permute.xlu0 %2429
      %2431 = vrot.lane.b32.xlu0 %v2152, 12
      %v2432 = vpop.permute.xlu0 %2431
      %2433 = vrot.lane.b32.xlu0 %v2153, 12
      %v2434 = vpop.permute.xlu0 %2433
      %2435 = vrot.lane.b32.xlu0 %v2154, 12
      %v2436 = vpop.permute.xlu0 %2435
      %2437 = vrot.lane.b32.xlu0 %v2155, 12
      %v2438 = vpop.permute.xlu0 %2437
      %2439 = vrot.lane.b32.xlu0 %v2156, 12
      %v2440 = vpop.permute.xlu0 %2439
      %2441 = vrot.lane.b32.xlu0 %v2157, 12
      %v2442 = vpop.permute.xlu0 %2441
      %2443 = vrot.lane.b32.xlu0 %v2158, 12
      %v2444 = vpop.permute.xlu0 %2443
      %2445 = vrot.lane.b32.xlu0 %v2159, 12
      %v2446 = vpop.permute.xlu0 %2445
      %2447 = vrot.lane.b32.xlu0 %v2160, 12
      %v2448 = vpop.permute.xlu0 %2447
      %2449 = vrot.lane.b32.xlu0 %v2161, 12
      %v2450 = vpop.permute.xlu0 %2449
      %2451 = vrot.lane.b32.xlu0 %v2162, 12
      %v2452 = vpop.permute.xlu0 %2451
      %2453 = vrot.lane.b32.xlu0 %v2163, 12
      %v2454 = vpop.permute.xlu0 %2453
      %2455 = vrot.lane.b32.xlu0 %v2164, 12
      %v2456 = vpop.permute.xlu0 %2455
      %2457 = vrot.lane.b32.xlu0 %v2165, 12
      %v2458 = vpop.permute.xlu0 %2457
      %2459 = vrot.lane.b32.xlu0 %v2166, 12
      %v2460 = vpop.permute.xlu0 %2459
      %2461 = vrot.lane.b32.xlu0 %v2167, 12
      %v2462 = vpop.permute.xlu0 %2461
      %2463 = vrot.lane.b32.xlu0 %v2168, 12
      %v2464 = vpop.permute.xlu0 %2463
      %2465 = vrot.lane.b32.xlu0 %v2169, 12
      %v2466 = vpop.permute.xlu0 %2465
      %2467 = vrot.lane.b32.xlu0 %v2170, 12
      %v2468 = vpop.permute.xlu0 %2467
      %2501 = vrot.lane.b32.xlu0 %v1093, 16
      %v2502 = vpop.permute.xlu0 %2501
      %2503 = vrot.lane.b32.xlu0 %v1094, 16
      %v2504 = vpop.permute.xlu0 %2503
      %2505 = vrot.lane.b32.xlu0 %v1095, 16
      %v2506 = vpop.permute.xlu0 %2505
      %2507 = vrot.lane.b32.xlu0 %v1096, 16
      %v2508 = vpop.permute.xlu0 %2507
      %2509 = vrot.lane.b32.xlu0 %v1097, 16
      %v2510 = vpop.permute.xlu0 %2509
      %2511 = vrot.lane.b32.xlu0 %v1098, 16
      %v2512 = vpop.permute.xlu0 %2511
      %2513 = vrot.lane.b32.xlu0 %v1099, 16
      %v2514 = vpop.permute.xlu0 %2513
      %2515 = vrot.lane.b32.xlu0 %v1100, 16
      %v2516 = vpop.permute.xlu0 %2515
      %2517 = vrot.lane.b32.xlu0 %v1101, 16
      %v2518 = vpop.permute.xlu0 %2517
      %2519 = vrot.lane.b32.xlu0 %v1102, 16
      %v2520 = vpop.permute.xlu0 %2519
      %2521 = vrot.lane.b32.xlu0 %v1103, 16
      %v2522 = vpop.permute.xlu0 %2521
      %2523 = vrot.lane.b32.xlu0 %v1104, 16
      %v2524 = vpop.permute.xlu0 %2523
      %2525 = vrot.lane.b32.xlu0 %v1105, 16
      %v2526 = vpop.permute.xlu0 %2525
      %2527 = vrot.lane.b32.xlu0 %v1106, 16
      %v2528 = vpop.permute.xlu0 %2527
      %2529 = vrot.lane.b32.xlu0 %v1107, 16
      %v2530 = vpop.permute.xlu0 %2529
      %2531 = vrot.lane.b32.xlu0 %v1108, 16
      %v2532 = vpop.permute.xlu0 %2531
      %2533 = vrot.lane.b32.xlu0 %v1109, 16
      %v2534 = vpop.permute.xlu0 %2533
      %2535 = vrot.lane.b32.xlu0 %v1110, 16
      %v2536 = vpop.permute.xlu0 %2535
      %2537 = vrot.lane.b32.xlu0 %v1111, 16
      %v2538 = vpop.permute.xlu0 %2537
      %2539 = vrot.lane.b32.xlu0 %v1112, 16
      %v2540 = vpop.permute.xlu0 %2539
      %2541 = vrot.lane.b32.xlu0 %v1113, 16
      %v2542 = vpop.permute.xlu0 %2541
      %2543 = vrot.lane.b32.xlu0 %v1114, 16
      %v2544 = vpop.permute.xlu0 %2543
      %2545 = vrot.lane.b32.xlu0 %v1115, 16
      %v2546 = vpop.permute.xlu0 %2545
      %2547 = vrot.lane.b32.xlu0 %v1116, 16
      %v2548 = vpop.permute.xlu0 %2547
      %2549 = vrot.lane.b32.xlu0 %v1117, 16
      %v2550 = vpop.permute.xlu0 %2549
      %2551 = vrot.lane.b32.xlu0 %v1118, 16
      %v2552 = vpop.permute.xlu0 %2551
      %2553 = vrot.lane.b32.xlu0 %v1119, 16
      %v2554 = vpop.permute.xlu0 %2553
      %2555 = vrot.lane.b32.xlu0 %v1120, 16
      %v2556 = vpop.permute.xlu0 %2555
      %2557 = vrot.lane.b32.xlu0 %v1121, 16
      %v2558 = vpop.permute.xlu0 %2557
      %2559 = vrot.lane.b32.xlu0 %v1122, 16
      %v2560 = vpop.permute.xlu0 %2559
      %2561 = vrot.lane.b32.xlu0 %v1123, 16
      %v2562 = vpop.permute.xlu0 %2561
      %2563 = vrot.lane.b32.xlu0 %v1124, 16
      %v2564 = vpop.permute.xlu0 %2563
      %2597 = vrot.lane.b32.xlu0 %v1093, 12
      %v2598 = vpop.permute.xlu0 %2597
      %2599 = vrot.lane.b32.xlu0 %v1094, 12
      %v2600 = vpop.permute.xlu0 %2599
      %2601 = vrot.lane.b32.xlu0 %v1095, 12
      %v2602 = vpop.permute.xlu0 %2601
      %2603 = vrot.lane.b32.xlu0 %v1096, 12
      %v2604 = vpop.permute.xlu0 %2603
      %2605 = vrot.lane.b32.xlu0 %v1097, 12
      %v2606 = vpop.permute.xlu0 %2605
      %2607 = vrot.lane.b32.xlu0 %v1098, 12
      %v2608 = vpop.permute.xlu0 %2607
      %2609 = vrot.lane.b32.xlu0 %v1099, 12
      %v2610 = vpop.permute.xlu0 %2609
      %2611 = vrot.lane.b32.xlu0 %v1100, 12
      %v2612 = vpop.permute.xlu0 %2611
      %2613 = vrot.lane.b32.xlu0 %v1101, 12
      %v2614 = vpop.permute.xlu0 %2613
      %2615 = vrot.lane.b32.xlu0 %v1102, 12
      %v2616 = vpop.permute.xlu0 %2615
      %2617 = vrot.lane.b32.xlu0 %v1103, 12
      %v2618 = vpop.permute.xlu0 %2617
      %2619 = vrot.lane.b32.xlu0 %v1104, 12
      %v2620 = vpop.permute.xlu0 %2619
      %2621 = vrot.lane.b32.xlu0 %v1105, 12
      %v2622 = vpop.permute.xlu0 %2621
      %2623 = vrot.lane.b32.xlu0 %v1106, 12
      %v2624 = vpop.permute.xlu0 %2623
      %2625 = vrot.lane.b32.xlu0 %v1107, 12
      %v2626 = vpop.permute.xlu0 %2625
      %2627 = vrot.lane.b32.xlu0 %v1108, 12
      %v2628 = vpop.permute.xlu0 %2627
      %2629 = vrot.lane.b32.xlu0 %v1109, 12
      %v2630 = vpop.permute.xlu0 %2629
      %2631 = vrot.lane.b32.xlu0 %v1110, 12
      %v2632 = vpop.permute.xlu0 %2631
      %2633 = vrot.lane.b32.xlu0 %v1111, 12
      %v2634 = vpop.permute.xlu0 %2633
      %2635 = vrot.lane.b32.xlu0 %v1112, 12
      %v2636 = vpop.permute.xlu0 %2635
      %2637 = vrot.lane.b32.xlu0 %v1113, 12
      %v2638 = vpop.permute.xlu0 %2637
      %2639 = vrot.lane.b32.xlu0 %v1114, 12
      %v2640 = vpop.permute.xlu0 %2639
      %2641 = vrot.lane.b32.xlu0 %v1115, 12
      %v2642 = vpop.permute.xlu0 %2641
      %2643 = vrot.lane.b32.xlu0 %v1116, 12
      %v2644 = vpop.permute.xlu0 %2643
      %2645 = vrot.lane.b32.xlu0 %v1117, 12
      %v2646 = vpop.permute.xlu0 %2645
      %2647 = vrot.lane.b32.xlu0 %v1118, 12
      %v2648 = vpop.permute.xlu0 %2647
      %2649 = vrot.lane.b32.xlu0 %v1119, 12
      %v2650 = vpop.permute.xlu0 %2649
      %2651 = vrot.lane.b32.xlu0 %v1120, 12
      %v2652 = vpop.permute.xlu0 %2651
      %2653 = vrot.lane.b32.xlu0 %v1121, 12
      %v2654 = vpop.permute.xlu0 %2653
      %2655 = vrot.lane.b32.xlu0 %v1122, 12
      %v2656 = vpop.permute.xlu0 %2655
      %2657 = vrot.lane.b32.xlu0 %v1123, 12
      %v2658 = vpop.permute.xlu0 %2657
      %2659 = vrot.lane.b32.xlu0 %v1124, 12
      %v2660 = vpop.permute.xlu0 %2659
      %2693 = vrot.lane.b32.xlu0 %v2139, 20
      %v2694 = vpop.permute.xlu0 %2693
      %2695 = vrot.lane.b32.xlu0 %v2140, 20
      %v2696 = vpop.permute.xlu0 %2695
      %2697 = vrot.lane.b32.xlu0 %v2141, 20
      %v2698 = vpop.permute.xlu0 %2697
      %2699 = vrot.lane.b32.xlu0 %v2142, 20
      %v2700 = vpop.permute.xlu0 %2699
      %2701 = vrot.lane.b32.xlu0 %v2143, 20
      %v2702 = vpop.permute.xlu0 %2701
      %2703 = vrot.lane.b32.xlu0 %v2144, 20
      %v2704 = vpop.permute.xlu0 %2703
      %2705 = vrot.lane.b32.xlu0 %v2145, 20
      %v2706 = vpop.permute.xlu0 %2705
      %2707 = vrot.lane.b32.xlu0 %v2146, 20
      %v2708 = vpop.permute.xlu0 %2707
      %2709 = vrot.lane.b32.xlu0 %v2147, 20
      %v2710 = vpop.permute.xlu0 %2709
      %2711 = vrot.lane.b32.xlu0 %v2148, 20
      %v2712 = vpop.permute.xlu0 %2711
      %2713 = vrot.lane.b32.xlu0 %v2149, 20
      %v2714 = vpop.permute.xlu0 %2713
      %2715 = vrot.lane.b32.xlu0 %v2150, 20
      %v2716 = vpop.permute.xlu0 %2715
      %2717 = vrot.lane.b32.xlu0 %v2151, 20
      %v2718 = vpop.permute.xlu0 %2717
      %2719 = vrot.lane.b32.xlu0 %v2152, 20
      %v2720 = vpop.permute.xlu0 %2719
      %2721 = vrot.lane.b32.xlu0 %v2153, 20
      %v2722 = vpop.permute.xlu0 %2721
      %2723 = vrot.lane.b32.xlu0 %v2154, 20
      %v2724 = vpop.permute.xlu0 %2723
      %2725 = vrot.lane.b32.xlu0 %v2155, 20
      %v2726 = vpop.permute.xlu0 %2725
      %2727 = vrot.lane.b32.xlu0 %v2156, 20
      %v2728 = vpop.permute.xlu0 %2727
      %2729 = vrot.lane.b32.xlu0 %v2157, 20
      %v2730 = vpop.permute.xlu0 %2729
      %2731 = vrot.lane.b32.xlu0 %v2158, 20
      %v2732 = vpop.permute.xlu0 %2731
      %2733 = vrot.lane.b32.xlu0 %v2159, 20
      %v2734 = vpop.permute.xlu0 %2733
      %2735 = vrot.lane.b32.xlu0 %v2160, 20
      %v2736 = vpop.permute.xlu0 %2735
      %2737 = vrot.lane.b32.xlu0 %v2161, 20
      %v2738 = vpop.permute.xlu0 %2737
      %2739 = vrot.lane.b32.xlu0 %v2162, 20
      %v2740 = vpop.permute.xlu0 %2739
      %2741 = vrot.lane.b32.xlu0 %v2163, 20
      %v2742 = vpop.permute.xlu0 %2741
      %2743 = vrot.lane.b32.xlu0 %v2164, 20
      %v2744 = vpop.permute.xlu0 %2743
      %2745 = vrot.lane.b32.xlu0 %v2165, 20
      %v2746 = vpop.permute.xlu0 %2745
      %2747 = vrot.lane.b32.xlu0 %v2166, 20
      %v2748 = vpop.permute.xlu0 %2747
      %2749 = vrot.lane.b32.xlu0 %v2167, 20
      %v2750 = vpop.permute.xlu0 %2749
      %2751 = vrot.lane.b32.xlu0 %v2168, 20
      %v2752 = vpop.permute.xlu0 %2751
      %2753 = vrot.lane.b32.xlu0 %v2169, 20
      %v2754 = vpop.permute.xlu0 %2753
      %2755 = vrot.lane.b32.xlu0 %v2170, 20
      %v2756 = vpop.permute.xlu0 %2755
      %2789 = vrot.lane.b32.xlu0 %v1093, 24
      %v2790 = vpop.permute.xlu0 %2789
      %2791 = vrot.lane.b32.xlu0 %v1094, 24
      %v2792 = vpop.permute.xlu0 %2791
      %2793 = vrot.lane.b32.xlu0 %v1095, 24
      %v2794 = vpop.permute.xlu0 %2793
      %2795 = vrot.lane.b32.xlu0 %v1096, 24
      %v2796 = vpop.permute.xlu0 %2795
      %2797 = vrot.lane.b32.xlu0 %v1097, 24
      %v2798 = vpop.permute.xlu0 %2797
      %2799 = vrot.lane.b32.xlu0 %v1098, 24
      %v2800 = vpop.permute.xlu0 %2799
      %2801 = vrot.lane.b32.xlu0 %v1099, 24
      %v2802 = vpop.permute.xlu0 %2801
      %2803 = vrot.lane.b32.xlu0 %v1100, 24
      %v2804 = vpop.permute.xlu0 %2803
      %2805 = vrot.lane.b32.xlu0 %v1101, 24
      %v2806 = vpop.permute.xlu0 %2805
      %2807 = vrot.lane.b32.xlu0 %v1102, 24
      %v2808 = vpop.permute.xlu0 %2807
      %2809 = vrot.lane.b32.xlu0 %v1103, 24
      %v2810 = vpop.permute.xlu0 %2809
      %2811 = vrot.lane.b32.xlu0 %v1104, 24
      %v2812 = vpop.permute.xlu0 %2811
      %2813 = vrot.lane.b32.xlu0 %v1105, 24
      %v2814 = vpop.permute.xlu0 %2813
      %2815 = vrot.lane.b32.xlu0 %v1106, 24
      %v2816 = vpop.permute.xlu0 %2815
      %2817 = vrot.lane.b32.xlu0 %v1107, 24
      %v2818 = vpop.permute.xlu0 %2817
      %2819 = vrot.lane.b32.xlu0 %v1108, 24
      %v2820 = vpop.permute.xlu0 %2819
      %2821 = vrot.lane.b32.xlu0 %v1109, 24
      %v2822 = vpop.permute.xlu0 %2821
      %2823 = vrot.lane.b32.xlu0 %v1110, 24
      %v2824 = vpop.permute.xlu0 %2823
      %2825 = vrot.lane.b32.xlu0 %v1111, 24
      %v2826 = vpop.permute.xlu0 %2825
      %2827 = vrot.lane.b32.xlu0 %v1112, 24
      %v2828 = vpop.permute.xlu0 %2827
      %2829 = vrot.lane.b32.xlu0 %v1113, 24
      %v2830 = vpop.permute.xlu0 %2829
      %2831 = vrot.lane.b32.xlu0 %v1114, 24
      %v2832 = vpop.permute.xlu0 %2831
      %2833 = vrot.lane.b32.xlu0 %v1115, 24
      %v2834 = vpop.permute.xlu0 %2833
      %2835 = vrot.lane.b32.xlu0 %v1116, 24
      %v2836 = vpop.permute.xlu0 %2835
      %2837 = vrot.lane.b32.xlu0 %v1117, 24
      %v2838 = vpop.permute.xlu0 %2837
      %2839 = vrot.lane.b32.xlu0 %v1118, 24
      %v2840 = vpop.permute.xlu0 %2839
      %2841 = vrot.lane.b32.xlu0 %v1119, 24
      %v2842 = vpop.permute.xlu0 %2841
      %2843 = vrot.lane.b32.xlu0 %v1120, 24
      %v2844 = vpop.permute.xlu0 %2843
      %2845 = vrot.lane.b32.xlu0 %v1121, 24
      %v2846 = vpop.permute.xlu0 %2845
      %2847 = vrot.lane.b32.xlu0 %v1122, 24
      %v2848 = vpop.permute.xlu0 %2847
      %2849 = vrot.lane.b32.xlu0 %v1123, 24
      %v2850 = vpop.permute.xlu0 %2849
      %2851 = vrot.lane.b32.xlu0 %v1124, 24
      %v2852 = vpop.permute.xlu0 %2851
      %2885 = vrot.lane.b32.xlu0 %v1093, 20
      %v2886 = vpop.permute.xlu0 %2885
      %2887 = vrot.lane.b32.xlu0 %v1094, 20
      %v2888 = vpop.permute.xlu0 %2887
      %2889 = vrot.lane.b32.xlu0 %v1095, 20
      %v2890 = vpop.permute.xlu0 %2889
      %2891 = vrot.lane.b32.xlu0 %v1096, 20
      %v2892 = vpop.permute.xlu0 %2891
      %2893 = vrot.lane.b32.xlu0 %v1097, 20
      %v2894 = vpop.permute.xlu0 %2893
      %2895 = vrot.lane.b32.xlu0 %v1098, 20
      %v2896 = vpop.permute.xlu0 %2895
      %2897 = vrot.lane.b32.xlu0 %v1099, 20
      %v2898 = vpop.permute.xlu0 %2897
      %2899 = vrot.lane.b32.xlu0 %v1100, 20
      %v2900 = vpop.permute.xlu0 %2899
      %2901 = vrot.lane.b32.xlu0 %v1101, 20
      %v2902 = vpop.permute.xlu0 %2901
      %2903 = vrot.lane.b32.xlu0 %v1102, 20
      %v2904 = vpop.permute.xlu0 %2903
      %2905 = vrot.lane.b32.xlu0 %v1103, 20
      %v2906 = vpop.permute.xlu0 %2905
      %2907 = vrot.lane.b32.xlu0 %v1104, 20
      %v2908 = vpop.permute.xlu0 %2907
      %2909 = vrot.lane.b32.xlu0 %v1105, 20
      %v2910 = vpop.permute.xlu0 %2909
      %2911 = vrot.lane.b32.xlu0 %v1106, 20
      %v2912 = vpop.permute.xlu0 %2911
      %2913 = vrot.lane.b32.xlu0 %v1107, 20
      %v2914 = vpop.permute.xlu0 %2913
      %2915 = vrot.lane.b32.xlu0 %v1108, 20
      %v2916 = vpop.permute.xlu0 %2915
      %2917 = vrot.lane.b32.xlu0 %v1109, 20
      %v2918 = vpop.permute.xlu0 %2917
      %2919 = vrot.lane.b32.xlu0 %v1110, 20
      %v2920 = vpop.permute.xlu0 %2919
      %2921 = vrot.lane.b32.xlu0 %v1111, 20
      %v2922 = vpop.permute.xlu0 %2921
      %2923 = vrot.lane.b32.xlu0 %v1112, 20
      %v2924 = vpop.permute.xlu0 %2923
      %2925 = vrot.lane.b32.xlu0 %v1113, 20
      %v2926 = vpop.permute.xlu0 %2925
      %2927 = vrot.lane.b32.xlu0 %v1114, 20
      %v2928 = vpop.permute.xlu0 %2927
      %2929 = vrot.lane.b32.xlu0 %v1115, 20
      %v2930 = vpop.permute.xlu0 %2929
      %2931 = vrot.lane.b32.xlu0 %v1116, 20
      %v2932 = vpop.permute.xlu0 %2931
      %2933 = vrot.lane.b32.xlu0 %v1117, 20
      %v2934 = vpop.permute.xlu0 %2933
      %2935 = vrot.lane.b32.xlu0 %v1118, 20
      %v2936 = vpop.permute.xlu0 %2935
      %2937 = vrot.lane.b32.xlu0 %v1119, 20
      %v2938 = vpop.permute.xlu0 %2937
      %2939 = vrot.lane.b32.xlu0 %v1120, 20
      %v2940 = vpop.permute.xlu0 %2939
      %2941 = vrot.lane.b32.xlu0 %v1121, 20
      %v2942 = vpop.permute.xlu0 %2941
      %2943 = vrot.lane.b32.xlu0 %v1122, 20
      %v2944 = vpop.permute.xlu0 %2943
      %2945 = vrot.lane.b32.xlu0 %v1123, 20
      %v2946 = vpop.permute.xlu0 %2945
      %2947 = vrot.lane.b32.xlu0 %v1124, 20
      %v2948 = vpop.permute.xlu0 %2947
      %v2981 = vsel %vm482, %v2212, %v1091
      %v2982 = vsel %vm482, %v2214, %v1092
      %v2983 = vsel %vm482, %v2216, %v1093
      %v2984 = vsel %vm482, %v2218, %v1094
      %v2985 = vsel %vm482, %v2220, %v1095
      %v2986 = vsel %vm482, %v2222, %v1096
      %v2987 = vsel %vm482, %v2224, %v1097
      %v2988 = vsel %vm482, %v2226, %v1098
      %v2989 = vsel %vm482, %v2228, %v1099
      %v2990 = vsel %vm482, %v2230, %v1100
      %v2991 = vsel %vm482, %v2232, %v1101
      %v2992 = vsel %vm482, %v2234, %v1102
      %v2993 = vsel %vm482, %v2236, %v1103
      %v2994 = vsel %vm482, %v2238, %v1104
      %v2995 = vsel %vm482, %v2240, %v1105
      %v2996 = vsel %vm482, %v2242, %v1106
      %v2997 = vsel %vm482, %v2244, %v1107
      %v2998 = vsel %vm482, %v2246, %v1108
      %v2999 = vsel %vm482, %v2248, %v1109
      %v3000 = vsel %vm482, %v2250, %v1110
      %v3001 = vsel %vm482, %v2252, %v1111
      %v3002 = vsel %vm482, %v2254, %v1112
      %v3003 = vsel %vm482, %v2256, %v1113
      %v3004 = vsel %vm482, %v2258, %v1114
      %v3005 = vsel %vm482, %v2260, %v1115
      %v3006 = vsel %vm482, %v2262, %v1116
      %v3007 = vsel %vm482, %v2264, %v1117
      %v3008 = vsel %vm482, %v2266, %v1118
      %v3009 = vsel %vm482, %v2268, %v1119
      %v3010 = vsel %vm482, %v2270, %v1120
      %v3011 = vsel %vm482, %v2272, %v1121
      %v3012 = vsel %vm482, %v2274, %v1122
      %vm3013 = vcmask 64512
      %v3014 = vsel %vm3013, %v2981, %v2308
      %v3015 = vsel %vm3013, %v2982, %v2310
      %v3016 = vsel %vm3013, %v2983, %v2312
      %v3017 = vsel %vm3013, %v2984, %v2314
      %v3018 = vsel %vm3013, %v2985, %v2316
      %v3019 = vsel %vm3013, %v2986, %v2318
      %v3020 = vsel %vm3013, %v2987, %v2320
      %v3021 = vsel %vm3013, %v2988, %v2322
      %v3022 = vsel %vm3013, %v2989, %v2324
      %v3023 = vsel %vm3013, %v2990, %v2326
      %v3024 = vsel %vm3013, %v2991, %v2328
      %v3025 = vsel %vm3013, %v2992, %v2330
      %v3026 = vsel %vm3013, %v2993, %v2332
      %v3027 = vsel %vm3013, %v2994, %v2334
      %v3028 = vsel %vm3013, %v2995, %v2336
      %v3029 = vsel %vm3013, %v2996, %v2338
      %v3030 = vsel %vm3013, %v2997, %v2340
      %v3031 = vsel %vm3013, %v2998, %v2342
      %v3032 = vsel %vm3013, %v2999, %v2344
      %v3033 = vsel %vm3013, %v3000, %v2346
      %v3034 = vsel %vm3013, %v3001, %v2348
      %v3035 = vsel %vm3013, %v3002, %v2350
      %v3036 = vsel %vm3013, %v3003, %v2352
      %v3037 = vsel %vm3013, %v3004, %v2354
      %v3038 = vsel %vm3013, %v3005, %v2356
      %v3039 = vsel %vm3013, %v3006, %v2358
      %v3040 = vsel %vm3013, %v3007, %v2360
      %v3041 = vsel %vm3013, %v3008, %v2362
      %v3042 = vsel %vm3013, %v3009, %v2364
      %v3043 = vsel %vm3013, %v3010, %v2366
      %v3044 = vsel %vm3013, %v3011, %v2368
      %v3045 = vsel %vm3013, %v3012, %v2370
      %vm3046 = vcmask 97280
      %v3047 = vsel %vm3046, %v3014, %v2406
      %v3048 = vsel %vm3046, %v3015, %v2408
      %v3049 = vsel %vm3046, %v3016, %v2410
      %v3050 = vsel %vm3046, %v3017, %v2412
      %v3051 = vsel %vm3046, %v3018, %v2414
      %v3052 = vsel %vm3046, %v3019, %v2416
      %v3053 = vsel %vm3046, %v3020, %v2418
      %v3054 = vsel %vm3046, %v3021, %v2420
      %v3055 = vsel %vm3046, %v3022, %v2422
      %v3056 = vsel %vm3046, %v3023, %v2424
      %v3057 = vsel %vm3046, %v3024, %v2426
      %v3058 = vsel %vm3046, %v3025, %v2428
      %v3059 = vsel %vm3046, %v3026, %v2430
      %v3060 = vsel %vm3046, %v3027, %v2432
      %v3061 = vsel %vm3046, %v3028, %v2434
      %v3062 = vsel %vm3046, %v3029, %v2436
      %v3063 = vsel %vm3046, %v3030, %v2438
      %v3064 = vsel %vm3046, %v3031, %v2440
      %v3065 = vsel %vm3046, %v3032, %v2442
      %v3066 = vsel %vm3046, %v3033, %v2444
      %v3067 = vsel %vm3046, %v3034, %v2446
      %v3068 = vsel %vm3046, %v3035, %v2448
      %v3069 = vsel %vm3046, %v3036, %v2450
      %v3070 = vsel %vm3046, %v3037, %v2452
      %v3071 = vsel %vm3046, %v3038, %v2454
      %v3072 = vsel %vm3046, %v3039, %v2456
      %v3073 = vsel %vm3046, %v3040, %v2458
      %v3074 = vsel %vm3046, %v3041, %v2460
      %v3075 = vsel %vm3046, %v3042, %v2462
      %v3076 = vsel %vm3046, %v3043, %v2464
      %v3077 = vsel %vm3046, %v3044, %v2466
      %v3078 = vsel %vm3046, %v3045, %v2468
      %vm3079 = vcmask 130048
      %v3080 = vsel %vm3079, %v3047, %v2502
      %v3081 = vsel %vm3079, %v3048, %v2504
      %v3082 = vsel %vm3079, %v3049, %v2506
      %v3083 = vsel %vm3079, %v3050, %v2508
      %v3084 = vsel %vm3079, %v3051, %v2510
      %v3085 = vsel %vm3079, %v3052, %v2512
      %v3086 = vsel %vm3079, %v3053, %v2514
      %v3087 = vsel %vm3079, %v3054, %v2516
      %v3088 = vsel %vm3079, %v3055, %v2518
      %v3089 = vsel %vm3079, %v3056, %v2520
      %v3090 = vsel %vm3079, %v3057, %v2522
      %v3091 = vsel %vm3079, %v3058, %v2524
      %v3092 = vsel %vm3079, %v3059, %v2526
      %v3093 = vsel %vm3079, %v3060, %v2528
      %v3094 = vsel %vm3079, %v3061, %v2530
      %v3095 = vsel %vm3079, %v3062, %v2532
      %v3096 = vsel %vm3079, %v3063, %v2534
      %v3097 = vsel %vm3079, %v3064, %v2536
      %v3098 = vsel %vm3079, %v3065, %v2538
      %v3099 = vsel %vm3079, %v3066, %v2540
      %v3100 = vsel %vm3079, %v3067, %v2542
      %v3101 = vsel %vm3079, %v3068, %v2544
      %v3102 = vsel %vm3079, %v3069, %v2546
      %v3103 = vsel %vm3079, %v3070, %v2548
      %v3104 = vsel %vm3079, %v3071, %v2550
      %v3105 = vsel %vm3079, %v3072, %v2552
      %v3106 = vsel %vm3079, %v3073, %v2554
      %v3107 = vsel %vm3079, %v3074, %v2556
      %v3108 = vsel %vm3079, %v3075, %v2558
      %v3109 = vsel %vm3079, %v3076, %v2560
      %v3110 = vsel %vm3079, %v3077, %v2562
      %v3111 = vsel %vm3079, %v3078, %v2564
      %vm3112 = vcmask 162816
      %v3113 = vsel %vm3112, %v3080, %v2598
      %v3114 = vsel %vm3112, %v3081, %v2600
      %v3115 = vsel %vm3112, %v3082, %v2602
      %v3116 = vsel %vm3112, %v3083, %v2604
      %v3117 = vsel %vm3112, %v3084, %v2606
      %v3118 = vsel %vm3112, %v3085, %v2608
      %v3119 = vsel %vm3112, %v3086, %v2610
      %v3120 = vsel %vm3112, %v3087, %v2612
      %v3121 = vsel %vm3112, %v3088, %v2614
      %v3122 = vsel %vm3112, %v3089, %v2616
      %v3123 = vsel %vm3112, %v3090, %v2618
      %v3124 = vsel %vm3112, %v3091, %v2620
      %v3125 = vsel %vm3112, %v3092, %v2622
      %v3126 = vsel %vm3112, %v3093, %v2624
      %v3127 = vsel %vm3112, %v3094, %v2626
      %v3128 = vsel %vm3112, %v3095, %v2628
      %v3129 = vsel %vm3112, %v3096, %v2630
      %v3130 = vsel %vm3112, %v3097, %v2632
      %v3131 = vsel %vm3112, %v3098, %v2634
      %v3132 = vsel %vm3112, %v3099, %v2636
      %v3133 = vsel %vm3112, %v3100, %v2638
      %v3134 = vsel %vm3112, %v3101, %v2640
      %v3135 = vsel %vm3112, %v3102, %v2642
      %v3136 = vsel %vm3112, %v3103, %v2644
      %v3137 = vsel %vm3112, %v3104, %v2646
      %v3138 = vsel %vm3112, %v3105, %v2648
      %v3139 = vsel %vm3112, %v3106, %v2650
      %v3140 = vsel %vm3112, %v3107, %v2652
      %v3141 = vsel %vm3112, %v3108, %v2654
      %v3142 = vsel %vm3112, %v3109, %v2656
      %v3143 = vsel %vm3112, %v3110, %v2658
      %v3144 = vsel %vm3112, %v3111, %v2660
      %vm3145 = vcmask 195584
      %v3146 = vsel %vm3145, %v3113, %v2694
      %v3147 = vsel %vm3145, %v3114, %v2696
      %v3148 = vsel %vm3145, %v3115, %v2698
      %v3149 = vsel %vm3145, %v3116, %v2700
      %v3150 = vsel %vm3145, %v3117, %v2702
      %v3151 = vsel %vm3145, %v3118, %v2704
      %v3152 = vsel %vm3145, %v3119, %v2706
      %v3153 = vsel %vm3145, %v3120, %v2708
      %v3154 = vsel %vm3145, %v3121, %v2710
      %v3155 = vsel %vm3145, %v3122, %v2712
      %v3156 = vsel %vm3145, %v3123, %v2714
      %v3157 = vsel %vm3145, %v3124, %v2716
      %v3158 = vsel %vm3145, %v3125, %v2718
      %v3159 = vsel %vm3145, %v3126, %v2720
      %v3160 = vsel %vm3145, %v3127, %v2722
      %v3161 = vsel %vm3145, %v3128, %v2724
      %v3162 = vsel %vm3145, %v3129, %v2726
      %v3163 = vsel %vm3145, %v3130, %v2728
      %v3164 = vsel %vm3145, %v3131, %v2730
      %v3165 = vsel %vm3145, %v3132, %v2732
      %v3166 = vsel %vm3145, %v3133, %v2734
      %v3167 = vsel %vm3145, %v3134, %v2736
      %v3168 = vsel %vm3145, %v3135, %v2738
      %v3169 = vsel %vm3145, %v3136, %v2740
      %v3170 = vsel %vm3145, %v3137, %v2742
      %v3171 = vsel %vm3145, %v3138, %v2744
      %v3172 = vsel %vm3145, %v3139, %v2746
      %v3173 = vsel %vm3145, %v3140, %v2748
      %v3174 = vsel %vm3145, %v3141, %v2750
      %v3175 = vsel %vm3145, %v3142, %v2752
      %v3176 = vsel %vm3145, %v3143, %v2754
      %v3177 = vsel %vm3145, %v3144, %v2756
      %vm3178 = vcmask 228352
      %v3179 = vsel %vm3178, %v3146, %v2790
      %v3180 = vsel %vm3178, %v3147, %v2792
      %v3181 = vsel %vm3178, %v3148, %v2794
      %v3182 = vsel %vm3178, %v3149, %v2796
      %v3183 = vsel %vm3178, %v3150, %v2798
      %v3184 = vsel %vm3178, %v3151, %v2800
      %v3185 = vsel %vm3178, %v3152, %v2802
      %v3186 = vsel %vm3178, %v3153, %v2804
      %v3187 = vsel %vm3178, %v3154, %v2806
      %v3188 = vsel %vm3178, %v3155, %v2808
      %v3189 = vsel %vm3178, %v3156, %v2810
      %v3190 = vsel %vm3178, %v3157, %v2812
      %v3191 = vsel %vm3178, %v3158, %v2814
      %v3192 = vsel %vm3178, %v3159, %v2816
      %v3193 = vsel %vm3178, %v3160, %v2818
      %v3194 = vsel %vm3178, %v3161, %v2820
      %v3195 = vsel %vm3178, %v3162, %v2822
      %v3196 = vsel %vm3178, %v3163, %v2824
      %v3197 = vsel %vm3178, %v3164, %v2826
      %v3198 = vsel %vm3178, %v3165, %v2828
      %v3199 = vsel %vm3178, %v3166, %v2830
      %v3200 = vsel %vm3178, %v3167, %v2832
      %v3201 = vsel %vm3178, %v3168, %v2834
      %v3202 = vsel %vm3178, %v3169, %v2836
      %v3203 = vsel %vm3178, %v3170, %v2838
      %v3204 = vsel %vm3178, %v3171, %v2840
      %v3205 = vsel %vm3178, %v3172, %v2842
      %v3206 = vsel %vm3178, %v3173, %v2844
      %v3207 = vsel %vm3178, %v3174, %v2846
      %v3208 = vsel %vm3178, %v3175, %v2848
      %v3209 = vsel %vm3178, %v3176, %v2850
      %v3210 = vsel %vm3178, %v3177, %v2852
      %vm3211 = vcmask 261120
      %v3212 = vsel %vm3211, %v3179, %v2886
      %v3213 = vsel %vm3211, %v3180, %v2888
      %v3214 = vsel %vm3211, %v3181, %v2890
      %v3215 = vsel %vm3211, %v3182, %v2892
      %v3216 = vsel %vm3211, %v3183, %v2894
      %v3217 = vsel %vm3211, %v3184, %v2896
      %v3218 = vsel %vm3211, %v3185, %v2898
      %v3219 = vsel %vm3211, %v3186, %v2900
      %v3220 = vsel %vm3211, %v3187, %v2902
      %v3221 = vsel %vm3211, %v3188, %v2904
      %v3222 = vsel %vm3211, %v3189, %v2906
      %v3223 = vsel %vm3211, %v3190, %v2908
      %v3224 = vsel %vm3211, %v3191, %v2910
      %v3225 = vsel %vm3211, %v3192, %v2912
      %v3226 = vsel %vm3211, %v3193, %v2914
      %v3227 = vsel %vm3211, %v3194, %v2916
      %v3228 = vsel %vm3211, %v3195, %v2918
      %v3229 = vsel %vm3211, %v3196, %v2920
      %v3230 = vsel %vm3211, %v3197, %v2922
      %v3231 = vsel %vm3211, %v3198, %v2924
      %v3232 = vsel %vm3211, %v3199, %v2926
      %v3233 = vsel %vm3211, %v3200, %v2928
      %v3234 = vsel %vm3211, %v3201, %v2930
      %v3235 = vsel %vm3211, %v3202, %v2932
      %v3236 = vsel %vm3211, %v3203, %v2934
      %v3237 = vsel %vm3211, %v3204, %v2936
      %v3238 = vsel %vm3211, %v3205, %v2938
      %v3239 = vsel %vm3211, %v3206, %v2940
      %v3240 = vsel %vm3211, %v3207, %v2942
      %v3241 = vsel %vm3211, %v3208, %v2944
      %v3242 = vsel %vm3211, %v3209, %v2946
      %v3243 = vsel %vm3211, %v3210, %v2948
      %v3245 = vperm.slane %v2178, 0
      %vm3247 = vcmask 293888
      %v3249 = vsel %vm3247, %v3212, 0
      %v3252 = vsel %vm3247, %v3213, 0
      %v3255 = vsel %vm3247, %v3214, 0
      %v3258 = vsel %vm3247, %v3215, 0
      %v3261 = vsel %vm3247, %v3216, 0
      %v3264 = vsel %vm3247, %v3217, 0
      %v3267 = vsel %vm3247, %v3218, 0
      %v3270 = vsel %vm3247, %v3219, 0
      %v3273 = vsel %vm3247, %v3220, 0
      %v3276 = vsel %vm3247, %v3221, 0
      %v3279 = vsel %vm3247, %v3222, 0
      %v3282 = vsel %vm3247, %v3223, 0
      %v3285 = vsel %vm3247, %v3224, 0
      %v3288 = vsel %vm3247, %v3225, 0
      %v3291 = vsel %vm3247, %v3226, 0
      %v3294 = vsel %vm3247, %v3227, 0
      %v3297 = vsel %vm3247, %v3228, 0
      %v3300 = vsel %vm3247, %v3229, 0
      %v3303 = vsel %vm3247, %v3230, 0
      %v3306 = vsel %vm3247, %v3231, 0
      %v3309 = vsel %vm3247, %v3232, 0
      %v3312 = vsel %vm3247, %v3233, 0
      %v3315 = vsel %vm3247, %v3234, 0
      %v3318 = vsel %vm3247, %v3235, 0
      %v3321 = vsel %vm3247, %v3236, 0
      %v3324 = vsel %vm3247, %v3237, 0
      %v3327 = vsel %vm3247, %v3238, 0
      %v3330 = vsel %vm3247, %v3239, 0
      %v3333 = vsel %vm3247, %v3240, 0
      %v3336 = vsel %vm3247, %v3241, 0
      %v3339 = vsel %vm3247, %v3242, 0
      %v3342 = vsel %vm3247, %v3243, 0
      %v3345 = vsel %vm579, %v2177, 0
      %3347 = vmatpush.msra.mxu0 0.0
      %3348 = vmatpush.msra.mxu0 0.0
      %3349 = vmatpush.msra.mxu0 0.0
      %3350 = vmatpush.msra.mxu0 0.0
      %3351 = vmatpush.msra.mxu0 0.0
      %3352 = vmatpush.msra.mxu0 0.0
      %3353 = vmatpush.msra.mxu0 0.0
      %3354 = vmatpush.msra.mxu0 0.0
      %3355 = vmatpush.msra.mxu0 0.0
      %3356 = vmatpush.msra.mxu0 0.0
      %3357 = vmatpush.msra.mxu0 0.0
      %3358 = vmatpush.msra.mxu0 %v3345
      %3359 = vmatpush.msra.mxu0 %v2176
      %3360 = vmatpush.msra.mxu0 %v2175
      %3361 = vmatpush.msra.mxu0 %v2174
      %3362 = vmatpush.msra.mxu0 %v2173
      %3363 = vmatmul.f32.gmra.mxu0 %v3249
      %v3364 = vpop.f32.mrf.mxu0
      %v3365 = vadd.f32 %v3245, %v3364
      %3366 = vmatmul.f32.gmra.mxu0 %v3252
      %v3367 = vpop.f32.mrf.mxu0
      %v3368 = vadd.f32 %v3245, %v3367
      %3369 = vmatmul.f32.gmra.mxu0 %v3255
      %v3370 = vpop.f32.mrf.mxu0
      %v3371 = vadd.f32 %v3245, %v3370
      %3372 = vmatmul.f32.gmra.mxu0 %v3258
      %v3373 = vpop.f32.mrf.mxu0
      %v3374 = vadd.f32 %v3245, %v3373
      %3375 = vmatmul.f32.gmra.mxu0 %v3261
      %v3376 = vpop.f32.mrf.mxu0
      %v3377 = vadd.f32 %v3245, %v3376
      %3378 = vmatmul.f32.gmra.mxu0 %v3264
      %v3379 = vpop.f32.mrf.mxu0
      %v3380 = vadd.f32 %v3245, %v3379
      %3381 = vmatmul.f32.gmra.mxu0 %v3267
      %v3382 = vpop.f32.mrf.mxu0
      %v3383 = vadd.f32 %v3245, %v3382
      %3384 = vmatmul.f32.gmra.mxu0 %v3270
      %v3385 = vpop.f32.mrf.mxu0
      %v3386 = vadd.f32 %v3245, %v3385
      %3387 = vmatmul.f32.gmra.mxu0 %v3273
      %v3388 = vpop.f32.mrf.mxu0
      %v3389 = vadd.f32 %v3245, %v3388
      %3390 = vmatmul.f32.gmra.mxu0 %v3276
      %v3391 = vpop.f32.mrf.mxu0
      %v3392 = vadd.f32 %v3245, %v3391
      %3393 = vmatmul.f32.gmra.mxu0 %v3279
      %v3394 = vpop.f32.mrf.mxu0
      %v3395 = vadd.f32 %v3245, %v3394
      %3396 = vmatmul.f32.gmra.mxu0 %v3282
      %v3397 = vpop.f32.mrf.mxu0
      %v3398 = vadd.f32 %v3245, %v3397
      %3399 = vmatmul.f32.gmra.mxu0 %v3285
      %v3400 = vpop.f32.mrf.mxu0
      %v3401 = vadd.f32 %v3245, %v3400
      %3402 = vmatmul.f32.gmra.mxu0 %v3288
      %v3403 = vpop.f32.mrf.mxu0
      %v3404 = vadd.f32 %v3245, %v3403
      %3405 = vmatmul.f32.gmra.mxu0 %v3291
      %v3406 = vpop.f32.mrf.mxu0
      %v3407 = vadd.f32 %v3245, %v3406
      %3408 = vmatmul.f32.gmra.mxu0 %v3294
      %v3409 = vpop.f32.mrf.mxu0
      %v3410 = vadd.f32 %v3245, %v3409
      %3411 = vmatmul.f32.gmra.mxu0 %v3297
      %v3412 = vpop.f32.mrf.mxu0
      %v3413 = vadd.f32 %v3245, %v3412
      %3414 = vmatmul.f32.gmra.mxu0 %v3300
      %v3415 = vpop.f32.mrf.mxu0
      %v3416 = vadd.f32 %v3245, %v3415
      %3417 = vmatmul.f32.gmra.mxu0 %v3303
      %v3418 = vpop.f32.mrf.mxu0
      %v3419 = vadd.f32 %v3245, %v3418
      %3420 = vmatmul.f32.gmra.mxu0 %v3306
      %v3421 = vpop.f32.mrf.mxu0
      %v3422 = vadd.f32 %v3245, %v3421
      %3423 = vmatmul.f32.gmra.mxu0 %v3309
      %v3424 = vpop.f32.mrf.mxu0
      %v3425 = vadd.f32 %v3245, %v3424
      %3426 = vmatmul.f32.gmra.mxu0 %v3312
      %v3427 = vpop.f32.mrf.mxu0
      %v3428 = vadd.f32 %v3245, %v3427
      %3429 = vmatmul.f32.gmra.mxu0 %v3315
      %v3430 = vpop.f32.mrf.mxu0
      %v3431 = vadd.f32 %v3245, %v3430
      %3432 = vmatmul.f32.gmra.mxu0 %v3318
      %v3433 = vpop.f32.mrf.mxu0
      %v3434 = vadd.f32 %v3245, %v3433
      %3435 = vmatmul.f32.gmra.mxu0 %v3321
      %v3436 = vpop.f32.mrf.mxu0
      %v3437 = vadd.f32 %v3245, %v3436
      %3438 = vmatmul.f32.gmra.mxu0 %v3324
      %v3439 = vpop.f32.mrf.mxu0
      %v3440 = vadd.f32 %v3245, %v3439
      %3441 = vmatmul.f32.gmra.mxu0 %v3327
      %v3442 = vpop.f32.mrf.mxu0
      %v3443 = vadd.f32 %v3245, %v3442
      %3444 = vmatmul.f32.gmra.mxu0 %v3330
      %v3445 = vpop.f32.mrf.mxu0
      %v3446 = vadd.f32 %v3245, %v3445
      %3447 = vmatmul.f32.gmra.mxu0 %v3333
      %v3448 = vpop.f32.mrf.mxu0
      %v3449 = vadd.f32 %v3245, %v3448
      %3450 = vmatmul.f32.gmra.mxu0 %v3336
      %v3451 = vpop.f32.mrf.mxu0
      %v3452 = vadd.f32 %v3245, %v3451
      %3453 = vmatmul.f32.gmra.mxu0 %v3339
      %v3454 = vpop.f32.mrf.mxu0
      %v3455 = vadd.f32 %v3245, %v3454
      %3456 = vmatmul.f32.gmra.mxu0 %v3342
      %v3457 = vpop.f32.mrf.mxu0
      %v3458 = vadd.f32 %v3245, %v3457
      %3459 = vdwg.mxu0
      %3460 = vxpose.xlu0.b32.start [1/16] %v3365, 128
      %3461 = vxpose.xlu0.b32.cont [2/16] %v3368, 128
      %3462 = vxpose.xlu0.b32.cont [3/16] %v3371, 128
      %3463 = vxpose.xlu0.b32.cont [4/16] %v3374, 128
      %3464 = vxpose.xlu0.b32.cont [5/16] %v3377, 128
      %3465 = vxpose.xlu0.b32.cont [6/16] %v3380, 128
      %3466 = vxpose.xlu0.b32.cont [7/16] %v3383, 128
      %3467 = vxpose.xlu0.b32.cont [8/16] %v3386, 128
      %3468 = vxpose.xlu0.b32.cont [9/16] %v3389, 128
      %3469 = vxpose.xlu0.b32.cont [10/16] %v3392, 128
      %3470 = vxpose.xlu0.b32.cont [11/16] %v3395, 128
      %3471 = vxpose.xlu0.b32.cont [12/16] %v3398, 128
      %3472 = vxpose.xlu0.b32.cont [13/16] %v3401, 128
      %3473 = vxpose.xlu0.b32.cont [14/16] %v3404, 128
      %3474 = vxpose.xlu0.b32.cont [15/16] %v3407, 128
      %3475 = vxpose.xlu0.b32.end [16/16] %v3410, 128
      %v3476 = vpop.trf.xlu0
      %v3477 = vpop.trf.xlu0
      %v3478 = vpop.trf.xlu0
      %v3479 = vpop.trf.xlu0
      %v3480 = vpop.trf.xlu0
      %v3481 = vpop.trf.xlu0
      %v3482 = vpop.trf.xlu0
      %v3483 = vpop.trf.xlu0
      %v3484 = vpop.trf.xlu0
      %v3485 = vpop.trf.xlu0
      %v3486 = vpop.trf.xlu0
      %v3487 = vpop.trf.xlu0
      %v3488 = vpop.trf.xlu0
      %v3489 = vpop.trf.xlu0
      %v3490 = vpop.trf.xlu0
      %v3491 = vpop.trf.xlu0
      %3492 = vxpose.xlu0.b32.start [1/16] %v3413, 128
      %3493 = vxpose.xlu0.b32.cont [2/16] %v3416, 128
      %3494 = vxpose.xlu0.b32.cont [3/16] %v3419, 128
      %3495 = vxpose.xlu0.b32.cont [4/16] %v3422, 128
      %3496 = vxpose.xlu0.b32.cont [5/16] %v3425, 128
      %3497 = vxpose.xlu0.b32.cont [6/16] %v3428, 128
      %3498 = vxpose.xlu0.b32.cont [7/16] %v3431, 128
      %3499 = vxpose.xlu0.b32.cont [8/16] %v3434, 128
      %3500 = vxpose.xlu0.b32.cont [9/16] %v3437, 128
      %3501 = vxpose.xlu0.b32.cont [10/16] %v3440, 128
      %3502 = vxpose.xlu0.b32.cont [11/16] %v3443, 128
      %3503 = vxpose.xlu0.b32.cont [12/16] %v3446, 128
      %3504 = vxpose.xlu0.b32.cont [13/16] %v3449, 128
      %3505 = vxpose.xlu0.b32.cont [14/16] %v3452, 128
      %3506 = vxpose.xlu0.b32.cont [15/16] %v3455, 128
      %3507 = vxpose.xlu0.b32.end [16/16] %v3458, 128
      %v3508 = vpop.trf.xlu0
      %v3509 = vpop.trf.xlu0
      %v3510 = vpop.trf.xlu0
      %v3511 = vpop.trf.xlu0
      %v3512 = vpop.trf.xlu0
      %v3513 = vpop.trf.xlu0
      %v3514 = vpop.trf.xlu0
      %v3515 = vpop.trf.xlu0
      %v3516 = vpop.trf.xlu0
      %v3517 = vpop.trf.xlu0
      %v3518 = vpop.trf.xlu0
      %v3519 = vpop.trf.xlu0
      %v3520 = vpop.trf.xlu0
      %v3521 = vpop.trf.xlu0
      %v3522 = vpop.trf.xlu0
      %v3523 = vpop.trf.xlu0
      %3524 = vst [vmem:[%s443] sm:$0xff] %v3476
      %3525 = vst [vmem:[%s443 + $0x8] sm:$0xff] %v3508
      %3526 = vrot.lane.b32.xlu0 %v1091, 120
      %v3527 = vpop.permute.xlu0 %3526
      %3528 = vrot.lane.b32.xlu0 %v1092, 120
      %v3529 = vpop.permute.xlu0 %3528
      %3530 = vrot.lane.b32.xlu0 %v1093, 120
      %v3531 = vpop.permute.xlu0 %3530
      %3532 = vrot.lane.b32.xlu0 %v1094, 120
      %v3533 = vpop.permute.xlu0 %3532
      %3534 = vrot.lane.b32.xlu0 %v1095, 120
      %v3535 = vpop.permute.xlu0 %3534
      %3536 = vrot.lane.b32.xlu0 %v1096, 120
      %v3537 = vpop.permute.xlu0 %3536
      %3538 = vrot.lane.b32.xlu0 %v1097, 120
      %v3539 = vpop.permute.xlu0 %3538
      %3540 = vrot.lane.b32.xlu0 %v1098, 120
      %v3541 = vpop.permute.xlu0 %3540
      %3542 = vrot.lane.b32.xlu0 %v1099, 120
      %v3543 = vpop.permute.xlu0 %3542
      %3544 = vrot.lane.b32.xlu0 %v1100, 120
      %v3545 = vpop.permute.xlu0 %3544
      %3546 = vrot.lane.b32.xlu0 %v1101, 120
      %v3547 = vpop.permute.xlu0 %3546
      %3548 = vrot.lane.b32.xlu0 %v1102, 120
      %v3549 = vpop.permute.xlu0 %3548
      %3550 = vrot.lane.b32.xlu0 %v1103, 120
      %v3551 = vpop.permute.xlu0 %3550
      %3552 = vrot.lane.b32.xlu0 %v1104, 120
      %v3553 = vpop.permute.xlu0 %3552
      %3554 = vrot.lane.b32.xlu0 %v1105, 120
      %v3555 = vpop.permute.xlu0 %3554
      %3556 = vrot.lane.b32.xlu0 %v1106, 120
      %v3557 = vpop.permute.xlu0 %3556
      %3558 = vrot.lane.b32.xlu0 %v1107, 120
      %v3559 = vpop.permute.xlu0 %3558
      %3560 = vrot.lane.b32.xlu0 %v1108, 120
      %v3561 = vpop.permute.xlu0 %3560
      %3562 = vrot.lane.b32.xlu0 %v1109, 120
      %v3563 = vpop.permute.xlu0 %3562
      %3564 = vrot.lane.b32.xlu0 %v1110, 120
      %v3565 = vpop.permute.xlu0 %3564
      %3566 = vrot.lane.b32.xlu0 %v1111, 120
      %v3567 = vpop.permute.xlu0 %3566
      %3568 = vrot.lane.b32.xlu0 %v1112, 120
      %v3569 = vpop.permute.xlu0 %3568
      %3570 = vrot.lane.b32.xlu0 %v1113, 120
      %v3571 = vpop.permute.xlu0 %3570
      %3572 = vrot.lane.b32.xlu0 %v1114, 120
      %v3573 = vpop.permute.xlu0 %3572
      %3574 = vrot.lane.b32.xlu0 %v1115, 120
      %v3575 = vpop.permute.xlu0 %3574
      %3576 = vrot.lane.b32.xlu0 %v1116, 120
      %v3577 = vpop.permute.xlu0 %3576
      %3578 = vrot.lane.b32.xlu0 %v1117, 120
      %v3579 = vpop.permute.xlu0 %3578
      %3580 = vrot.lane.b32.xlu0 %v1118, 120
      %v3581 = vpop.permute.xlu0 %3580
      %3582 = vrot.lane.b32.xlu0 %v1119, 120
      %v3583 = vpop.permute.xlu0 %3582
      %3584 = vrot.lane.b32.xlu0 %v1120, 120
      %v3585 = vpop.permute.xlu0 %3584
      %3586 = vrot.lane.b32.xlu0 %v1121, 120
      %v3587 = vpop.permute.xlu0 %3586
      %3588 = vrot.lane.b32.xlu0 %v1122, 120
      %v3589 = vpop.permute.xlu0 %3588
      %3654 = vrot.lane.b32.xlu0 %v1812, 4
      %v3655 = vpop.permute.xlu0 %3654
      %3656 = vrot.lane.b32.xlu0 %v1813, 4
      %v3657 = vpop.permute.xlu0 %3656
      %3658 = vrot.lane.b32.xlu0 %v1814, 4
      %v3659 = vpop.permute.xlu0 %3658
      %3660 = vrot.lane.b32.xlu0 %v1815, 4
      %v3661 = vpop.permute.xlu0 %3660
      %3662 = vrot.lane.b32.xlu0 %v1816, 4
      %v3663 = vpop.permute.xlu0 %3662
      %3664 = vrot.lane.b32.xlu0 %v1817, 4
      %v3665 = vpop.permute.xlu0 %3664
      %3666 = vrot.lane.b32.xlu0 %v1818, 4
      %v3667 = vpop.permute.xlu0 %3666
      %3668 = vrot.lane.b32.xlu0 %v1819, 4
      %v3669 = vpop.permute.xlu0 %3668
      %3670 = vrot.lane.b32.xlu0 %v1820, 4
      %v3671 = vpop.permute.xlu0 %3670
      %3672 = vrot.lane.b32.xlu0 %v1821, 4
      %v3673 = vpop.permute.xlu0 %3672
      %3674 = vrot.lane.b32.xlu0 %v1822, 4
      %v3675 = vpop.permute.xlu0 %3674
      %3676 = vrot.lane.b32.xlu0 %v1823, 4
      %v3677 = vpop.permute.xlu0 %3676
      %3678 = vrot.lane.b32.xlu0 %v1824, 4
      %v3679 = vpop.permute.xlu0 %3678
      %3680 = vrot.lane.b32.xlu0 %v1825, 4
      %v3681 = vpop.permute.xlu0 %3680
      %3682 = vrot.lane.b32.xlu0 %v1826, 4
      %v3683 = vpop.permute.xlu0 %3682
      %3684 = vrot.lane.b32.xlu0 %v1827, 4
      %v3685 = vpop.permute.xlu0 %3684
      %3686 = vrot.lane.b32.xlu0 %v1828, 4
      %v3687 = vpop.permute.xlu0 %3686
      %3688 = vrot.lane.b32.xlu0 %v1829, 4
      %v3689 = vpop.permute.xlu0 %3688
      %3690 = vrot.lane.b32.xlu0 %v1830, 4
      %v3691 = vpop.permute.xlu0 %3690
      %3692 = vrot.lane.b32.xlu0 %v1831, 4
      %v3693 = vpop.permute.xlu0 %3692
      %3694 = vrot.lane.b32.xlu0 %v1832, 4
      %v3695 = vpop.permute.xlu0 %3694
      %3696 = vrot.lane.b32.xlu0 %v1833, 4
      %v3697 = vpop.permute.xlu0 %3696
      %3698 = vrot.lane.b32.xlu0 %v1834, 4
      %v3699 = vpop.permute.xlu0 %3698
      %3700 = vrot.lane.b32.xlu0 %v1835, 4
      %v3701 = vpop.permute.xlu0 %3700
      %3702 = vrot.lane.b32.xlu0 %v1836, 4
      %v3703 = vpop.permute.xlu0 %3702
      %3704 = vrot.lane.b32.xlu0 %v1837, 4
      %v3705 = vpop.permute.xlu0 %3704
      %3706 = vrot.lane.b32.xlu0 %v1838, 4
      %v3707 = vpop.permute.xlu0 %3706
      %3708 = vrot.lane.b32.xlu0 %v1839, 4
      %v3709 = vpop.permute.xlu0 %3708
      %3710 = vrot.lane.b32.xlu0 %v1840, 4
      %v3711 = vpop.permute.xlu0 %3710
      %3712 = vrot.lane.b32.xlu0 %v1841, 4
      %v3713 = vpop.permute.xlu0 %3712
      %3714 = vrot.lane.b32.xlu0 %v1842, 4
      %v3715 = vpop.permute.xlu0 %3714
      %3716 = vrot.lane.b32.xlu0 %v1843, 4
      %v3717 = vpop.permute.xlu0 %3716
      %3750 = vrot.lane.b32.xlu0 %v1093, 8
      %v3751 = vpop.permute.xlu0 %3750
      %3752 = vrot.lane.b32.xlu0 %v1094, 8
      %v3753 = vpop.permute.xlu0 %3752
      %3754 = vrot.lane.b32.xlu0 %v1095, 8
      %v3755 = vpop.permute.xlu0 %3754
      %3756 = vrot.lane.b32.xlu0 %v1096, 8
      %v3757 = vpop.permute.xlu0 %3756
      %3758 = vrot.lane.b32.xlu0 %v1097, 8
      %v3759 = vpop.permute.xlu0 %3758
      %3760 = vrot.lane.b32.xlu0 %v1098, 8
      %v3761 = vpop.permute.xlu0 %3760
      %3762 = vrot.lane.b32.xlu0 %v1099, 8
      %v3763 = vpop.permute.xlu0 %3762
      %3764 = vrot.lane.b32.xlu0 %v1100, 8
      %v3765 = vpop.permute.xlu0 %3764
      %3766 = vrot.lane.b32.xlu0 %v1101, 8
      %v3767 = vpop.permute.xlu0 %3766
      %3768 = vrot.lane.b32.xlu0 %v1102, 8
      %v3769 = vpop.permute.xlu0 %3768
      %3770 = vrot.lane.b32.xlu0 %v1103, 8
      %v3771 = vpop.permute.xlu0 %3770
      %3772 = vrot.lane.b32.xlu0 %v1104, 8
      %v3773 = vpop.permute.xlu0 %3772
      %3774 = vrot.lane.b32.xlu0 %v1105, 8
      %v3775 = vpop.permute.xlu0 %3774
      %3776 = vrot.lane.b32.xlu0 %v1106, 8
      %v3777 = vpop.permute.xlu0 %3776
      %3778 = vrot.lane.b32.xlu0 %v1107, 8
      %v3779 = vpop.permute.xlu0 %3778
      %3780 = vrot.lane.b32.xlu0 %v1108, 8
      %v3781 = vpop.permute.xlu0 %3780
      %3782 = vrot.lane.b32.xlu0 %v1109, 8
      %v3783 = vpop.permute.xlu0 %3782
      %3784 = vrot.lane.b32.xlu0 %v1110, 8
      %v3785 = vpop.permute.xlu0 %3784
      %3786 = vrot.lane.b32.xlu0 %v1111, 8
      %v3787 = vpop.permute.xlu0 %3786
      %3788 = vrot.lane.b32.xlu0 %v1112, 8
      %v3789 = vpop.permute.xlu0 %3788
      %3790 = vrot.lane.b32.xlu0 %v1113, 8
      %v3791 = vpop.permute.xlu0 %3790
      %3792 = vrot.lane.b32.xlu0 %v1114, 8
      %v3793 = vpop.permute.xlu0 %3792
      %3794 = vrot.lane.b32.xlu0 %v1115, 8
      %v3795 = vpop.permute.xlu0 %3794
      %3796 = vrot.lane.b32.xlu0 %v1116, 8
      %v3797 = vpop.permute.xlu0 %3796
      %3798 = vrot.lane.b32.xlu0 %v1117, 8
      %v3799 = vpop.permute.xlu0 %3798
      %3800 = vrot.lane.b32.xlu0 %v1118, 8
      %v3801 = vpop.permute.xlu0 %3800
      %3802 = vrot.lane.b32.xlu0 %v1119, 8
      %v3803 = vpop.permute.xlu0 %3802
      %3804 = vrot.lane.b32.xlu0 %v1120, 8
      %v3805 = vpop.permute.xlu0 %3804
      %3806 = vrot.lane.b32.xlu0 %v1121, 8
      %v3807 = vpop.permute.xlu0 %3806
      %3808 = vrot.lane.b32.xlu0 %v1122, 8
      %v3809 = vpop.permute.xlu0 %3808
      %3810 = vrot.lane.b32.xlu0 %v1123, 8
      %v3811 = vpop.permute.xlu0 %3810
      %3812 = vrot.lane.b32.xlu0 %v1124, 8
      %v3813 = vpop.permute.xlu0 %3812
      %3848 = vrot.lane.b32.xlu0 %v1814, 20
      %v3849 = vpop.permute.xlu0 %3848
      %3850 = vrot.lane.b32.xlu0 %v1815, 20
      %v3851 = vpop.permute.xlu0 %3850
      %3852 = vrot.lane.b32.xlu0 %v1816, 20
      %v3853 = vpop.permute.xlu0 %3852
      %3854 = vrot.lane.b32.xlu0 %v1817, 20
      %v3855 = vpop.permute.xlu0 %3854
      %3856 = vrot.lane.b32.xlu0 %v1818, 20
      %v3857 = vpop.permute.xlu0 %3856
      %3858 = vrot.lane.b32.xlu0 %v1819, 20
      %v3859 = vpop.permute.xlu0 %3858
      %3860 = vrot.lane.b32.xlu0 %v1820, 20
      %v3861 = vpop.permute.xlu0 %3860
      %3862 = vrot.lane.b32.xlu0 %v1821, 20
      %v3863 = vpop.permute.xlu0 %3862
      %3864 = vrot.lane.b32.xlu0 %v1822, 20
      %v3865 = vpop.permute.xlu0 %3864
      %3866 = vrot.lane.b32.xlu0 %v1823, 20
      %v3867 = vpop.permute.xlu0 %3866
      %3868 = vrot.lane.b32.xlu0 %v1824, 20
      %v3869 = vpop.permute.xlu0 %3868
      %3870 = vrot.lane.b32.xlu0 %v1825, 20
      %v3871 = vpop.permute.xlu0 %3870
      %3872 = vrot.lane.b32.xlu0 %v1826, 20
      %v3873 = vpop.permute.xlu0 %3872
      %3874 = vrot.lane.b32.xlu0 %v1827, 20
      %v3875 = vpop.permute.xlu0 %3874
      %3876 = vrot.lane.b32.xlu0 %v1828, 20
      %v3877 = vpop.permute.xlu0 %3876
      %3878 = vrot.lane.b32.xlu0 %v1829, 20
      %v3879 = vpop.permute.xlu0 %3878
      %3880 = vrot.lane.b32.xlu0 %v1830, 20
      %v3881 = vpop.permute.xlu0 %3880
      %3882 = vrot.lane.b32.xlu0 %v1831, 20
      %v3883 = vpop.permute.xlu0 %3882
      %3884 = vrot.lane.b32.xlu0 %v1832, 20
      %v3885 = vpop.permute.xlu0 %3884
      %3886 = vrot.lane.b32.xlu0 %v1833, 20
      %v3887 = vpop.permute.xlu0 %3886
      %3888 = vrot.lane.b32.xlu0 %v1834, 20
      %v3889 = vpop.permute.xlu0 %3888
      %3890 = vrot.lane.b32.xlu0 %v1835, 20
      %v3891 = vpop.permute.xlu0 %3890
      %3892 = vrot.lane.b32.xlu0 %v1836, 20
      %v3893 = vpop.permute.xlu0 %3892
      %3894 = vrot.lane.b32.xlu0 %v1837, 20
      %v3895 = vpop.permute.xlu0 %3894
      %3896 = vrot.lane.b32.xlu0 %v1838, 20
      %v3897 = vpop.permute.xlu0 %3896
      %3898 = vrot.lane.b32.xlu0 %v1839, 20
      %v3899 = vpop.permute.xlu0 %3898
      %3900 = vrot.lane.b32.xlu0 %v1840, 20
      %v3901 = vpop.permute.xlu0 %3900
      %3902 = vrot.lane.b32.xlu0 %v1841, 20
      %v3903 = vpop.permute.xlu0 %3902
      %3904 = vrot.lane.b32.xlu0 %v1842, 20
      %v3905 = vpop.permute.xlu0 %3904
      %3906 = vrot.lane.b32.xlu0 %v1843, 20
      %v3907 = vpop.permute.xlu0 %3906
      %3908 = vrot.lane.b32.xlu0 %v1844, 20
      %v3909 = vpop.permute.xlu0 %3908
      %3910 = vrot.lane.b32.xlu0 %v1845, 20
      %v3911 = vpop.permute.xlu0 %3910
      %3944 = vrot.lane.b32.xlu0 %v1814, 28
      %v3945 = vpop.permute.xlu0 %3944
      %3946 = vrot.lane.b32.xlu0 %v1815, 28
      %v3947 = vpop.permute.xlu0 %3946
      %3948 = vrot.lane.b32.xlu0 %v1816, 28
      %v3949 = vpop.permute.xlu0 %3948
      %3950 = vrot.lane.b32.xlu0 %v1817, 28
      %v3951 = vpop.permute.xlu0 %3950
      %3952 = vrot.lane.b32.xlu0 %v1818, 28
      %v3953 = vpop.permute.xlu0 %3952
      %3954 = vrot.lane.b32.xlu0 %v1819, 28
      %v3955 = vpop.permute.xlu0 %3954
      %3956 = vrot.lane.b32.xlu0 %v1820, 28
      %v3957 = vpop.permute.xlu0 %3956
      %3958 = vrot.lane.b32.xlu0 %v1821, 28
      %v3959 = vpop.permute.xlu0 %3958
      %3960 = vrot.lane.b32.xlu0 %v1822, 28
      %v3961 = vpop.permute.xlu0 %3960
      %3962 = vrot.lane.b32.xlu0 %v1823, 28
      %v3963 = vpop.permute.xlu0 %3962
      %3964 = vrot.lane.b32.xlu0 %v1824, 28
      %v3965 = vpop.permute.xlu0 %3964
      %3966 = vrot.lane.b32.xlu0 %v1825, 28
      %v3967 = vpop.permute.xlu0 %3966
      %3968 = vrot.lane.b32.xlu0 %v1826, 28
      %v3969 = vpop.permute.xlu0 %3968
      %3970 = vrot.lane.b32.xlu0 %v1827, 28
      %v3971 = vpop.permute.xlu0 %3970
      %3972 = vrot.lane.b32.xlu0 %v1828, 28
      %v3973 = vpop.permute.xlu0 %3972
      %3974 = vrot.lane.b32.xlu0 %v1829, 28
      %v3975 = vpop.permute.xlu0 %3974
      %3976 = vrot.lane.b32.xlu0 %v1830, 28
      %v3977 = vpop.permute.xlu0 %3976
      %3978 = vrot.lane.b32.xlu0 %v1831, 28
      %v3979 = vpop.permute.xlu0 %3978
      %3980 = vrot.lane.b32.xlu0 %v1832, 28
      %v3981 = vpop.permute.xlu0 %3980
      %3982 = vrot.lane.b32.xlu0 %v1833, 28
      %v3983 = vpop.permute.xlu0 %3982
      %3984 = vrot.lane.b32.xlu0 %v1834, 28
      %v3985 = vpop.permute.xlu0 %3984
      %3986 = vrot.lane.b32.xlu0 %v1835, 28
      %v3987 = vpop.permute.xlu0 %3986
      %3988 = vrot.lane.b32.xlu0 %v1836, 28
      %v3989 = vpop.permute.xlu0 %3988
      %3990 = vrot.lane.b32.xlu0 %v1837, 28
      %v3991 = vpop.permute.xlu0 %3990
      %3992 = vrot.lane.b32.xlu0 %v1838, 28
      %v3993 = vpop.permute.xlu0 %3992
      %3994 = vrot.lane.b32.xlu0 %v1839, 28
      %v3995 = vpop.permute.xlu0 %3994
      %3996 = vrot.lane.b32.xlu0 %v1840, 28
      %v3997 = vpop.permute.xlu0 %3996
      %3998 = vrot.lane.b32.xlu0 %v1841, 28
      %v3999 = vpop.permute.xlu0 %3998
      %4000 = vrot.lane.b32.xlu0 %v1842, 28
      %v4001 = vpop.permute.xlu0 %4000
      %4002 = vrot.lane.b32.xlu0 %v1843, 28
      %v4003 = vpop.permute.xlu0 %4002
      %4004 = vrot.lane.b32.xlu0 %v1844, 28
      %v4005 = vpop.permute.xlu0 %4004
      %4006 = vrot.lane.b32.xlu0 %v1845, 28
      %v4007 = vpop.permute.xlu0 %4006
      %v4040 = vsel %vm482, %v2308, %v3527
      %v4041 = vsel %vm482, %v2310, %v3529
      %v4042 = vsel %vm482, %v2312, %v3531
      %v4043 = vsel %vm482, %v2314, %v3533
      %v4044 = vsel %vm482, %v2316, %v3535
      %v4045 = vsel %vm482, %v2318, %v3537
      %v4046 = vsel %vm482, %v2320, %v3539
      %v4047 = vsel %vm482, %v2322, %v3541
      %v4048 = vsel %vm482, %v2324, %v3543
      %v4049 = vsel %vm482, %v2326, %v3545
      %v4050 = vsel %vm482, %v2328, %v3547
      %v4051 = vsel %vm482, %v2330, %v3549
      %v4052 = vsel %vm482, %v2332, %v3551
      %v4053 = vsel %vm482, %v2334, %v3553
      %v4054 = vsel %vm482, %v2336, %v3555
      %v4055 = vsel %vm482, %v2338, %v3557
      %v4056 = vsel %vm482, %v2340, %v3559
      %v4057 = vsel %vm482, %v2342, %v3561
      %v4058 = vsel %vm482, %v2344, %v3563
      %v4059 = vsel %vm482, %v2346, %v3565
      %v4060 = vsel %vm482, %v2348, %v3567
      %v4061 = vsel %vm482, %v2350, %v3569
      %v4062 = vsel %vm482, %v2352, %v3571
      %v4063 = vsel %vm482, %v2354, %v3573
      %v4064 = vsel %vm482, %v2356, %v3575
      %v4065 = vsel %vm482, %v2358, %v3577
      %v4066 = vsel %vm482, %v2360, %v3579
      %v4067 = vsel %vm482, %v2362, %v3581
      %v4068 = vsel %vm482, %v2364, %v3583
      %v4069 = vsel %vm482, %v2366, %v3585
      %v4070 = vsel %vm482, %v2368, %v3587
      %v4071 = vsel %vm482, %v2370, %v3589
      %v4072 = vsel %vm3013, %v4040, %v3655
      %v4073 = vsel %vm3013, %v4041, %v3657
      %v4074 = vsel %vm3013, %v4042, %v3659
      %v4075 = vsel %vm3013, %v4043, %v3661
      %v4076 = vsel %vm3013, %v4044, %v3663
      %v4077 = vsel %vm3013, %v4045, %v3665
      %v4078 = vsel %vm3013, %v4046, %v3667
      %v4079 = vsel %vm3013, %v4047, %v3669
      %v4080 = vsel %vm3013, %v4048, %v3671
      %v4081 = vsel %vm3013, %v4049, %v3673
      %v4082 = vsel %vm3013, %v4050, %v3675
      %v4083 = vsel %vm3013, %v4051, %v3677
      %v4084 = vsel %vm3013, %v4052, %v3679
      %v4085 = vsel %vm3013, %v4053, %v3681
      %v4086 = vsel %vm3013, %v4054, %v3683
      %v4087 = vsel %vm3013, %v4055, %v3685
      %v4088 = vsel %vm3013, %v4056, %v3687
      %v4089 = vsel %vm3013, %v4057, %v3689
      %v4090 = vsel %vm3013, %v4058, %v3691
      %v4091 = vsel %vm3013, %v4059, %v3693
      %v4092 = vsel %vm3013, %v4060, %v3695
      %v4093 = vsel %vm3013, %v4061, %v3697
      %v4094 = vsel %vm3013, %v4062, %v3699
      %v4095 = vsel %vm3013, %v4063, %v3701
      %v4096 = vsel %vm3013, %v4064, %v3703
      %v4097 = vsel %vm3013, %v4065, %v3705
      %v4098 = vsel %vm3013, %v4066, %v3707
      %v4099 = vsel %vm3013, %v4067, %v3709
      %v4100 = vsel %vm3013, %v4068, %v3711
      %v4101 = vsel %vm3013, %v4069, %v3713
      %v4102 = vsel %vm3013, %v4070, %v3715
      %v4103 = vsel %vm3013, %v4071, %v3717
      %v4104 = vsel %vm3046, %v4072, %v2598
      %v4105 = vsel %vm3046, %v4073, %v2600
      %v4106 = vsel %vm3046, %v4074, %v2602
      %v4107 = vsel %vm3046, %v4075, %v2604
      %v4108 = vsel %vm3046, %v4076, %v2606
      %v4109 = vsel %vm3046, %v4077, %v2608
      %v4110 = vsel %vm3046, %v4078, %v2610
      %v4111 = vsel %vm3046, %v4079, %v2612
      %v4112 = vsel %vm3046, %v4080, %v2614
      %v4113 = vsel %vm3046, %v4081, %v2616
      %v4114 = vsel %vm3046, %v4082, %v2618
      %v4115 = vsel %vm3046, %v4083, %v2620
      %v4116 = vsel %vm3046, %v4084, %v2622
      %v4117 = vsel %vm3046, %v4085, %v2624
      %v4118 = vsel %vm3046, %v4086, %v2626
      %v4119 = vsel %vm3046, %v4087, %v2628
      %v4120 = vsel %vm3046, %v4088, %v2630
      %v4121 = vsel %vm3046, %v4089, %v2632
      %v4122 = vsel %vm3046, %v4090, %v2634
      %v4123 = vsel %vm3046, %v4091, %v2636
      %v4124 = vsel %vm3046, %v4092, %v2638
      %v4125 = vsel %vm3046, %v4093, %v2640
      %v4126 = vsel %vm3046, %v4094, %v2642
      %v4127 = vsel %vm3046, %v4095, %v2644
      %v4128 = vsel %vm3046, %v4096, %v2646
      %v4129 = vsel %vm3046, %v4097, %v2648
      %v4130 = vsel %vm3046, %v4098, %v2650
      %v4131 = vsel %vm3046, %v4099, %v2652
      %v4132 = vsel %vm3046, %v4100, %v2654
      %v4133 = vsel %vm3046, %v4101, %v2656
      %v4134 = vsel %vm3046, %v4102, %v2658
      %v4135 = vsel %vm3046, %v4103, %v2660
      %v4136 = vsel %vm3079, %v4104, %v3751
      %v4137 = vsel %vm3079, %v4105, %v3753
      %v4138 = vsel %vm3079, %v4106, %v3755
      %v4139 = vsel %vm3079, %v4107, %v3757
      %v4140 = vsel %vm3079, %v4108, %v3759
      %v4141 = vsel %vm3079, %v4109, %v3761
      %v4142 = vsel %vm3079, %v4110, %v3763
      %v4143 = vsel %vm3079, %v4111, %v3765
      %v4144 = vsel %vm3079, %v4112, %v3767
      %v4145 = vsel %vm3079, %v4113, %v3769
      %v4146 = vsel %vm3079, %v4114, %v3771
      %v4147 = vsel %vm3079, %v4115, %v3773
      %v4148 = vsel %vm3079, %v4116, %v3775
      %v4149 = vsel %vm3079, %v4117, %v3777
      %v4150 = vsel %vm3079, %v4118, %v3779
      %v4151 = vsel %vm3079, %v4119, %v3781
      %v4152 = vsel %vm3079, %v4120, %v3783
      %v4153 = vsel %vm3079, %v4121, %v3785
      %v4154 = vsel %vm3079, %v4122, %v3787
      %v4155 = vsel %vm3079, %v4123, %v3789
      %v4156 = vsel %vm3079, %v4124, %v3791
      %v4157 = vsel %vm3079, %v4125, %v3793
      %v4158 = vsel %vm3079, %v4126, %v3795
      %v4159 = vsel %vm3079, %v4127, %v3797
      %v4160 = vsel %vm3079, %v4128, %v3799
      %v4161 = vsel %vm3079, %v4129, %v3801
      %v4162 = vsel %vm3079, %v4130, %v3803
      %v4163 = vsel %vm3079, %v4131, %v3805
      %v4164 = vsel %vm3079, %v4132, %v3807
      %v4165 = vsel %vm3079, %v4133, %v3809
      %v4166 = vsel %vm3079, %v4134, %v3811
      %v4167 = vsel %vm3079, %v4135, %v3813
      %v4168 = vsel %vm3112, %v4136, %v3849
      %v4169 = vsel %vm3112, %v4137, %v3851
      %v4170 = vsel %vm3112, %v4138, %v3853
      %v4171 = vsel %vm3112, %v4139, %v3855
      %v4172 = vsel %vm3112, %v4140, %v3857
      %v4173 = vsel %vm3112, %v4141, %v3859
      %v4174 = vsel %vm3112, %v4142, %v3861
      %v4175 = vsel %vm3112, %v4143, %v3863
      %v4176 = vsel %vm3112, %v4144, %v3865
      %v4177 = vsel %vm3112, %v4145, %v3867
      %v4178 = vsel %vm3112, %v4146, %v3869
      %v4179 = vsel %vm3112, %v4147, %v3871
      %v4180 = vsel %vm3112, %v4148, %v3873
      %v4181 = vsel %vm3112, %v4149, %v3875
      %v4182 = vsel %vm3112, %v4150, %v3877
      %v4183 = vsel %vm3112, %v4151, %v3879
      %v4184 = vsel %vm3112, %v4152, %v3881
      %v4185 = vsel %vm3112, %v4153, %v3883
      %v4186 = vsel %vm3112, %v4154, %v3885
      %v4187 = vsel %vm3112, %v4155, %v3887
      %v4188 = vsel %vm3112, %v4156, %v3889
      %v4189 = vsel %vm3112, %v4157, %v3891
      %v4190 = vsel %vm3112, %v4158, %v3893
      %v4191 = vsel %vm3112, %v4159, %v3895
      %v4192 = vsel %vm3112, %v4160, %v3897
      %v4193 = vsel %vm3112, %v4161, %v3899
      %v4194 = vsel %vm3112, %v4162, %v3901
      %v4195 = vsel %vm3112, %v4163, %v3903
      %v4196 = vsel %vm3112, %v4164, %v3905
      %v4197 = vsel %vm3112, %v4165, %v3907
      %v4198 = vsel %vm3112, %v4166, %v3909
      %v4199 = vsel %vm3112, %v4167, %v3911
      %v4200 = vsel %vm3145, %v4168, %v2886
      %v4201 = vsel %vm3145, %v4169, %v2888
      %v4202 = vsel %vm3145, %v4170, %v2890
      %v4203 = vsel %vm3145, %v4171, %v2892
      %v4204 = vsel %vm3145, %v4172, %v2894
      %v4205 = vsel %vm3145, %v4173, %v2896
      %v4206 = vsel %vm3145, %v4174, %v2898
      %v4207 = vsel %vm3145, %v4175, %v2900
      %v4208 = vsel %vm3145, %v4176, %v2902
      %v4209 = vsel %vm3145, %v4177, %v2904
      %v4210 = vsel %vm3145, %v4178, %v2906
      %v4211 = vsel %vm3145, %v4179, %v2908
      %v4212 = vsel %vm3145, %v4180, %v2910
      %v4213 = vsel %vm3145, %v4181, %v2912
      %v4214 = vsel %vm3145, %v4182, %v2914
      %v4215 = vsel %vm3145, %v4183, %v2916
      %v4216 = vsel %vm3145, %v4184, %v2918
      %v4217 = vsel %vm3145, %v4185, %v2920
      %v4218 = vsel %vm3145, %v4186, %v2922
      %v4219 = vsel %vm3145, %v4187, %v2924
      %v4220 = vsel %vm3145, %v4188, %v2926
      %v4221 = vsel %vm3145, %v4189, %v2928
      %v4222 = vsel %vm3145, %v4190, %v2930
      %v4223 = vsel %vm3145, %v4191, %v2932
      %v4224 = vsel %vm3145, %v4192, %v2934
      %v4225 = vsel %vm3145, %v4193, %v2936
      %v4226 = vsel %vm3145, %v4194, %v2938
      %v4227 = vsel %vm3145, %v4195, %v2940
      %v4228 = vsel %vm3145, %v4196, %v2942
      %v4229 = vsel %vm3145, %v4197, %v2944
      %v4230 = vsel %vm3145, %v4198, %v2946
      %v4231 = vsel %vm3145, %v4199, %v2948
      %v4232 = vsel %vm3178, %v4200, %v2502
      %v4233 = vsel %vm3178, %v4201, %v2504
      %v4234 = vsel %vm3178, %v4202, %v2506
      %v4235 = vsel %vm3178, %v4203, %v2508
      %v4236 = vsel %vm3178, %v4204, %v2510
      %v4237 = vsel %vm3178, %v4205, %v2512
      %v4238 = vsel %vm3178, %v4206, %v2514
      %v4239 = vsel %vm3178, %v4207, %v2516
      %v4240 = vsel %vm3178, %v4208, %v2518
      %v4241 = vsel %vm3178, %v4209, %v2520
      %v4242 = vsel %vm3178, %v4210, %v2522
      %v4243 = vsel %vm3178, %v4211, %v2524
      %v4244 = vsel %vm3178, %v4212, %v2526
      %v4245 = vsel %vm3178, %v4213, %v2528
      %v4246 = vsel %vm3178, %v4214, %v2530
      %v4247 = vsel %vm3178, %v4215, %v2532
      %v4248 = vsel %vm3178, %v4216, %v2534
      %v4249 = vsel %vm3178, %v4217, %v2536
      %v4250 = vsel %vm3178, %v4218, %v2538
      %v4251 = vsel %vm3178, %v4219, %v2540
      %v4252 = vsel %vm3178, %v4220, %v2542
      %v4253 = vsel %vm3178, %v4221, %v2544
      %v4254 = vsel %vm3178, %v4222, %v2546
      %v4255 = vsel %vm3178, %v4223, %v2548
      %v4256 = vsel %vm3178, %v4224, %v2550
      %v4257 = vsel %vm3178, %v4225, %v2552
      %v4258 = vsel %vm3178, %v4226, %v2554
      %v4259 = vsel %vm3178, %v4227, %v2556
      %v4260 = vsel %vm3178, %v4228, %v2558
      %v4261 = vsel %vm3178, %v4229, %v2560
      %v4262 = vsel %vm3178, %v4230, %v2562
      %v4263 = vsel %vm3178, %v4231, %v2564
      %v4264 = vsel %vm3211, %v4232, %v3945
      %v4265 = vsel %vm3211, %v4233, %v3947
      %v4266 = vsel %vm3211, %v4234, %v3949
      %v4267 = vsel %vm3211, %v4235, %v3951
      %v4268 = vsel %vm3211, %v4236, %v3953
      %v4269 = vsel %vm3211, %v4237, %v3955
      %v4270 = vsel %vm3211, %v4238, %v3957
      %v4271 = vsel %vm3211, %v4239, %v3959
      %v4272 = vsel %vm3211, %v4240, %v3961
      %v4273 = vsel %vm3211, %v4241, %v3963
      %v4274 = vsel %vm3211, %v4242, %v3965
      %v4275 = vsel %vm3211, %v4243, %v3967
      %v4276 = vsel %vm3211, %v4244, %v3969
      %v4277 = vsel %vm3211, %v4245, %v3971
      %v4278 = vsel %vm3211, %v4246, %v3973
      %v4279 = vsel %vm3211, %v4247, %v3975
      %v4280 = vsel %vm3211, %v4248, %v3977
      %v4281 = vsel %vm3211, %v4249, %v3979
      %v4282 = vsel %vm3211, %v4250, %v3981
      %v4283 = vsel %vm3211, %v4251, %v3983
      %v4284 = vsel %vm3211, %v4252, %v3985
      %v4285 = vsel %vm3211, %v4253, %v3987
      %v4286 = vsel %vm3211, %v4254, %v3989
      %v4287 = vsel %vm3211, %v4255, %v3991
      %v4288 = vsel %vm3211, %v4256, %v3993
      %v4289 = vsel %vm3211, %v4257, %v3995
      %v4290 = vsel %vm3211, %v4258, %v3997
      %v4291 = vsel %vm3211, %v4259, %v3999
      %v4292 = vsel %vm3211, %v4260, %v4001
      %v4293 = vsel %vm3211, %v4261, %v4003
      %v4294 = vsel %vm3211, %v4262, %v4005
      %v4295 = vsel %vm3211, %v4263, %v4007
      %v4297 = vsel %vm3247, %v4264, 0
      %v4300 = vsel %vm3247, %v4265, 0
      %v4303 = vsel %vm3247, %v4266, 0
      %v4306 = vsel %vm3247, %v4267, 0
      %v4309 = vsel %vm3247, %v4268, 0
      %v4312 = vsel %vm3247, %v4269, 0
      %v4315 = vsel %vm3247, %v4270, 0
      %v4318 = vsel %vm3247, %v4271, 0
      %v4321 = vsel %vm3247, %v4272, 0
      %v4324 = vsel %vm3247, %v4273, 0
      %v4327 = vsel %vm3247, %v4274, 0
      %v4330 = vsel %vm3247, %v4275, 0
      %v4333 = vsel %vm3247, %v4276, 0
      %v4336 = vsel %vm3247, %v4277, 0
      %v4339 = vsel %vm3247, %v4278, 0
      %v4342 = vsel %vm3247, %v4279, 0
      %v4345 = vsel %vm3247, %v4280, 0
      %v4348 = vsel %vm3247, %v4281, 0
      %v4351 = vsel %vm3247, %v4282, 0
      %v4354 = vsel %vm3247, %v4283, 0
      %v4357 = vsel %vm3247, %v4284, 0
      %v4360 = vsel %vm3247, %v4285, 0
      %v4363 = vsel %vm3247, %v4286, 0
      %v4366 = vsel %vm3247, %v4287, 0
      %v4369 = vsel %vm3247, %v4288, 0
      %v4372 = vsel %vm3247, %v4289, 0
      %v4375 = vsel %vm3247, %v4290, 0
      %v4378 = vsel %vm3247, %v4291, 0
      %v4381 = vsel %vm3247, %v4292, 0
      %v4384 = vsel %vm3247, %v4293, 0
      %v4387 = vsel %vm3247, %v4294, 0
      %v4390 = vsel %vm3247, %v4295, 0
      %4392 = vmatpush.msra.mxu0 0.0
      %4393 = vmatpush.msra.mxu0 0.0
      %4394 = vmatpush.msra.mxu0 0.0
      %4395 = vmatpush.msra.mxu0 0.0
      %4396 = vmatpush.msra.mxu0 0.0
      %4397 = vmatpush.msra.mxu0 0.0
      %4398 = vmatpush.msra.mxu0 0.0
      %4399 = vmatpush.msra.mxu0 0.0
      %4400 = vmatpush.msra.mxu0 0.0
      %4401 = vmatpush.msra.mxu0 0.0
      %4402 = vmatpush.msra.mxu0 0.0
      %4403 = vmatpush.msra.mxu0 %v3345
      %4404 = vmatpush.msra.mxu0 %v2176
      %4405 = vmatpush.msra.mxu0 %v2175
      %4406 = vmatpush.msra.mxu0 %v2174
      %4407 = vmatpush.msra.mxu0 %v2173
      %4408 = vmatmul.f32.gmra.mxu0 %v4297
      %v4409 = vpop.f32.mrf.mxu0
      %v4410 = vadd.f32 %v3245, %v4409
      %4411 = vmatmul.f32.gmra.mxu0 %v4300
      %v4412 = vpop.f32.mrf.mxu0
      %v4413 = vadd.f32 %v3245, %v4412
      %4414 = vmatmul.f32.gmra.mxu0 %v4303
      %v4415 = vpop.f32.mrf.mxu0
      %v4416 = vadd.f32 %v3245, %v4415
      %4417 = vmatmul.f32.gmra.mxu0 %v4306
      %v4418 = vpop.f32.mrf.mxu0
      %v4419 = vadd.f32 %v3245, %v4418
      %4420 = vmatmul.f32.gmra.mxu0 %v4309
      %v4421 = vpop.f32.mrf.mxu0
      %v4422 = vadd.f32 %v3245, %v4421
      %4423 = vmatmul.f32.gmra.mxu0 %v4312
      %v4424 = vpop.f32.mrf.mxu0
      %v4425 = vadd.f32 %v3245, %v4424
      %4426 = vmatmul.f32.gmra.mxu0 %v4315
      %v4427 = vpop.f32.mrf.mxu0
      %v4428 = vadd.f32 %v3245, %v4427
      %4429 = vmatmul.f32.gmra.mxu0 %v4318
      %v4430 = vpop.f32.mrf.mxu0
      %v4431 = vadd.f32 %v3245, %v4430
      %4432 = vmatmul.f32.gmra.mxu0 %v4321
      %v4433 = vpop.f32.mrf.mxu0
      %v4434 = vadd.f32 %v3245, %v4433
      %4435 = vmatmul.f32.gmra.mxu0 %v4324
      %v4436 = vpop.f32.mrf.mxu0
      %v4437 = vadd.f32 %v3245, %v4436
      %4438 = vmatmul.f32.gmra.mxu0 %v4327
      %v4439 = vpop.f32.mrf.mxu0
      %v4440 = vadd.f32 %v3245, %v4439
      %4441 = vmatmul.f32.gmra.mxu0 %v4330
      %v4442 = vpop.f32.mrf.mxu0
      %v4443 = vadd.f32 %v3245, %v4442
      %4444 = vmatmul.f32.gmra.mxu0 %v4333
      %v4445 = vpop.f32.mrf.mxu0
      %v4446 = vadd.f32 %v3245, %v4445
      %4447 = vmatmul.f32.gmra.mxu0 %v4336
      %v4448 = vpop.f32.mrf.mxu0
      %v4449 = vadd.f32 %v3245, %v4448
      %4450 = vmatmul.f32.gmra.mxu0 %v4339
      %v4451 = vpop.f32.mrf.mxu0
      %v4452 = vadd.f32 %v3245, %v4451
      %4453 = vmatmul.f32.gmra.mxu0 %v4342
      %v4454 = vpop.f32.mrf.mxu0
      %v4455 = vadd.f32 %v3245, %v4454
      %4456 = vmatmul.f32.gmra.mxu0 %v4345
      %v4457 = vpop.f32.mrf.mxu0
      %v4458 = vadd.f32 %v3245, %v4457
      %4459 = vmatmul.f32.gmra.mxu0 %v4348
      %v4460 = vpop.f32.mrf.mxu0
      %v4461 = vadd.f32 %v3245, %v4460
      %4462 = vmatmul.f32.gmra.mxu0 %v4351
      %v4463 = vpop.f32.mrf.mxu0
      %v4464 = vadd.f32 %v3245, %v4463
      %4465 = vmatmul.f32.gmra.mxu0 %v4354
      %v4466 = vpop.f32.mrf.mxu0
      %v4467 = vadd.f32 %v3245, %v4466
      %4468 = vmatmul.f32.gmra.mxu0 %v4357
      %v4469 = vpop.f32.mrf.mxu0
      %v4470 = vadd.f32 %v3245, %v4469
      %4471 = vmatmul.f32.gmra.mxu0 %v4360
      %v4472 = vpop.f32.mrf.mxu0
      %v4473 = vadd.f32 %v3245, %v4472
      %4474 = vmatmul.f32.gmra.mxu0 %v4363
      %v4475 = vpop.f32.mrf.mxu0
      %v4476 = vadd.f32 %v3245, %v4475
      %4477 = vmatmul.f32.gmra.mxu0 %v4366
      %v4478 = vpop.f32.mrf.mxu0
      %v4479 = vadd.f32 %v3245, %v4478
      %4480 = vmatmul.f32.gmra.mxu0 %v4369
      %v4481 = vpop.f32.mrf.mxu0
      %v4482 = vadd.f32 %v3245, %v4481
      %4483 = vmatmul.f32.gmra.mxu0 %v4372
      %v4484 = vpop.f32.mrf.mxu0
      %v4485 = vadd.f32 %v3245, %v4484
      %4486 = vmatmul.f32.gmra.mxu0 %v4375
      %v4487 = vpop.f32.mrf.mxu0
      %v4488 = vadd.f32 %v3245, %v4487
      %4489 = vmatmul.f32.gmra.mxu0 %v4378
      %v4490 = vpop.f32.mrf.mxu0
      %v4491 = vadd.f32 %v3245, %v4490
      %4492 = vmatmul.f32.gmra.mxu0 %v4381
      %v4493 = vpop.f32.mrf.mxu0
      %v4494 = vadd.f32 %v3245, %v4493
      %4495 = vmatmul.f32.gmra.mxu0 %v4384
      %v4496 = vpop.f32.mrf.mxu0
      %v4497 = vadd.f32 %v3245, %v4496
      %4498 = vmatmul.f32.gmra.mxu0 %v4387
      %v4499 = vpop.f32.mrf.mxu0
      %v4500 = vadd.f32 %v3245, %v4499
      %4501 = vmatmul.f32.gmra.mxu0 %v4390
      %v4502 = vpop.f32.mrf.mxu0
      %v4503 = vadd.f32 %v3245, %v4502
      %4504 = vdwg.mxu0
      %4505 = vxpose.xlu0.b32.start [1/16] %v4410, 128
      %4506 = vxpose.xlu0.b32.cont [2/16] %v4413, 128
      %4507 = vxpose.xlu0.b32.cont [3/16] %v4416, 128
      %4508 = vxpose.xlu0.b32.cont [4/16] %v4419, 128
      %4509 = vxpose.xlu0.b32.cont [5/16] %v4422, 128
      %4510 = vxpose.xlu0.b32.cont [6/16] %v4425, 128
      %4511 = vxpose.xlu0.b32.cont [7/16] %v4428, 128
      %4512 = vxpose.xlu0.b32.cont [8/16] %v4431, 128
      %4513 = vxpose.xlu0.b32.cont [9/16] %v4434, 128
      %4514 = vxpose.xlu0.b32.cont [10/16] %v4437, 128
      %4515 = vxpose.xlu0.b32.cont [11/16] %v4440, 128
      %4516 = vxpose.xlu0.b32.cont [12/16] %v4443, 128
      %4517 = vxpose.xlu0.b32.cont [13/16] %v4446, 128
      %4518 = vxpose.xlu0.b32.cont [14/16] %v4449, 128
      %4519 = vxpose.xlu0.b32.cont [15/16] %v4452, 128
      %4520 = vxpose.xlu0.b32.end [16/16] %v4455, 128
      %v4521 = vpop.trf.xlu0
      %v4522 = vpop.trf.xlu0
      %v4523 = vpop.trf.xlu0
      %v4524 = vpop.trf.xlu0
      %v4525 = vpop.trf.xlu0
      %v4526 = vpop.trf.xlu0
      %v4527 = vpop.trf.xlu0
      %v4528 = vpop.trf.xlu0
      %v4529 = vpop.trf.xlu0
      %v4530 = vpop.trf.xlu0
      %v4531 = vpop.trf.xlu0
      %v4532 = vpop.trf.xlu0
      %v4533 = vpop.trf.xlu0
      %v4534 = vpop.trf.xlu0
      %v4535 = vpop.trf.xlu0
      %v4536 = vpop.trf.xlu0
      %4537 = vxpose.xlu0.b32.start [1/16] %v4458, 128
      %4538 = vxpose.xlu0.b32.cont [2/16] %v4461, 128
      %4539 = vxpose.xlu0.b32.cont [3/16] %v4464, 128
      %4540 = vxpose.xlu0.b32.cont [4/16] %v4467, 128
      %4541 = vxpose.xlu0.b32.cont [5/16] %v4470, 128
      %4542 = vxpose.xlu0.b32.cont [6/16] %v4473, 128
      %4543 = vxpose.xlu0.b32.cont [7/16] %v4476, 128
      %4544 = vxpose.xlu0.b32.cont [8/16] %v4479, 128
      %4545 = vxpose.xlu0.b32.cont [9/16] %v4482, 128
      %4546 = vxpose.xlu0.b32.cont [10/16] %v4485, 128
      %4547 = vxpose.xlu0.b32.cont [11/16] %v4488, 128
      %4548 = vxpose.xlu0.b32.cont [12/16] %v4491, 128
      %4549 = vxpose.xlu0.b32.cont [13/16] %v4494, 128
      %4550 = vxpose.xlu0.b32.cont [14/16] %v4497, 128
      %4551 = vxpose.xlu0.b32.cont [15/16] %v4500, 128
      %4552 = vxpose.xlu0.b32.end [16/16] %v4503, 128
      %v4553 = vpop.trf.xlu0
      %v4554 = vpop.trf.xlu0
      %v4555 = vpop.trf.xlu0
      %v4556 = vpop.trf.xlu0
      %v4557 = vpop.trf.xlu0
      %v4558 = vpop.trf.xlu0
      %v4559 = vpop.trf.xlu0
      %v4560 = vpop.trf.xlu0
      %v4561 = vpop.trf.xlu0
      %v4562 = vpop.trf.xlu0
      %v4563 = vpop.trf.xlu0
      %v4564 = vpop.trf.xlu0
      %v4565 = vpop.trf.xlu0
      %v4566 = vpop.trf.xlu0
      %v4567 = vpop.trf.xlu0
      %v4568 = vpop.trf.xlu0
      %s4569 = scalar_lea.vmem %s443, 16
      %4570 = vst [vmem:[%s4569] sm:$0xff] %v4521
      %4571 = vst [vmem:[%s4569 + $0x8] sm:$0xff] %v4553
      %4572 = vrot.lane.b32.xlu0 %v1093, 4
      %v4573 = vpop.permute.xlu0 %4572
      %4574 = vrot.lane.b32.xlu0 %v1094, 4
      %v4575 = vpop.permute.xlu0 %4574
      %4576 = vrot.lane.b32.xlu0 %v1095, 4
      %v4577 = vpop.permute.xlu0 %4576
      %4578 = vrot.lane.b32.xlu0 %v1096, 4
      %v4579 = vpop.permute.xlu0 %4578
      %4580 = vrot.lane.b32.xlu0 %v1097, 4
      %v4581 = vpop.permute.xlu0 %4580
      %4582 = vrot.lane.b32.xlu0 %v1098, 4
      %v4583 = vpop.permute.xlu0 %4582
      %4584 = vrot.lane.b32.xlu0 %v1099, 4
      %v4585 = vpop.permute.xlu0 %4584
      %4586 = vrot.lane.b32.xlu0 %v1100, 4
      %v4587 = vpop.permute.xlu0 %4586
      %4588 = vrot.lane.b32.xlu0 %v1101, 4
      %v4589 = vpop.permute.xlu0 %4588
      %4590 = vrot.lane.b32.xlu0 %v1102, 4
      %v4591 = vpop.permute.xlu0 %4590
      %4592 = vrot.lane.b32.xlu0 %v1103, 4
      %v4593 = vpop.permute.xlu0 %4592
      %4594 = vrot.lane.b32.xlu0 %v1104, 4
      %v4595 = vpop.permute.xlu0 %4594
      %4596 = vrot.lane.b32.xlu0 %v1105, 4
      %v4597 = vpop.permute.xlu0 %4596
      %4598 = vrot.lane.b32.xlu0 %v1106, 4
      %v4599 = vpop.permute.xlu0 %4598
      %4600 = vrot.lane.b32.xlu0 %v1107, 4
      %v4601 = vpop.permute.xlu0 %4600
      %4602 = vrot.lane.b32.xlu0 %v1108, 4
      %v4603 = vpop.permute.xlu0 %4602
      %4604 = vrot.lane.b32.xlu0 %v1109, 4
      %v4605 = vpop.permute.xlu0 %4604
      %4606 = vrot.lane.b32.xlu0 %v1110, 4
      %v4607 = vpop.permute.xlu0 %4606
      %4608 = vrot.lane.b32.xlu0 %v1111, 4
      %v4609 = vpop.permute.xlu0 %4608
      %4610 = vrot.lane.b32.xlu0 %v1112, 4
      %v4611 = vpop.permute.xlu0 %4610
      %4612 = vrot.lane.b32.xlu0 %v1113, 4
      %v4613 = vpop.permute.xlu0 %4612
      %4614 = vrot.lane.b32.xlu0 %v1114, 4
      %v4615 = vpop.permute.xlu0 %4614
      %4616 = vrot.lane.b32.xlu0 %v1115, 4
      %v4617 = vpop.permute.xlu0 %4616
      %4618 = vrot.lane.b32.xlu0 %v1116, 4
      %v4619 = vpop.permute.xlu0 %4618
      %4620 = vrot.lane.b32.xlu0 %v1117, 4
      %v4621 = vpop.permute.xlu0 %4620
      %4622 = vrot.lane.b32.xlu0 %v1118, 4
      %v4623 = vpop.permute.xlu0 %4622
      %4624 = vrot.lane.b32.xlu0 %v1119, 4
      %v4625 = vpop.permute.xlu0 %4624
      %4626 = vrot.lane.b32.xlu0 %v1120, 4
      %v4627 = vpop.permute.xlu0 %4626
      %4628 = vrot.lane.b32.xlu0 %v1121, 4
      %v4629 = vpop.permute.xlu0 %4628
      %4630 = vrot.lane.b32.xlu0 %v1122, 4
      %v4631 = vpop.permute.xlu0 %4630
      %4632 = vrot.lane.b32.xlu0 %v1123, 4
      %v4633 = vpop.permute.xlu0 %4632
      %4634 = vrot.lane.b32.xlu0 %v1124, 4
      %v4635 = vpop.permute.xlu0 %4634
      %4668 = vrot.lane.b32.xlu0 %v2139, 8
      %v4669 = vpop.permute.xlu0 %4668
      %4670 = vrot.lane.b32.xlu0 %v2140, 8
      %v4671 = vpop.permute.xlu0 %4670
      %4672 = vrot.lane.b32.xlu0 %v2141, 8
      %v4673 = vpop.permute.xlu0 %4672
      %4674 = vrot.lane.b32.xlu0 %v2142, 8
      %v4675 = vpop.permute.xlu0 %4674
      %4676 = vrot.lane.b32.xlu0 %v2143, 8
      %v4677 = vpop.permute.xlu0 %4676
      %4678 = vrot.lane.b32.xlu0 %v2144, 8
      %v4679 = vpop.permute.xlu0 %4678
      %4680 = vrot.lane.b32.xlu0 %v2145, 8
      %v4681 = vpop.permute.xlu0 %4680
      %4682 = vrot.lane.b32.xlu0 %v2146, 8
      %v4683 = vpop.permute.xlu0 %4682
      %4684 = vrot.lane.b32.xlu0 %v2147, 8
      %v4685 = vpop.permute.xlu0 %4684
      %4686 = vrot.lane.b32.xlu0 %v2148, 8
      %v4687 = vpop.permute.xlu0 %4686
      %4688 = vrot.lane.b32.xlu0 %v2149, 8
      %v4689 = vpop.permute.xlu0 %4688
      %4690 = vrot.lane.b32.xlu0 %v2150, 8
      %v4691 = vpop.permute.xlu0 %4690
      %4692 = vrot.lane.b32.xlu0 %v2151, 8
      %v4693 = vpop.permute.xlu0 %4692
      %4694 = vrot.lane.b32.xlu0 %v2152, 8
      %v4695 = vpop.permute.xlu0 %4694
      %4696 = vrot.lane.b32.xlu0 %v2153, 8
      %v4697 = vpop.permute.xlu0 %4696
      %4698 = vrot.lane.b32.xlu0 %v2154, 8
      %v4699 = vpop.permute.xlu0 %4698
      %4700 = vrot.lane.b32.xlu0 %v2155, 8
      %v4701 = vpop.permute.xlu0 %4700
      %4702 = vrot.lane.b32.xlu0 %v2156, 8
      %v4703 = vpop.permute.xlu0 %4702
      %4704 = vrot.lane.b32.xlu0 %v2157, 8
      %v4705 = vpop.permute.xlu0 %4704
      %4706 = vrot.lane.b32.xlu0 %v2158, 8
      %v4707 = vpop.permute.xlu0 %4706
      %4708 = vrot.lane.b32.xlu0 %v2159, 8
      %v4709 = vpop.permute.xlu0 %4708
      %4710 = vrot.lane.b32.xlu0 %v2160, 8
      %v4711 = vpop.permute.xlu0 %4710
      %4712 = vrot.lane.b32.xlu0 %v2161, 8
      %v4713 = vpop.permute.xlu0 %4712
      %4714 = vrot.lane.b32.xlu0 %v2162, 8
      %v4715 = vpop.permute.xlu0 %4714
      %4716 = vrot.lane.b32.xlu0 %v2163, 8
      %v4717 = vpop.permute.xlu0 %4716
      %4718 = vrot.lane.b32.xlu0 %v2164, 8
      %v4719 = vpop.permute.xlu0 %4718
      %4720 = vrot.lane.b32.xlu0 %v2165, 8
      %v4721 = vpop.permute.xlu0 %4720
      %4722 = vrot.lane.b32.xlu0 %v2166, 8
      %v4723 = vpop.permute.xlu0 %4722
      %4724 = vrot.lane.b32.xlu0 %v2167, 8
      %v4725 = vpop.permute.xlu0 %4724
      %4726 = vrot.lane.b32.xlu0 %v2168, 8
      %v4727 = vpop.permute.xlu0 %4726
      %4728 = vrot.lane.b32.xlu0 %v2169, 8
      %v4729 = vpop.permute.xlu0 %4728
      %4730 = vrot.lane.b32.xlu0 %v2170, 8
      %v4731 = vpop.permute.xlu0 %4730
      %4766 = vrot.lane.b32.xlu0 %v2141, 24
      %v4767 = vpop.permute.xlu0 %4766
      %4768 = vrot.lane.b32.xlu0 %v2142, 24
      %v4769 = vpop.permute.xlu0 %4768
      %4770 = vrot.lane.b32.xlu0 %v2143, 24
      %v4771 = vpop.permute.xlu0 %4770
      %4772 = vrot.lane.b32.xlu0 %v2144, 24
      %v4773 = vpop.permute.xlu0 %4772
      %4774 = vrot.lane.b32.xlu0 %v2145, 24
      %v4775 = vpop.permute.xlu0 %4774
      %4776 = vrot.lane.b32.xlu0 %v2146, 24
      %v4777 = vpop.permute.xlu0 %4776
      %4778 = vrot.lane.b32.xlu0 %v2147, 24
      %v4779 = vpop.permute.xlu0 %4778
      %4780 = vrot.lane.b32.xlu0 %v2148, 24
      %v4781 = vpop.permute.xlu0 %4780
      %4782 = vrot.lane.b32.xlu0 %v2149, 24
      %v4783 = vpop.permute.xlu0 %4782
      %4784 = vrot.lane.b32.xlu0 %v2150, 24
      %v4785 = vpop.permute.xlu0 %4784
      %4786 = vrot.lane.b32.xlu0 %v2151, 24
      %v4787 = vpop.permute.xlu0 %4786
      %4788 = vrot.lane.b32.xlu0 %v2152, 24
      %v4789 = vpop.permute.xlu0 %4788
      %4790 = vrot.lane.b32.xlu0 %v2153, 24
      %v4791 = vpop.permute.xlu0 %4790
      %4792 = vrot.lane.b32.xlu0 %v2154, 24
      %v4793 = vpop.permute.xlu0 %4792
      %4794 = vrot.lane.b32.xlu0 %v2155, 24
      %v4795 = vpop.permute.xlu0 %4794
      %4796 = vrot.lane.b32.xlu0 %v2156, 24
      %v4797 = vpop.permute.xlu0 %4796
      %4798 = vrot.lane.b32.xlu0 %v2157, 24
      %v4799 = vpop.permute.xlu0 %4798
      %4800 = vrot.lane.b32.xlu0 %v2158, 24
      %v4801 = vpop.permute.xlu0 %4800
      %4802 = vrot.lane.b32.xlu0 %v2159, 24
      %v4803 = vpop.permute.xlu0 %4802
      %4804 = vrot.lane.b32.xlu0 %v2160, 24
      %v4805 = vpop.permute.xlu0 %4804
      %4806 = vrot.lane.b32.xlu0 %v2161, 24
      %v4807 = vpop.permute.xlu0 %4806
      %4808 = vrot.lane.b32.xlu0 %v2162, 24
      %v4809 = vpop.permute.xlu0 %4808
      %4810 = vrot.lane.b32.xlu0 %v2163, 24
      %v4811 = vpop.permute.xlu0 %4810
      %4812 = vrot.lane.b32.xlu0 %v2164, 24
      %v4813 = vpop.permute.xlu0 %4812
      %4814 = vrot.lane.b32.xlu0 %v2165, 24
      %v4815 = vpop.permute.xlu0 %4814
      %4816 = vrot.lane.b32.xlu0 %v2166, 24
      %v4817 = vpop.permute.xlu0 %4816
      %4818 = vrot.lane.b32.xlu0 %v2167, 24
      %v4819 = vpop.permute.xlu0 %4818
      %4820 = vrot.lane.b32.xlu0 %v2168, 24
      %v4821 = vpop.permute.xlu0 %4820
      %4822 = vrot.lane.b32.xlu0 %v2169, 24
      %v4823 = vpop.permute.xlu0 %4822
      %4824 = vrot.lane.b32.xlu0 %v2170, 24
      %v4825 = vpop.permute.xlu0 %4824
      %4826 = vrot.lane.b32.xlu0 %v2171, 24
      %v4827 = vpop.permute.xlu0 %4826
      %4828 = vrot.lane.b32.xlu0 %v2172, 24
      %v4829 = vpop.permute.xlu0 %4828
      %4862 = vrot.lane.b32.xlu0 %v1095, 28
      %v4863 = vpop.permute.xlu0 %4862
      %4864 = vrot.lane.b32.xlu0 %v1096, 28
      %v4865 = vpop.permute.xlu0 %4864
      %4866 = vrot.lane.b32.xlu0 %v1097, 28
      %v4867 = vpop.permute.xlu0 %4866
      %4868 = vrot.lane.b32.xlu0 %v1098, 28
      %v4869 = vpop.permute.xlu0 %4868
      %4870 = vrot.lane.b32.xlu0 %v1099, 28
      %v4871 = vpop.permute.xlu0 %4870
      %4872 = vrot.lane.b32.xlu0 %v1100, 28
      %v4873 = vpop.permute.xlu0 %4872
      %4874 = vrot.lane.b32.xlu0 %v1101, 28
      %v4875 = vpop.permute.xlu0 %4874
      %4876 = vrot.lane.b32.xlu0 %v1102, 28
      %v4877 = vpop.permute.xlu0 %4876
      %4878 = vrot.lane.b32.xlu0 %v1103, 28
      %v4879 = vpop.permute.xlu0 %4878
      %4880 = vrot.lane.b32.xlu0 %v1104, 28
      %v4881 = vpop.permute.xlu0 %4880
      %4882 = vrot.lane.b32.xlu0 %v1105, 28
      %v4883 = vpop.permute.xlu0 %4882
      %4884 = vrot.lane.b32.xlu0 %v1106, 28
      %v4885 = vpop.permute.xlu0 %4884
      %4886 = vrot.lane.b32.xlu0 %v1107, 28
      %v4887 = vpop.permute.xlu0 %4886
      %4888 = vrot.lane.b32.xlu0 %v1108, 28
      %v4889 = vpop.permute.xlu0 %4888
      %4890 = vrot.lane.b32.xlu0 %v1109, 28
      %v4891 = vpop.permute.xlu0 %4890
      %4892 = vrot.lane.b32.xlu0 %v1110, 28
      %v4893 = vpop.permute.xlu0 %4892
      %4894 = vrot.lane.b32.xlu0 %v1111, 28
      %v4895 = vpop.permute.xlu0 %4894
      %4896 = vrot.lane.b32.xlu0 %v1112, 28
      %v4897 = vpop.permute.xlu0 %4896
      %4898 = vrot.lane.b32.xlu0 %v1113, 28
      %v4899 = vpop.permute.xlu0 %4898
      %4900 = vrot.lane.b32.xlu0 %v1114, 28
      %v4901 = vpop.permute.xlu0 %4900
      %4902 = vrot.lane.b32.xlu0 %v1115, 28
      %v4903 = vpop.permute.xlu0 %4902
      %4904 = vrot.lane.b32.xlu0 %v1116, 28
      %v4905 = vpop.permute.xlu0 %4904
      %4906 = vrot.lane.b32.xlu0 %v1117, 28
      %v4907 = vpop.permute.xlu0 %4906
      %4908 = vrot.lane.b32.xlu0 %v1118, 28
      %v4909 = vpop.permute.xlu0 %4908
      %4910 = vrot.lane.b32.xlu0 %v1119, 28
      %v4911 = vpop.permute.xlu0 %4910
      %4912 = vrot.lane.b32.xlu0 %v1120, 28
      %v4913 = vpop.permute.xlu0 %4912
      %4914 = vrot.lane.b32.xlu0 %v1121, 28
      %v4915 = vpop.permute.xlu0 %4914
      %4916 = vrot.lane.b32.xlu0 %v1122, 28
      %v4917 = vpop.permute.xlu0 %4916
      %4918 = vrot.lane.b32.xlu0 %v1123, 28
      %v4919 = vpop.permute.xlu0 %4918
      %4920 = vrot.lane.b32.xlu0 %v1124, 28
      %v4921 = vpop.permute.xlu0 %4920
      %4922 = vrot.lane.b32.xlu0 %v1125, 28
      %v4923 = vpop.permute.xlu0 %4922
      %4924 = vrot.lane.b32.xlu0 %v1126, 28
      %v4925 = vpop.permute.xlu0 %4924
      %4958 = vrot.lane.b32.xlu0 %v1125, 24
      %v4959 = vpop.permute.xlu0 %4958
      %4960 = vrot.lane.b32.xlu0 %v1126, 24
      %v4961 = vpop.permute.xlu0 %4960
      %v4964 = vsel %vm482, %v2139, %v4573
      %v4965 = vsel %vm482, %v2140, %v4575
      %v4966 = vsel %vm482, %v2141, %v4577
      %v4967 = vsel %vm482, %v2142, %v4579
      %v4968 = vsel %vm482, %v2143, %v4581
      %v4969 = vsel %vm482, %v2144, %v4583
      %v4970 = vsel %vm482, %v2145, %v4585
      %v4971 = vsel %vm482, %v2146, %v4587
      %v4972 = vsel %vm482, %v2147, %v4589
      %v4973 = vsel %vm482, %v2148, %v4591
      %v4974 = vsel %vm482, %v2149, %v4593
      %v4975 = vsel %vm482, %v2150, %v4595
      %v4976 = vsel %vm482, %v2151, %v4597
      %v4977 = vsel %vm482, %v2152, %v4599
      %v4978 = vsel %vm482, %v2153, %v4601
      %v4979 = vsel %vm482, %v2154, %v4603
      %v4980 = vsel %vm482, %v2155, %v4605
      %v4981 = vsel %vm482, %v2156, %v4607
      %v4982 = vsel %vm482, %v2157, %v4609
      %v4983 = vsel %vm482, %v2158, %v4611
      %v4984 = vsel %vm482, %v2159, %v4613
      %v4985 = vsel %vm482, %v2160, %v4615
      %v4986 = vsel %vm482, %v2161, %v4617
      %v4987 = vsel %vm482, %v2162, %v4619
      %v4988 = vsel %vm482, %v2163, %v4621
      %v4989 = vsel %vm482, %v2164, %v4623
      %v4990 = vsel %vm482, %v2165, %v4625
      %v4991 = vsel %vm482, %v2166, %v4627
      %v4992 = vsel %vm482, %v2167, %v4629
      %v4993 = vsel %vm482, %v2168, %v4631
      %v4994 = vsel %vm482, %v2169, %v4633
      %v4995 = vsel %vm482, %v2170, %v4635
      %v4996 = vsel %vm3013, %v4964, %v1093
      %v4997 = vsel %vm3013, %v4965, %v1094
      %v4998 = vsel %vm3013, %v4966, %v1095
      %v4999 = vsel %vm3013, %v4967, %v1096
      %v5000 = vsel %vm3013, %v4968, %v1097
      %v5001 = vsel %vm3013, %v4969, %v1098
      %v5002 = vsel %vm3013, %v4970, %v1099
      %v5003 = vsel %vm3013, %v4971, %v1100
      %v5004 = vsel %vm3013, %v4972, %v1101
      %v5005 = vsel %vm3013, %v4973, %v1102
      %v5006 = vsel %vm3013, %v4974, %v1103
      %v5007 = vsel %vm3013, %v4975, %v1104
      %v5008 = vsel %vm3013, %v4976, %v1105
      %v5009 = vsel %vm3013, %v4977, %v1106
      %v5010 = vsel %vm3013, %v4978, %v1107
      %v5011 = vsel %vm3013, %v4979, %v1108
      %v5012 = vsel %vm3013, %v4980, %v1109
      %v5013 = vsel %vm3013, %v4981, %v1110
      %v5014 = vsel %vm3013, %v4982, %v1111
      %v5015 = vsel %vm3013, %v4983, %v1112
      %v5016 = vsel %vm3013, %v4984, %v1113
      %v5017 = vsel %vm3013, %v4985, %v1114
      %v5018 = vsel %vm3013, %v4986, %v1115
      %v5019 = vsel %vm3013, %v4987, %v1116
      %v5020 = vsel %vm3013, %v4988, %v1117
      %v5021 = vsel %vm3013, %v4989, %v1118
      %v5022 = vsel %vm3013, %v4990, %v1119
      %v5023 = vsel %vm3013, %v4991, %v1120
      %v5024 = vsel %vm3013, %v4992, %v1121
      %v5025 = vsel %vm3013, %v4993, %v1122
      %v5026 = vsel %vm3013, %v4994, %v1123
      %v5027 = vsel %vm3013, %v4995, %v1124
      %v5028 = vsel %vm3046, %v4996, %v4669
      %v5029 = vsel %vm3046, %v4997, %v4671
      %v5030 = vsel %vm3046, %v4998, %v4673
      %v5031 = vsel %vm3046, %v4999, %v4675
      %v5032 = vsel %vm3046, %v5000, %v4677
      %v5033 = vsel %vm3046, %v5001, %v4679
      %v5034 = vsel %vm3046, %v5002, %v4681
      %v5035 = vsel %vm3046, %v5003, %v4683
      %v5036 = vsel %vm3046, %v5004, %v4685
      %v5037 = vsel %vm3046, %v5005, %v4687
      %v5038 = vsel %vm3046, %v5006, %v4689
      %v5039 = vsel %vm3046, %v5007, %v4691
      %v5040 = vsel %vm3046, %v5008, %v4693
      %v5041 = vsel %vm3046, %v5009, %v4695
      %v5042 = vsel %vm3046, %v5010, %v4697
      %v5043 = vsel %vm3046, %v5011, %v4699
      %v5044 = vsel %vm3046, %v5012, %v4701
      %v5045 = vsel %vm3046, %v5013, %v4703
      %v5046 = vsel %vm3046, %v5014, %v4705
      %v5047 = vsel %vm3046, %v5015, %v4707
      %v5048 = vsel %vm3046, %v5016, %v4709
      %v5049 = vsel %vm3046, %v5017, %v4711
      %v5050 = vsel %vm3046, %v5018, %v4713
      %v5051 = vsel %vm3046, %v5019, %v4715
      %v5052 = vsel %vm3046, %v5020, %v4717
      %v5053 = vsel %vm3046, %v5021, %v4719
      %v5054 = vsel %vm3046, %v5022, %v4721
      %v5055 = vsel %vm3046, %v5023, %v4723
      %v5056 = vsel %vm3046, %v5024, %v4725
      %v5057 = vsel %vm3046, %v5025, %v4727
      %v5058 = vsel %vm3046, %v5026, %v4729
      %v5059 = vsel %vm3046, %v5027, %v4731
      %v5060 = vsel %vm3079, %v5028, %v2598
      %v5061 = vsel %vm3079, %v5029, %v2600
      %v5062 = vsel %vm3079, %v5030, %v2602
      %v5063 = vsel %vm3079, %v5031, %v2604
      %v5064 = vsel %vm3079, %v5032, %v2606
      %v5065 = vsel %vm3079, %v5033, %v2608
      %v5066 = vsel %vm3079, %v5034, %v2610
      %v5067 = vsel %vm3079, %v5035, %v2612
      %v5068 = vsel %vm3079, %v5036, %v2614
      %v5069 = vsel %vm3079, %v5037, %v2616
      %v5070 = vsel %vm3079, %v5038, %v2618
      %v5071 = vsel %vm3079, %v5039, %v2620
      %v5072 = vsel %vm3079, %v5040, %v2622
      %v5073 = vsel %vm3079, %v5041, %v2624
      %v5074 = vsel %vm3079, %v5042, %v2626
      %v5075 = vsel %vm3079, %v5043, %v2628
      %v5076 = vsel %vm3079, %v5044, %v2630
      %v5077 = vsel %vm3079, %v5045, %v2632
      %v5078 = vsel %vm3079, %v5046, %v2634
      %v5079 = vsel %vm3079, %v5047, %v2636
      %v5080 = vsel %vm3079, %v5048, %v2638
      %v5081 = vsel %vm3079, %v5049, %v2640
      %v5082 = vsel %vm3079, %v5050, %v2642
      %v5083 = vsel %vm3079, %v5051, %v2644
      %v5084 = vsel %vm3079, %v5052, %v2646
      %v5085 = vsel %vm3079, %v5053, %v2648
      %v5086 = vsel %vm3079, %v5054, %v2650
      %v5087 = vsel %vm3079, %v5055, %v2652
      %v5088 = vsel %vm3079, %v5056, %v2654
      %v5089 = vsel %vm3079, %v5057, %v2656
      %v5090 = vsel %vm3079, %v5058, %v2658
      %v5091 = vsel %vm3079, %v5059, %v2660
      %v5092 = vsel %vm3112, %v5060, %v3751
      %v5093 = vsel %vm3112, %v5061, %v3753
      %v5094 = vsel %vm3112, %v5062, %v3755
      %v5095 = vsel %vm3112, %v5063, %v3757
      %v5096 = vsel %vm3112, %v5064, %v3759
      %v5097 = vsel %vm3112, %v5065, %v3761
      %v5098 = vsel %vm3112, %v5066, %v3763
      %v5099 = vsel %vm3112, %v5067, %v3765
      %v5100 = vsel %vm3112, %v5068, %v3767
      %v5101 = vsel %vm3112, %v5069, %v3769
      %v5102 = vsel %vm3112, %v5070, %v3771
      %v5103 = vsel %vm3112, %v5071, %v3773
      %v5104 = vsel %vm3112, %v5072, %v3775
      %v5105 = vsel %vm3112, %v5073, %v3777
      %v5106 = vsel %vm3112, %v5074, %v3779
      %v5107 = vsel %vm3112, %v5075, %v3781
      %v5108 = vsel %vm3112, %v5076, %v3783
      %v5109 = vsel %vm3112, %v5077, %v3785
      %v5110 = vsel %vm3112, %v5078, %v3787
      %v5111 = vsel %vm3112, %v5079, %v3789
      %v5112 = vsel %vm3112, %v5080, %v3791
      %v5113 = vsel %vm3112, %v5081, %v3793
      %v5114 = vsel %vm3112, %v5082, %v3795
      %v5115 = vsel %vm3112, %v5083, %v3797
      %v5116 = vsel %vm3112, %v5084, %v3799
      %v5117 = vsel %vm3112, %v5085, %v3801
      %v5118 = vsel %vm3112, %v5086, %v3803
      %v5119 = vsel %vm3112, %v5087, %v3805
      %v5120 = vsel %vm3112, %v5088, %v3807
      %v5121 = vsel %vm3112, %v5089, %v3809
      %v5122 = vsel %vm3112, %v5090, %v3811
      %v5123 = vsel %vm3112, %v5091, %v3813
      %v5124 = vsel %vm3145, %v5092, %v4767
      %v5125 = vsel %vm3145, %v5093, %v4769
      %v5126 = vsel %vm3145, %v5094, %v4771
      %v5127 = vsel %vm3145, %v5095, %v4773
      %v5128 = vsel %vm3145, %v5096, %v4775
      %v5129 = vsel %vm3145, %v5097, %v4777
      %v5130 = vsel %vm3145, %v5098, %v4779
      %v5131 = vsel %vm3145, %v5099, %v4781
      %v5132 = vsel %vm3145, %v5100, %v4783
      %v5133 = vsel %vm3145, %v5101, %v4785
      %v5134 = vsel %vm3145, %v5102, %v4787
      %v5135 = vsel %vm3145, %v5103, %v4789
      %v5136 = vsel %vm3145, %v5104, %v4791
      %v5137 = vsel %vm3145, %v5105, %v4793
      %v5138 = vsel %vm3145, %v5106, %v4795
      %v5139 = vsel %vm3145, %v5107, %v4797
      %v5140 = vsel %vm3145, %v5108, %v4799
      %v5141 = vsel %vm3145, %v5109, %v4801
      %v5142 = vsel %vm3145, %v5110, %v4803
      %v5143 = vsel %vm3145, %v5111, %v4805
      %v5144 = vsel %vm3145, %v5112, %v4807
      %v5145 = vsel %vm3145, %v5113, %v4809
      %v5146 = vsel %vm3145, %v5114, %v4811
      %v5147 = vsel %vm3145, %v5115, %v4813
      %v5148 = vsel %vm3145, %v5116, %v4815
      %v5149 = vsel %vm3145, %v5117, %v4817
      %v5150 = vsel %vm3145, %v5118, %v4819
      %v5151 = vsel %vm3145, %v5119, %v4821
      %v5152 = vsel %vm3145, %v5120, %v4823
      %v5153 = vsel %vm3145, %v5121, %v4825
      %v5154 = vsel %vm3145, %v5122, %v4827
      %v5155 = vsel %vm3145, %v5123, %v4829
      %v5156 = vsel %vm3178, %v5124, %v4863
      %v5157 = vsel %vm3178, %v5125, %v4865
      %v5158 = vsel %vm3178, %v5126, %v4867
      %v5159 = vsel %vm3178, %v5127, %v4869
      %v5160 = vsel %vm3178, %v5128, %v4871
      %v5161 = vsel %vm3178, %v5129, %v4873
      %v5162 = vsel %vm3178, %v5130, %v4875
      %v5163 = vsel %vm3178, %v5131, %v4877
      %v5164 = vsel %vm3178, %v5132, %v4879
      %v5165 = vsel %vm3178, %v5133, %v4881
      %v5166 = vsel %vm3178, %v5134, %v4883
      %v5167 = vsel %vm3178, %v5135, %v4885
      %v5168 = vsel %vm3178, %v5136, %v4887
      %v5169 = vsel %vm3178, %v5137, %v4889
      %v5170 = vsel %vm3178, %v5138, %v4891
      %v5171 = vsel %vm3178, %v5139, %v4893
      %v5172 = vsel %vm3178, %v5140, %v4895
      %v5173 = vsel %vm3178, %v5141, %v4897
      %v5174 = vsel %vm3178, %v5142, %v4899
      %v5175 = vsel %vm3178, %v5143, %v4901
      %v5176 = vsel %vm3178, %v5144, %v4903
      %v5177 = vsel %vm3178, %v5145, %v4905
      %v5178 = vsel %vm3178, %v5146, %v4907
      %v5179 = vsel %vm3178, %v5147, %v4909
      %v5180 = vsel %vm3178, %v5148, %v4911
      %v5181 = vsel %vm3178, %v5149, %v4913
      %v5182 = vsel %vm3178, %v5150, %v4915
      %v5183 = vsel %vm3178, %v5151, %v4917
      %v5184 = vsel %vm3178, %v5152, %v4919
      %v5185 = vsel %vm3178, %v5153, %v4921
      %v5186 = vsel %vm3178, %v5154, %v4923
      %v5187 = vsel %vm3178, %v5155, %v4925
      %v5188 = vsel %vm3211, %v5156, %v2794
      %v5189 = vsel %vm3211, %v5157, %v2796
      %v5190 = vsel %vm3211, %v5158, %v2798
      %v5191 = vsel %vm3211, %v5159, %v2800
      %v5192 = vsel %vm3211, %v5160, %v2802
      %v5193 = vsel %vm3211, %v5161, %v2804
      %v5194 = vsel %vm3211, %v5162, %v2806
      %v5195 = vsel %vm3211, %v5163, %v2808
      %v5196 = vsel %vm3211, %v5164, %v2810
      %v5197 = vsel %vm3211, %v5165, %v2812
      %v5198 = vsel %vm3211, %v5166, %v2814
      %v5199 = vsel %vm3211, %v5167, %v2816
      %v5200 = vsel %vm3211, %v5168, %v2818
      %v5201 = vsel %vm3211, %v5169, %v2820
      %v5202 = vsel %vm3211, %v5170, %v2822
      %v5203 = vsel %vm3211, %v5171, %v2824
      %v5204 = vsel %vm3211, %v5172, %v2826
      %v5205 = vsel %vm3211, %v5173, %v2828
      %v5206 = vsel %vm3211, %v5174, %v2830
      %v5207 = vsel %vm3211, %v5175, %v2832
      %v5208 = vsel %vm3211, %v5176, %v2834
      %v5209 = vsel %vm3211, %v5177, %v2836
      %v5210 = vsel %vm3211, %v5178, %v2838
      %v5211 = vsel %vm3211, %v5179, %v2840
      %v5212 = vsel %vm3211, %v5180, %v2842
      %v5213 = vsel %vm3211, %v5181, %v2844
      %v5214 = vsel %vm3211, %v5182, %v2846
      %v5215 = vsel %vm3211, %v5183, %v2848
      %v5216 = vsel %vm3211, %v5184, %v2850
      %v5217 = vsel %vm3211, %v5185, %v2852
      %v5218 = vsel %vm3211, %v5186, %v4959
      %v5219 = vsel %vm3211, %v5187, %v4961
      %v5221 = vsel %vm3247, %v5188, 0
      %v5224 = vsel %vm3247, %v5189, 0
      %v5227 = vsel %vm3247, %v5190, 0
      %v5230 = vsel %vm3247, %v5191, 0
      %v5233 = vsel %vm3247, %v5192, 0
      %v5236 = vsel %vm3247, %v5193, 0
      %v5239 = vsel %vm3247, %v5194, 0
      %v5242 = vsel %vm3247, %v5195, 0
      %v5245 = vsel %vm3247, %v5196, 0
      %v5248 = vsel %vm3247, %v5197, 0
      %v5251 = vsel %vm3247, %v5198, 0
      %v5254 = vsel %vm3247, %v5199, 0
      %v5257 = vsel %vm3247, %v5200, 0
      %v5260 = vsel %vm3247, %v5201, 0
      %v5263 = vsel %vm3247, %v5202, 0
      %v5266 = vsel %vm3247, %v5203, 0
      %v5269 = vsel %vm3247, %v5204, 0
      %v5272 = vsel %vm3247, %v5205, 0
      %v5275 = vsel %vm3247, %v5206, 0
      %v5278 = vsel %vm3247, %v5207, 0
      %v5281 = vsel %vm3247, %v5208, 0
      %v5284 = vsel %vm3247, %v5209, 0
      %v5287 = vsel %vm3247, %v5210, 0
      %v5290 = vsel %vm3247, %v5211, 0
      %v5293 = vsel %vm3247, %v5212, 0
      %v5296 = vsel %vm3247, %v5213, 0
      %v5299 = vsel %vm3247, %v5214, 0
      %v5302 = vsel %vm3247, %v5215, 0
      %v5305 = vsel %vm3247, %v5216, 0
      %v5308 = vsel %vm3247, %v5217, 0
      %v5311 = vsel %vm3247, %v5218, 0
      %v5314 = vsel %vm3247, %v5219, 0
      %5316 = vmatpush.msra.mxu0 0.0
      %5317 = vmatpush.msra.mxu0 0.0
      %5318 = vmatpush.msra.mxu0 0.0
      %5319 = vmatpush.msra.mxu0 0.0
      %5320 = vmatpush.msra.mxu0 0.0
      %5321 = vmatpush.msra.mxu0 0.0
      %5322 = vmatpush.msra.mxu0 0.0
      %5323 = vmatpush.msra.mxu0 0.0
      %5324 = vmatpush.msra.mxu0 0.0
      %5325 = vmatpush.msra.mxu0 0.0
      %5326 = vmatpush.msra.mxu0 0.0
      %5327 = vmatpush.msra.mxu0 %v3345
      %5328 = vmatpush.msra.mxu0 %v2176
      %5329 = vmatpush.msra.mxu0 %v2175
      %5330 = vmatpush.msra.mxu0 %v2174
      %5331 = vmatpush.msra.mxu0 %v2173
      %5332 = vmatmul.f32.gmra.mxu0 %v5221
      %v5333 = vpop.f32.mrf.mxu0
      %v5334 = vadd.f32 %v3245, %v5333
      %5335 = vmatmul.f32.gmra.mxu0 %v5224
      %v5336 = vpop.f32.mrf.mxu0
      %v5337 = vadd.f32 %v3245, %v5336
      %5338 = vmatmul.f32.gmra.mxu0 %v5227
      %v5339 = vpop.f32.mrf.mxu0
      %v5340 = vadd.f32 %v3245, %v5339
      %5341 = vmatmul.f32.gmra.mxu0 %v5230
      %v5342 = vpop.f32.mrf.mxu0
      %v5343 = vadd.f32 %v3245, %v5342
      %5344 = vmatmul.f32.gmra.mxu0 %v5233
      %v5345 = vpop.f32.mrf.mxu0
      %v5346 = vadd.f32 %v3245, %v5345
      %5347 = vmatmul.f32.gmra.mxu0 %v5236
      %v5348 = vpop.f32.mrf.mxu0
      %v5349 = vadd.f32 %v3245, %v5348
      %5350 = vmatmul.f32.gmra.mxu0 %v5239
      %v5351 = vpop.f32.mrf.mxu0
      %v5352 = vadd.f32 %v3245, %v5351
      %5353 = vmatmul.f32.gmra.mxu0 %v5242
      %v5354 = vpop.f32.mrf.mxu0
      %v5355 = vadd.f32 %v3245, %v5354
      %5356 = vmatmul.f32.gmra.mxu0 %v5245
      %v5357 = vpop.f32.mrf.mxu0
      %v5358 = vadd.f32 %v3245, %v5357
      %5359 = vmatmul.f32.gmra.mxu0 %v5248
      %v5360 = vpop.f32.mrf.mxu0
      %v5361 = vadd.f32 %v3245, %v5360
      %5362 = vmatmul.f32.gmra.mxu0 %v5251
      %v5363 = vpop.f32.mrf.mxu0
      %v5364 = vadd.f32 %v3245, %v5363
      %5365 = vmatmul.f32.gmra.mxu0 %v5254
      %v5366 = vpop.f32.mrf.mxu0
      %v5367 = vadd.f32 %v3245, %v5366
      %5368 = vmatmul.f32.gmra.mxu0 %v5257
      %v5369 = vpop.f32.mrf.mxu0
      %v5370 = vadd.f32 %v3245, %v5369
      %5371 = vmatmul.f32.gmra.mxu0 %v5260
      %v5372 = vpop.f32.mrf.mxu0
      %v5373 = vadd.f32 %v3245, %v5372
      %5374 = vmatmul.f32.gmra.mxu0 %v5263
      %v5375 = vpop.f32.mrf.mxu0
      %v5376 = vadd.f32 %v3245, %v5375
      %5377 = vmatmul.f32.gmra.mxu0 %v5266
      %v5378 = vpop.f32.mrf.mxu0
      %v5379 = vadd.f32 %v3245, %v5378
      %5380 = vmatmul.f32.gmra.mxu0 %v5269
      %v5381 = vpop.f32.mrf.mxu0
      %v5382 = vadd.f32 %v3245, %v5381
      %5383 = vmatmul.f32.gmra.mxu0 %v5272
      %v5384 = vpop.f32.mrf.mxu0
      %v5385 = vadd.f32 %v3245, %v5384
      %5386 = vmatmul.f32.gmra.mxu0 %v5275
      %v5387 = vpop.f32.mrf.mxu0
      %v5388 = vadd.f32 %v3245, %v5387
      %5389 = vmatmul.f32.gmra.mxu0 %v5278
      %v5390 = vpop.f32.mrf.mxu0
      %v5391 = vadd.f32 %v3245, %v5390
      %5392 = vmatmul.f32.gmra.mxu0 %v5281
      %v5393 = vpop.f32.mrf.mxu0
      %v5394 = vadd.f32 %v3245, %v5393
      %5395 = vmatmul.f32.gmra.mxu0 %v5284
      %v5396 = vpop.f32.mrf.mxu0
      %v5397 = vadd.f32 %v3245, %v5396
      %5398 = vmatmul.f32.gmra.mxu0 %v5287
      %v5399 = vpop.f32.mrf.mxu0
      %v5400 = vadd.f32 %v3245, %v5399
      %5401 = vmatmul.f32.gmra.mxu0 %v5290
      %v5402 = vpop.f32.mrf.mxu0
      %v5403 = vadd.f32 %v3245, %v5402
      %5404 = vmatmul.f32.gmra.mxu0 %v5293
      %v5405 = vpop.f32.mrf.mxu0
      %v5406 = vadd.f32 %v3245, %v5405
      %5407 = vmatmul.f32.gmra.mxu0 %v5296
      %v5408 = vpop.f32.mrf.mxu0
      %v5409 = vadd.f32 %v3245, %v5408
      %5410 = vmatmul.f32.gmra.mxu0 %v5299
      %v5411 = vpop.f32.mrf.mxu0
      %v5412 = vadd.f32 %v3245, %v5411
      %5413 = vmatmul.f32.gmra.mxu0 %v5302
      %v5414 = vpop.f32.mrf.mxu0
      %v5415 = vadd.f32 %v3245, %v5414
      %5416 = vmatmul.f32.gmra.mxu0 %v5305
      %v5417 = vpop.f32.mrf.mxu0
      %v5418 = vadd.f32 %v3245, %v5417
      %5419 = vmatmul.f32.gmra.mxu0 %v5308
      %v5420 = vpop.f32.mrf.mxu0
      %v5421 = vadd.f32 %v3245, %v5420
      %5422 = vmatmul.f32.gmra.mxu0 %v5311
      %v5423 = vpop.f32.mrf.mxu0
      %v5424 = vadd.f32 %v3245, %v5423
      %5425 = vmatmul.f32.gmra.mxu0 %v5314
      %v5426 = vpop.f32.mrf.mxu0
      %v5427 = vadd.f32 %v3245, %v5426
      %5428 = vdwg.mxu0
      %5429 = vxpose.xlu0.b32.start [1/16] %v5334, 128
      %5430 = vxpose.xlu0.b32.cont [2/16] %v5337, 128
      %5431 = vxpose.xlu0.b32.cont [3/16] %v5340, 128
      %5432 = vxpose.xlu0.b32.cont [4/16] %v5343, 128
      %5433 = vxpose.xlu0.b32.cont [5/16] %v5346, 128
      %5434 = vxpose.xlu0.b32.cont [6/16] %v5349, 128
      %5435 = vxpose.xlu0.b32.cont [7/16] %v5352, 128
      %5436 = vxpose.xlu0.b32.cont [8/16] %v5355, 128
      %5437 = vxpose.xlu0.b32.cont [9/16] %v5358, 128
      %5438 = vxpose.xlu0.b32.cont [10/16] %v5361, 128
      %5439 = vxpose.xlu0.b32.cont [11/16] %v5364, 128
      %5440 = vxpose.xlu0.b32.cont [12/16] %v5367, 128
      %5441 = vxpose.xlu0.b32.cont [13/16] %v5370, 128
      %5442 = vxpose.xlu0.b32.cont [14/16] %v5373, 128
      %5443 = vxpose.xlu0.b32.cont [15/16] %v5376, 128
      %5444 = vxpose.xlu0.b32.end [16/16] %v5379, 128
      %v5445 = vpop.trf.xlu0
      %v5446 = vpop.trf.xlu0
      %v5447 = vpop.trf.xlu0
      %v5448 = vpop.trf.xlu0
      %v5449 = vpop.trf.xlu0
      %v5450 = vpop.trf.xlu0
      %v5451 = vpop.trf.xlu0
      %v5452 = vpop.trf.xlu0
      %v5453 = vpop.trf.xlu0
      %v5454 = vpop.trf.xlu0
      %v5455 = vpop.trf.xlu0
      %v5456 = vpop.trf.xlu0
      %v5457 = vpop.trf.xlu0
      %v5458 = vpop.trf.xlu0
      %v5459 = vpop.trf.xlu0
      %v5460 = vpop.trf.xlu0
      %5461 = vxpose.xlu0.b32.start [1/16] %v5382, 128
      %5462 = vxpose.xlu0.b32.cont [2/16] %v5385, 128
      %5463 = vxpose.xlu0.b32.cont [3/16] %v5388, 128
      %5464 = vxpose.xlu0.b32.cont [4/16] %v5391, 128
      %5465 = vxpose.xlu0.b32.cont [5/16] %v5394, 128
      %5466 = vxpose.xlu0.b32.cont [6/16] %v5397, 128
      %5467 = vxpose.xlu0.b32.cont [7/16] %v5400, 128
      %5468 = vxpose.xlu0.b32.cont [8/16] %v5403, 128
      %5469 = vxpose.xlu0.b32.cont [9/16] %v5406, 128
      %5470 = vxpose.xlu0.b32.cont [10/16] %v5409, 128
      %5471 = vxpose.xlu0.b32.cont [11/16] %v5412, 128
      %5472 = vxpose.xlu0.b32.cont [12/16] %v5415, 128
      %5473 = vxpose.xlu0.b32.cont [13/16] %v5418, 128
      %5474 = vxpose.xlu0.b32.cont [14/16] %v5421, 128
      %5475 = vxpose.xlu0.b32.cont [15/16] %v5424, 128
      %5476 = vxpose.xlu0.b32.end [16/16] %v5427, 128
      %v5477 = vpop.trf.xlu0
      %v5478 = vpop.trf.xlu0
      %v5479 = vpop.trf.xlu0
      %v5480 = vpop.trf.xlu0
      %v5481 = vpop.trf.xlu0
      %v5482 = vpop.trf.xlu0
      %v5483 = vpop.trf.xlu0
      %v5484 = vpop.trf.xlu0
      %v5485 = vpop.trf.xlu0
      %v5486 = vpop.trf.xlu0
      %v5487 = vpop.trf.xlu0
      %v5488 = vpop.trf.xlu0
      %v5489 = vpop.trf.xlu0
      %v5490 = vpop.trf.xlu0
      %v5491 = vpop.trf.xlu0
      %v5492 = vpop.trf.xlu0
      %s5493 = scalar_lea.vmem %s443, 32
      %5494 = vst [vmem:[%s5493] sm:$0xff] %v5445
      %5495 = vst [vmem:[%s5493 + $0x8] sm:$0xff] %v5477
      %5496 = vrot.lane.b32.xlu0 %v1123, 124
      %v5497 = vpop.permute.xlu0 %5496
      %5498 = vrot.lane.b32.xlu0 %v1124, 124
      %v5499 = vpop.permute.xlu0 %5498
      %5502 = vrot.lane.b32.xlu0 %v1814, 8
      %v5503 = vpop.permute.xlu0 %5502
      %5504 = vrot.lane.b32.xlu0 %v1815, 8
      %v5505 = vpop.permute.xlu0 %5504
      %5506 = vrot.lane.b32.xlu0 %v1816, 8
      %v5507 = vpop.permute.xlu0 %5506
      %5508 = vrot.lane.b32.xlu0 %v1817, 8
      %v5509 = vpop.permute.xlu0 %5508
      %5510 = vrot.lane.b32.xlu0 %v1818, 8
      %v5511 = vpop.permute.xlu0 %5510
      %5512 = vrot.lane.b32.xlu0 %v1819, 8
      %v5513 = vpop.permute.xlu0 %5512
      %5514 = vrot.lane.b32.xlu0 %v1820, 8
      %v5515 = vpop.permute.xlu0 %5514
      %5516 = vrot.lane.b32.xlu0 %v1821, 8
      %v5517 = vpop.permute.xlu0 %5516
      %5518 = vrot.lane.b32.xlu0 %v1822, 8
      %v5519 = vpop.permute.xlu0 %5518
      %5520 = vrot.lane.b32.xlu0 %v1823, 8
      %v5521 = vpop.permute.xlu0 %5520
      %5522 = vrot.lane.b32.xlu0 %v1824, 8
      %v5523 = vpop.permute.xlu0 %5522
      %5524 = vrot.lane.b32.xlu0 %v1825, 8
      %v5525 = vpop.permute.xlu0 %5524
      %5526 = vrot.lane.b32.xlu0 %v1826, 8
      %v5527 = vpop.permute.xlu0 %5526
      %5528 = vrot.lane.b32.xlu0 %v1827, 8
      %v5529 = vpop.permute.xlu0 %5528
      %5530 = vrot.lane.b32.xlu0 %v1828, 8
      %v5531 = vpop.permute.xlu0 %5530
      %5532 = vrot.lane.b32.xlu0 %v1829, 8
      %v5533 = vpop.permute.xlu0 %5532
      %5534 = vrot.lane.b32.xlu0 %v1830, 8
      %v5535 = vpop.permute.xlu0 %5534
      %5536 = vrot.lane.b32.xlu0 %v1831, 8
      %v5537 = vpop.permute.xlu0 %5536
      %5538 = vrot.lane.b32.xlu0 %v1832, 8
      %v5539 = vpop.permute.xlu0 %5538
      %5540 = vrot.lane.b32.xlu0 %v1833, 8
      %v5541 = vpop.permute.xlu0 %5540
      %5542 = vrot.lane.b32.xlu0 %v1834, 8
      %v5543 = vpop.permute.xlu0 %5542
      %5544 = vrot.lane.b32.xlu0 %v1835, 8
      %v5545 = vpop.permute.xlu0 %5544
      %5546 = vrot.lane.b32.xlu0 %v1836, 8
      %v5547 = vpop.permute.xlu0 %5546
      %5548 = vrot.lane.b32.xlu0 %v1837, 8
      %v5549 = vpop.permute.xlu0 %5548
      %5550 = vrot.lane.b32.xlu0 %v1838, 8
      %v5551 = vpop.permute.xlu0 %5550
      %5552 = vrot.lane.b32.xlu0 %v1839, 8
      %v5553 = vpop.permute.xlu0 %5552
      %5554 = vrot.lane.b32.xlu0 %v1840, 8
      %v5555 = vpop.permute.xlu0 %5554
      %5556 = vrot.lane.b32.xlu0 %v1841, 8
      %v5557 = vpop.permute.xlu0 %5556
      %5558 = vrot.lane.b32.xlu0 %v1842, 8
      %v5559 = vpop.permute.xlu0 %5558
      %5560 = vrot.lane.b32.xlu0 %v1843, 8
      %v5561 = vpop.permute.xlu0 %5560
      %5562 = vrot.lane.b32.xlu0 %v1844, 8
      %v5563 = vpop.permute.xlu0 %5562
      %5564 = vrot.lane.b32.xlu0 %v1845, 8
      %v5565 = vpop.permute.xlu0 %5564
      %5598 = vrot.lane.b32.xlu0 %v1814, 16
      %v5599 = vpop.permute.xlu0 %5598
      %5600 = vrot.lane.b32.xlu0 %v1815, 16
      %v5601 = vpop.permute.xlu0 %5600
      %5602 = vrot.lane.b32.xlu0 %v1816, 16
      %v5603 = vpop.permute.xlu0 %5602
      %5604 = vrot.lane.b32.xlu0 %v1817, 16
      %v5605 = vpop.permute.xlu0 %5604
      %5606 = vrot.lane.b32.xlu0 %v1818, 16
      %v5607 = vpop.permute.xlu0 %5606
      %5608 = vrot.lane.b32.xlu0 %v1819, 16
      %v5609 = vpop.permute.xlu0 %5608
      %5610 = vrot.lane.b32.xlu0 %v1820, 16
      %v5611 = vpop.permute.xlu0 %5610
      %5612 = vrot.lane.b32.xlu0 %v1821, 16
      %v5613 = vpop.permute.xlu0 %5612
      %5614 = vrot.lane.b32.xlu0 %v1822, 16
      %v5615 = vpop.permute.xlu0 %5614
      %5616 = vrot.lane.b32.xlu0 %v1823, 16
      %v5617 = vpop.permute.xlu0 %5616
      %5618 = vrot.lane.b32.xlu0 %v1824, 16
      %v5619 = vpop.permute.xlu0 %5618
      %5620 = vrot.lane.b32.xlu0 %v1825, 16
      %v5621 = vpop.permute.xlu0 %5620
      %5622 = vrot.lane.b32.xlu0 %v1826, 16
      %v5623 = vpop.permute.xlu0 %5622
      %5624 = vrot.lane.b32.xlu0 %v1827, 16
      %v5625 = vpop.permute.xlu0 %5624
      %5626 = vrot.lane.b32.xlu0 %v1828, 16
      %v5627 = vpop.permute.xlu0 %5626
      %5628 = vrot.lane.b32.xlu0 %v1829, 16
      %v5629 = vpop.permute.xlu0 %5628
      %5630 = vrot.lane.b32.xlu0 %v1830, 16
      %v5631 = vpop.permute.xlu0 %5630
      %5632 = vrot.lane.b32.xlu0 %v1831, 16
      %v5633 = vpop.permute.xlu0 %5632
      %5634 = vrot.lane.b32.xlu0 %v1832, 16
      %v5635 = vpop.permute.xlu0 %5634
      %5636 = vrot.lane.b32.xlu0 %v1833, 16
      %v5637 = vpop.permute.xlu0 %5636
      %5638 = vrot.lane.b32.xlu0 %v1834, 16
      %v5639 = vpop.permute.xlu0 %5638
      %5640 = vrot.lane.b32.xlu0 %v1835, 16
      %v5641 = vpop.permute.xlu0 %5640
      %5642 = vrot.lane.b32.xlu0 %v1836, 16
      %v5643 = vpop.permute.xlu0 %5642
      %5644 = vrot.lane.b32.xlu0 %v1837, 16
      %v5645 = vpop.permute.xlu0 %5644
      %5646 = vrot.lane.b32.xlu0 %v1838, 16
      %v5647 = vpop.permute.xlu0 %5646
      %5648 = vrot.lane.b32.xlu0 %v1839, 16
      %v5649 = vpop.permute.xlu0 %5648
      %5650 = vrot.lane.b32.xlu0 %v1840, 16
      %v5651 = vpop.permute.xlu0 %5650
      %5652 = vrot.lane.b32.xlu0 %v1841, 16
      %v5653 = vpop.permute.xlu0 %5652
      %5654 = vrot.lane.b32.xlu0 %v1842, 16
      %v5655 = vpop.permute.xlu0 %5654
      %5656 = vrot.lane.b32.xlu0 %v1843, 16
      %v5657 = vpop.permute.xlu0 %5656
      %5658 = vrot.lane.b32.xlu0 %v1844, 16
      %v5659 = vpop.permute.xlu0 %5658
      %5660 = vrot.lane.b32.xlu0 %v1845, 16
      %v5661 = vpop.permute.xlu0 %5660
      %5694 = vrot.lane.b32.xlu0 %v1125, 20
      %v5695 = vpop.permute.xlu0 %5694
      %5696 = vrot.lane.b32.xlu0 %v1126, 20
      %v5697 = vpop.permute.xlu0 %5696
      %5702 = vrot.lane.b32.xlu0 %v1816, 32
      %v5703 = vpop.permute.xlu0 %5702
      %5704 = vrot.lane.b32.xlu0 %v1817, 32
      %v5705 = vpop.permute.xlu0 %5704
      %5706 = vrot.lane.b32.xlu0 %v1818, 32
      %v5707 = vpop.permute.xlu0 %5706
      %5708 = vrot.lane.b32.xlu0 %v1819, 32
      %v5709 = vpop.permute.xlu0 %5708
      %5710 = vrot.lane.b32.xlu0 %v1820, 32
      %v5711 = vpop.permute.xlu0 %5710
      %5712 = vrot.lane.b32.xlu0 %v1821, 32
      %v5713 = vpop.permute.xlu0 %5712
      %5714 = vrot.lane.b32.xlu0 %v1822, 32
      %v5715 = vpop.permute.xlu0 %5714
      %5716 = vrot.lane.b32.xlu0 %v1823, 32
      %v5717 = vpop.permute.xlu0 %5716
      %5718 = vrot.lane.b32.xlu0 %v1824, 32
      %v5719 = vpop.permute.xlu0 %5718
      %5720 = vrot.lane.b32.xlu0 %v1825, 32
      %v5721 = vpop.permute.xlu0 %5720
      %5722 = vrot.lane.b32.xlu0 %v1826, 32
      %v5723 = vpop.permute.xlu0 %5722
      %5724 = vrot.lane.b32.xlu0 %v1827, 32
      %v5725 = vpop.permute.xlu0 %5724
      %5726 = vrot.lane.b32.xlu0 %v1828, 32
      %v5727 = vpop.permute.xlu0 %5726
      %5728 = vrot.lane.b32.xlu0 %v1829, 32
      %v5729 = vpop.permute.xlu0 %5728
      %5730 = vrot.lane.b32.xlu0 %v1830, 32
      %v5731 = vpop.permute.xlu0 %5730
      %5732 = vrot.lane.b32.xlu0 %v1831, 32
      %v5733 = vpop.permute.xlu0 %5732
      %5734 = vrot.lane.b32.xlu0 %v1832, 32
      %v5735 = vpop.permute.xlu0 %5734
      %5736 = vrot.lane.b32.xlu0 %v1833, 32
      %v5737 = vpop.permute.xlu0 %5736
      %5738 = vrot.lane.b32.xlu0 %v1834, 32
      %v5739 = vpop.permute.xlu0 %5738
      %5740 = vrot.lane.b32.xlu0 %v1835, 32
      %v5741 = vpop.permute.xlu0 %5740
      %5742 = vrot.lane.b32.xlu0 %v1836, 32
      %v5743 = vpop.permute.xlu0 %5742
      %5744 = vrot.lane.b32.xlu0 %v1837, 32
      %v5745 = vpop.permute.xlu0 %5744
      %5746 = vrot.lane.b32.xlu0 %v1838, 32
      %v5747 = vpop.permute.xlu0 %5746
      %5748 = vrot.lane.b32.xlu0 %v1839, 32
      %v5749 = vpop.permute.xlu0 %5748
      %5750 = vrot.lane.b32.xlu0 %v1840, 32
      %v5751 = vpop.permute.xlu0 %5750
      %5752 = vrot.lane.b32.xlu0 %v1841, 32
      %v5753 = vpop.permute.xlu0 %5752
      %5754 = vrot.lane.b32.xlu0 %v1842, 32
      %v5755 = vpop.permute.xlu0 %5754
      %5756 = vrot.lane.b32.xlu0 %v1843, 32
      %v5757 = vpop.permute.xlu0 %5756
      %5758 = vrot.lane.b32.xlu0 %v1844, 32
      %v5759 = vpop.permute.xlu0 %5758
      %5760 = vrot.lane.b32.xlu0 %v1845, 32
      %v5761 = vpop.permute.xlu0 %5760
      %5762 = vrot.lane.b32.xlu0 %v1846, 32
      %v5763 = vpop.permute.xlu0 %5762
      %5764 = vrot.lane.b32.xlu0 %v1847, 32
      %v5765 = vpop.permute.xlu0 %5764
      %v5798 = vsel %vm482, %v1093, %v2312
      %v5799 = vsel %vm482, %v1094, %v2314
      %v5800 = vsel %vm482, %v1095, %v2316
      %v5801 = vsel %vm482, %v1096, %v2318
      %v5802 = vsel %vm482, %v1097, %v2320
      %v5803 = vsel %vm482, %v1098, %v2322
      %v5804 = vsel %vm482, %v1099, %v2324
      %v5805 = vsel %vm482, %v1100, %v2326
      %v5806 = vsel %vm482, %v1101, %v2328
      %v5807 = vsel %vm482, %v1102, %v2330
      %v5808 = vsel %vm482, %v1103, %v2332
      %v5809 = vsel %vm482, %v1104, %v2334
      %v5810 = vsel %vm482, %v1105, %v2336
      %v5811 = vsel %vm482, %v1106, %v2338
      %v5812 = vsel %vm482, %v1107, %v2340
      %v5813 = vsel %vm482, %v1108, %v2342
      %v5814 = vsel %vm482, %v1109, %v2344
      %v5815 = vsel %vm482, %v1110, %v2346
      %v5816 = vsel %vm482, %v1111, %v2348
      %v5817 = vsel %vm482, %v1112, %v2350
      %v5818 = vsel %vm482, %v1113, %v2352
      %v5819 = vsel %vm482, %v1114, %v2354
      %v5820 = vsel %vm482, %v1115, %v2356
      %v5821 = vsel %vm482, %v1116, %v2358
      %v5822 = vsel %vm482, %v1117, %v2360
      %v5823 = vsel %vm482, %v1118, %v2362
      %v5824 = vsel %vm482, %v1119, %v2364
      %v5825 = vsel %vm482, %v1120, %v2366
      %v5826 = vsel %vm482, %v1121, %v2368
      %v5827 = vsel %vm482, %v1122, %v2370
      %v5828 = vsel %vm482, %v1123, %v5497
      %v5829 = vsel %vm482, %v1124, %v5499
      %v5830 = vsel %vm3013, %v5798, %v5503
      %v5831 = vsel %vm3013, %v5799, %v5505
      %v5832 = vsel %vm3013, %v5800, %v5507
      %v5833 = vsel %vm3013, %v5801, %v5509
      %v5834 = vsel %vm3013, %v5802, %v5511
      %v5835 = vsel %vm3013, %v5803, %v5513
      %v5836 = vsel %vm3013, %v5804, %v5515
      %v5837 = vsel %vm3013, %v5805, %v5517
      %v5838 = vsel %vm3013, %v5806, %v5519
      %v5839 = vsel %vm3013, %v5807, %v5521
      %v5840 = vsel %vm3013, %v5808, %v5523
      %v5841 = vsel %vm3013, %v5809, %v5525
      %v5842 = vsel %vm3013, %v5810, %v5527
      %v5843 = vsel %vm3013, %v5811, %v5529
      %v5844 = vsel %vm3013, %v5812, %v5531
      %v5845 = vsel %vm3013, %v5813, %v5533
      %v5846 = vsel %vm3013, %v5814, %v5535
      %v5847 = vsel %vm3013, %v5815, %v5537
      %v5848 = vsel %vm3013, %v5816, %v5539
      %v5849 = vsel %vm3013, %v5817, %v5541
      %v5850 = vsel %vm3013, %v5818, %v5543
      %v5851 = vsel %vm3013, %v5819, %v5545
      %v5852 = vsel %vm3013, %v5820, %v5547
      %v5853 = vsel %vm3013, %v5821, %v5549
      %v5854 = vsel %vm3013, %v5822, %v5551
      %v5855 = vsel %vm3013, %v5823, %v5553
      %v5856 = vsel %vm3013, %v5824, %v5555
      %v5857 = vsel %vm3013, %v5825, %v5557
      %v5858 = vsel %vm3013, %v5826, %v5559
      %v5859 = vsel %vm3013, %v5827, %v5561
      %v5860 = vsel %vm3013, %v5828, %v5563
      %v5861 = vsel %vm3013, %v5829, %v5565
      %v5862 = vsel %vm3046, %v5830, %v3751
      %v5863 = vsel %vm3046, %v5831, %v3753
      %v5864 = vsel %vm3046, %v5832, %v3755
      %v5865 = vsel %vm3046, %v5833, %v3757
      %v5866 = vsel %vm3046, %v5834, %v3759
      %v5867 = vsel %vm3046, %v5835, %v3761
      %v5868 = vsel %vm3046, %v5836, %v3763
      %v5869 = vsel %vm3046, %v5837, %v3765
      %v5870 = vsel %vm3046, %v5838, %v3767
      %v5871 = vsel %vm3046, %v5839, %v3769
      %v5872 = vsel %vm3046, %v5840, %v3771
      %v5873 = vsel %vm3046, %v5841, %v3773
      %v5874 = vsel %vm3046, %v5842, %v3775
      %v5875 = vsel %vm3046, %v5843, %v3777
      %v5876 = vsel %vm3046, %v5844, %v3779
      %v5877 = vsel %vm3046, %v5845, %v3781
      %v5878 = vsel %vm3046, %v5846, %v3783
      %v5879 = vsel %vm3046, %v5847, %v3785
      %v5880 = vsel %vm3046, %v5848, %v3787
      %v5881 = vsel %vm3046, %v5849, %v3789
      %v5882 = vsel %vm3046, %v5850, %v3791
      %v5883 = vsel %vm3046, %v5851, %v3793
      %v5884 = vsel %vm3046, %v5852, %v3795
      %v5885 = vsel %vm3046, %v5853, %v3797
      %v5886 = vsel %vm3046, %v5854, %v3799
      %v5887 = vsel %vm3046, %v5855, %v3801
      %v5888 = vsel %vm3046, %v5856, %v3803
      %v5889 = vsel %vm3046, %v5857, %v3805
      %v5890 = vsel %vm3046, %v5858, %v3807
      %v5891 = vsel %vm3046, %v5859, %v3809
      %v5892 = vsel %vm3046, %v5860, %v3811
      %v5893 = vsel %vm3046, %v5861, %v3813
      %v5894 = vsel %vm3079, %v5862, %v4573
      %v5895 = vsel %vm3079, %v5863, %v4575
      %v5896 = vsel %vm3079, %v5864, %v4577
      %v5897 = vsel %vm3079, %v5865, %v4579
      %v5898 = vsel %vm3079, %v5866, %v4581
      %v5899 = vsel %vm3079, %v5867, %v4583
      %v5900 = vsel %vm3079, %v5868, %v4585
      %v5901 = vsel %vm3079, %v5869, %v4587
      %v5902 = vsel %vm3079, %v5870, %v4589
      %v5903 = vsel %vm3079, %v5871, %v4591
      %v5904 = vsel %vm3079, %v5872, %v4593
      %v5905 = vsel %vm3079, %v5873, %v4595
      %v5906 = vsel %vm3079, %v5874, %v4597
      %v5907 = vsel %vm3079, %v5875, %v4599
      %v5908 = vsel %vm3079, %v5876, %v4601
      %v5909 = vsel %vm3079, %v5877, %v4603
      %v5910 = vsel %vm3079, %v5878, %v4605
      %v5911 = vsel %vm3079, %v5879, %v4607
      %v5912 = vsel %vm3079, %v5880, %v4609
      %v5913 = vsel %vm3079, %v5881, %v4611
      %v5914 = vsel %vm3079, %v5882, %v4613
      %v5915 = vsel %vm3079, %v5883, %v4615
      %v5916 = vsel %vm3079, %v5884, %v4617
      %v5917 = vsel %vm3079, %v5885, %v4619
      %v5918 = vsel %vm3079, %v5886, %v4621
      %v5919 = vsel %vm3079, %v5887, %v4623
      %v5920 = vsel %vm3079, %v5888, %v4625
      %v5921 = vsel %vm3079, %v5889, %v4627
      %v5922 = vsel %vm3079, %v5890, %v4629
      %v5923 = vsel %vm3079, %v5891, %v4631
      %v5924 = vsel %vm3079, %v5892, %v4633
      %v5925 = vsel %vm3079, %v5893, %v4635
      %v5926 = vsel %vm3112, %v5894, %v5599
      %v5927 = vsel %vm3112, %v5895, %v5601
      %v5928 = vsel %vm3112, %v5896, %v5603
      %v5929 = vsel %vm3112, %v5897, %v5605
      %v5930 = vsel %vm3112, %v5898, %v5607
      %v5931 = vsel %vm3112, %v5899, %v5609
      %v5932 = vsel %vm3112, %v5900, %v5611
      %v5933 = vsel %vm3112, %v5901, %v5613
      %v5934 = vsel %vm3112, %v5902, %v5615
      %v5935 = vsel %vm3112, %v5903, %v5617
      %v5936 = vsel %vm3112, %v5904, %v5619
      %v5937 = vsel %vm3112, %v5905, %v5621
      %v5938 = vsel %vm3112, %v5906, %v5623
      %v5939 = vsel %vm3112, %v5907, %v5625
      %v5940 = vsel %vm3112, %v5908, %v5627
      %v5941 = vsel %vm3112, %v5909, %v5629
      %v5942 = vsel %vm3112, %v5910, %v5631
      %v5943 = vsel %vm3112, %v5911, %v5633
      %v5944 = vsel %vm3112, %v5912, %v5635
      %v5945 = vsel %vm3112, %v5913, %v5637
      %v5946 = vsel %vm3112, %v5914, %v5639
      %v5947 = vsel %vm3112, %v5915, %v5641
      %v5948 = vsel %vm3112, %v5916, %v5643
      %v5949 = vsel %vm3112, %v5917, %v5645
      %v5950 = vsel %vm3112, %v5918, %v5647
      %v5951 = vsel %vm3112, %v5919, %v5649
      %v5952 = vsel %vm3112, %v5920, %v5651
      %v5953 = vsel %vm3112, %v5921, %v5653
      %v5954 = vsel %vm3112, %v5922, %v5655
      %v5955 = vsel %vm3112, %v5923, %v5657
      %v5956 = vsel %vm3112, %v5924, %v5659
      %v5957 = vsel %vm3112, %v5925, %v5661
      %v5958 = vsel %vm3145, %v5926, %v2794
      %v5959 = vsel %vm3145, %v5927, %v2796
      %v5960 = vsel %vm3145, %v5928, %v2798
      %v5961 = vsel %vm3145, %v5929, %v2800
      %v5962 = vsel %vm3145, %v5930, %v2802
      %v5963 = vsel %vm3145, %v5931, %v2804
      %v5964 = vsel %vm3145, %v5932, %v2806
      %v5965 = vsel %vm3145, %v5933, %v2808
      %v5966 = vsel %vm3145, %v5934, %v2810
      %v5967 = vsel %vm3145, %v5935, %v2812
      %v5968 = vsel %vm3145, %v5936, %v2814
      %v5969 = vsel %vm3145, %v5937, %v2816
      %v5970 = vsel %vm3145, %v5938, %v2818
      %v5971 = vsel %vm3145, %v5939, %v2820
      %v5972 = vsel %vm3145, %v5940, %v2822
      %v5973 = vsel %vm3145, %v5941, %v2824
      %v5974 = vsel %vm3145, %v5942, %v2826
      %v5975 = vsel %vm3145, %v5943, %v2828
      %v5976 = vsel %vm3145, %v5944, %v2830
      %v5977 = vsel %vm3145, %v5945, %v2832
      %v5978 = vsel %vm3145, %v5946, %v2834
      %v5979 = vsel %vm3145, %v5947, %v2836
      %v5980 = vsel %vm3145, %v5948, %v2838
      %v5981 = vsel %vm3145, %v5949, %v2840
      %v5982 = vsel %vm3145, %v5950, %v2842
      %v5983 = vsel %vm3145, %v5951, %v2844
      %v5984 = vsel %vm3145, %v5952, %v2846
      %v5985 = vsel %vm3145, %v5953, %v2848
      %v5986 = vsel %vm3145, %v5954, %v2850
      %v5987 = vsel %vm3145, %v5955, %v2852
      %v5988 = vsel %vm3145, %v5956, %v4959
      %v5989 = vsel %vm3145, %v5957, %v4961
      %v5990 = vsel %vm3178, %v5958, %v2890
      %v5991 = vsel %vm3178, %v5959, %v2892
      %v5992 = vsel %vm3178, %v5960, %v2894
      %v5993 = vsel %vm3178, %v5961, %v2896
      %v5994 = vsel %vm3178, %v5962, %v2898
      %v5995 = vsel %vm3178, %v5963, %v2900
      %v5996 = vsel %vm3178, %v5964, %v2902
      %v5997 = vsel %vm3178, %v5965, %v2904
      %v5998 = vsel %vm3178, %v5966, %v2906
      %v5999 = vsel %vm3178, %v5967, %v2908
      %v6000 = vsel %vm3178, %v5968, %v2910
      %v6001 = vsel %vm3178, %v5969, %v2912
      %v6002 = vsel %vm3178, %v5970, %v2914
      %v6003 = vsel %vm3178, %v5971, %v2916
      %v6004 = vsel %vm3178, %v5972, %v2918
      %v6005 = vsel %vm3178, %v5973, %v2920
      %v6006 = vsel %vm3178, %v5974, %v2922
      %v6007 = vsel %vm3178, %v5975, %v2924
      %v6008 = vsel %vm3178, %v5976, %v2926
      %v6009 = vsel %vm3178, %v5977, %v2928
      %v6010 = vsel %vm3178, %v5978, %v2930
      %v6011 = vsel %vm3178, %v5979, %v2932
      %v6012 = vsel %vm3178, %v5980, %v2934
      %v6013 = vsel %vm3178, %v5981, %v2936
      %v6014 = vsel %vm3178, %v5982, %v2938
      %v6015 = vsel %vm3178, %v5983, %v2940
      %v6016 = vsel %vm3178, %v5984, %v2942
      %v6017 = vsel %vm3178, %v5985, %v2944
      %v6018 = vsel %vm3178, %v5986, %v2946
      %v6019 = vsel %vm3178, %v5987, %v2948
      %v6020 = vsel %vm3178, %v5988, %v5695
      %v6021 = vsel %vm3178, %v5989, %v5697
      %v6022 = vsel %vm3211, %v5990, %v5703
      %v6023 = vsel %vm3211, %v5991, %v5705
      %v6024 = vsel %vm3211, %v5992, %v5707
      %v6025 = vsel %vm3211, %v5993, %v5709
      %v6026 = vsel %vm3211, %v5994, %v5711
      %v6027 = vsel %vm3211, %v5995, %v5713
      %v6028 = vsel %vm3211, %v5996, %v5715
      %v6029 = vsel %vm3211, %v5997, %v5717
      %v6030 = vsel %vm3211, %v5998, %v5719
      %v6031 = vsel %vm3211, %v5999, %v5721
      %v6032 = vsel %vm3211, %v6000, %v5723
      %v6033 = vsel %vm3211, %v6001, %v5725
      %v6034 = vsel %vm3211, %v6002, %v5727
      %v6035 = vsel %vm3211, %v6003, %v5729
      %v6036 = vsel %vm3211, %v6004, %v5731
      %v6037 = vsel %vm3211, %v6005, %v5733
      %v6038 = vsel %vm3211, %v6006, %v5735
      %v6039 = vsel %vm3211, %v6007, %v5737
      %v6040 = vsel %vm3211, %v6008, %v5739
      %v6041 = vsel %vm3211, %v6009, %v5741
      %v6042 = vsel %vm3211, %v6010, %v5743
      %v6043 = vsel %vm3211, %v6011, %v5745
      %v6044 = vsel %vm3211, %v6012, %v5747
      %v6045 = vsel %vm3211, %v6013, %v5749
      %v6046 = vsel %vm3211, %v6014, %v5751
      %v6047 = vsel %vm3211, %v6015, %v5753
      %v6048 = vsel %vm3211, %v6016, %v5755
      %v6049 = vsel %vm3211, %v6017, %v5757
      %v6050 = vsel %vm3211, %v6018, %v5759
      %v6051 = vsel %vm3211, %v6019, %v5761
      %v6052 = vsel %vm3211, %v6020, %v5763
      %v6053 = vsel %vm3211, %v6021, %v5765
      %v6055 = vsel %vm3247, %v6022, 0
      %v6058 = vsel %vm3247, %v6023, 0
      %v6061 = vsel %vm3247, %v6024, 0
      %v6064 = vsel %vm3247, %v6025, 0
      %v6067 = vsel %vm3247, %v6026, 0
      %v6070 = vsel %vm3247, %v6027, 0
      %v6073 = vsel %vm3247, %v6028, 0
      %v6076 = vsel %vm3247, %v6029, 0
      %v6079 = vsel %vm3247, %v6030, 0
      %v6082 = vsel %vm3247, %v6031, 0
      %v6085 = vsel %vm3247, %v6032, 0
      %v6088 = vsel %vm3247, %v6033, 0
      %v6091 = vsel %vm3247, %v6034, 0
      %v6094 = vsel %vm3247, %v6035, 0
      %v6097 = vsel %vm3247, %v6036, 0
      %v6100 = vsel %vm3247, %v6037, 0
      %v6103 = vsel %vm3247, %v6038, 0
      %v6106 = vsel %vm3247, %v6039, 0
      %v6109 = vsel %vm3247, %v6040, 0
      %v6112 = vsel %vm3247, %v6041, 0
      %v6115 = vsel %vm3247, %v6042, 0
      %v6118 = vsel %vm3247, %v6043, 0
      %v6121 = vsel %vm3247, %v6044, 0
      %v6124 = vsel %vm3247, %v6045, 0
      %v6127 = vsel %vm3247, %v6046, 0
      %v6130 = vsel %vm3247, %v6047, 0
      %v6133 = vsel %vm3247, %v6048, 0
      %v6136 = vsel %vm3247, %v6049, 0
      %v6139 = vsel %vm3247, %v6050, 0
      %v6142 = vsel %vm3247, %v6051, 0
      %v6145 = vsel %vm3247, %v6052, 0
      %v6148 = vsel %vm3247, %v6053, 0
      %6150 = vmatpush.msra.mxu0 0.0
      %6151 = vmatpush.msra.mxu0 0.0
      %6152 = vmatpush.msra.mxu0 0.0
      %6153 = vmatpush.msra.mxu0 0.0
      %6154 = vmatpush.msra.mxu0 0.0
      %6155 = vmatpush.msra.mxu0 0.0
      %6156 = vmatpush.msra.mxu0 0.0
      %6157 = vmatpush.msra.mxu0 0.0
      %6158 = vmatpush.msra.mxu0 0.0
      %6159 = vmatpush.msra.mxu0 0.0
      %6160 = vmatpush.msra.mxu0 0.0
      %6161 = vmatpush.msra.mxu0 %v3345
      %6162 = vmatpush.msra.mxu0 %v2176
      %6163 = vmatpush.msra.mxu0 %v2175
      %6164 = vmatpush.msra.mxu0 %v2174
      %6165 = vmatpush.msra.mxu0 %v2173
      %6166 = vmatmul.f32.gmra.mxu0 %v6055
      %v6167 = vpop.f32.mrf.mxu0
      %v6168 = vadd.f32 %v3245, %v6167
      %6169 = vmatmul.f32.gmra.mxu0 %v6058
      %v6170 = vpop.f32.mrf.mxu0
      %v6171 = vadd.f32 %v3245, %v6170
      %6172 = vmatmul.f32.gmra.mxu0 %v6061
      %v6173 = vpop.f32.mrf.mxu0
      %v6174 = vadd.f32 %v3245, %v6173
      %6175 = vmatmul.f32.gmra.mxu0 %v6064
      %v6176 = vpop.f32.mrf.mxu0
      %v6177 = vadd.f32 %v3245, %v6176
      %6178 = vmatmul.f32.gmra.mxu0 %v6067
      %v6179 = vpop.f32.mrf.mxu0
      %v6180 = vadd.f32 %v3245, %v6179
      %6181 = vmatmul.f32.gmra.mxu0 %v6070
      %v6182 = vpop.f32.mrf.mxu0
      %v6183 = vadd.f32 %v3245, %v6182
      %6184 = vmatmul.f32.gmra.mxu0 %v6073
      %v6185 = vpop.f32.mrf.mxu0
      %v6186 = vadd.f32 %v3245, %v6185
      %6187 = vmatmul.f32.gmra.mxu0 %v6076
      %v6188 = vpop.f32.mrf.mxu0
      %v6189 = vadd.f32 %v3245, %v6188
      %6190 = vmatmul.f32.gmra.mxu0 %v6079
      %v6191 = vpop.f32.mrf.mxu0
      %v6192 = vadd.f32 %v3245, %v6191
      %6193 = vmatmul.f32.gmra.mxu0 %v6082
      %v6194 = vpop.f32.mrf.mxu0
      %v6195 = vadd.f32 %v3245, %v6194
      %6196 = vmatmul.f32.gmra.mxu0 %v6085
      %v6197 = vpop.f32.mrf.mxu0
      %v6198 = vadd.f32 %v3245, %v6197
      %6199 = vmatmul.f32.gmra.mxu0 %v6088
      %v6200 = vpop.f32.mrf.mxu0
      %v6201 = vadd.f32 %v3245, %v6200
      %6202 = vmatmul.f32.gmra.mxu0 %v6091
      %v6203 = vpop.f32.mrf.mxu0
      %v6204 = vadd.f32 %v3245, %v6203
      %6205 = vmatmul.f32.gmra.mxu0 %v6094
      %v6206 = vpop.f32.mrf.mxu0
      %v6207 = vadd.f32 %v3245, %v6206
      %6208 = vmatmul.f32.gmra.mxu0 %v6097
      %v6209 = vpop.f32.mrf.mxu0
      %v6210 = vadd.f32 %v3245, %v6209
      %6211 = vmatmul.f32.gmra.mxu0 %v6100
      %v6212 = vpop.f32.mrf.mxu0
      %v6213 = vadd.f32 %v3245, %v6212
      %6214 = vmatmul.f32.gmra.mxu0 %v6103
      %v6215 = vpop.f32.mrf.mxu0
      %v6216 = vadd.f32 %v3245, %v6215
      %6217 = vmatmul.f32.gmra.mxu0 %v6106
      %v6218 = vpop.f32.mrf.mxu0
      %v6219 = vadd.f32 %v3245, %v6218
      %6220 = vmatmul.f32.gmra.mxu0 %v6109
      %v6221 = vpop.f32.mrf.mxu0
      %v6222 = vadd.f32 %v3245, %v6221
      %6223 = vmatmul.f32.gmra.mxu0 %v6112
      %v6224 = vpop.f32.mrf.mxu0
      %v6225 = vadd.f32 %v3245, %v6224
      %6226 = vmatmul.f32.gmra.mxu0 %v6115
      %v6227 = vpop.f32.mrf.mxu0
      %v6228 = vadd.f32 %v3245, %v6227
      %6229 = vmatmul.f32.gmra.mxu0 %v6118
      %v6230 = vpop.f32.mrf.mxu0
      %v6231 = vadd.f32 %v3245, %v6230
      %6232 = vmatmul.f32.gmra.mxu0 %v6121
      %v6233 = vpop.f32.mrf.mxu0
      %v6234 = vadd.f32 %v3245, %v6233
      %6235 = vmatmul.f32.gmra.mxu0 %v6124
      %v6236 = vpop.f32.mrf.mxu0
      %v6237 = vadd.f32 %v3245, %v6236
      %6238 = vmatmul.f32.gmra.mxu0 %v6127
      %v6239 = vpop.f32.mrf.mxu0
      %v6240 = vadd.f32 %v3245, %v6239
      %6241 = vmatmul.f32.gmra.mxu0 %v6130
      %v6242 = vpop.f32.mrf.mxu0
      %v6243 = vadd.f32 %v3245, %v6242
      %6244 = vmatmul.f32.gmra.mxu0 %v6133
      %v6245 = vpop.f32.mrf.mxu0
      %v6246 = vadd.f32 %v3245, %v6245
      %6247 = vmatmul.f32.gmra.mxu0 %v6136
      %v6248 = vpop.f32.mrf.mxu0
      %v6249 = vadd.f32 %v3245, %v6248
      %6250 = vmatmul.f32.gmra.mxu0 %v6139
      %v6251 = vpop.f32.mrf.mxu0
      %v6252 = vadd.f32 %v3245, %v6251
      %6253 = vmatmul.f32.gmra.mxu0 %v6142
      %v6254 = vpop.f32.mrf.mxu0
      %v6255 = vadd.f32 %v3245, %v6254
      %6256 = vmatmul.f32.gmra.mxu0 %v6145
      %v6257 = vpop.f32.mrf.mxu0
      %v6258 = vadd.f32 %v3245, %v6257
      %6259 = vmatmul.f32.gmra.mxu0 %v6148
      %v6260 = vpop.f32.mrf.mxu0
      %v6261 = vadd.f32 %v3245, %v6260
      %6262 = vdwg.mxu0
      %6263 = vxpose.xlu0.b32.start [1/16] %v6168, 128
      %6264 = vxpose.xlu0.b32.cont [2/16] %v6171, 128
      %6265 = vxpose.xlu0.b32.cont [3/16] %v6174, 128
      %6266 = vxpose.xlu0.b32.cont [4/16] %v6177, 128
      %6267 = vxpose.xlu0.b32.cont [5/16] %v6180, 128
      %6268 = vxpose.xlu0.b32.cont [6/16] %v6183, 128
      %6269 = vxpose.xlu0.b32.cont [7/16] %v6186, 128
      %6270 = vxpose.xlu0.b32.cont [8/16] %v6189, 128
      %6271 = vxpose.xlu0.b32.cont [9/16] %v6192, 128
      %6272 = vxpose.xlu0.b32.cont [10/16] %v6195, 128
      %6273 = vxpose.xlu0.b32.cont [11/16] %v6198, 128
      %6274 = vxpose.xlu0.b32.cont [12/16] %v6201, 128
      %6275 = vxpose.xlu0.b32.cont [13/16] %v6204, 128
      %6276 = vxpose.xlu0.b32.cont [14/16] %v6207, 128
      %6277 = vxpose.xlu0.b32.cont [15/16] %v6210, 128
      %6278 = vxpose.xlu0.b32.end [16/16] %v6213, 128
      %v6279 = vpop.trf.xlu0
      %v6280 = vpop.trf.xlu0
      %v6281 = vpop.trf.xlu0
      %v6282 = vpop.trf.xlu0
      %v6283 = vpop.trf.xlu0
      %v6284 = vpop.trf.xlu0
      %v6285 = vpop.trf.xlu0
      %v6286 = vpop.trf.xlu0
      %v6287 = vpop.trf.xlu0
      %v6288 = vpop.trf.xlu0
      %v6289 = vpop.trf.xlu0
      %v6290 = vpop.trf.xlu0
      %v6291 = vpop.trf.xlu0
      %v6292 = vpop.trf.xlu0
      %v6293 = vpop.trf.xlu0
      %v6294 = vpop.trf.xlu0
      %6295 = vxpose.xlu0.b32.start [1/16] %v6216, 128
      %6296 = vxpose.xlu0.b32.cont [2/16] %v6219, 128
      %6297 = vxpose.xlu0.b32.cont [3/16] %v6222, 128
      %6298 = vxpose.xlu0.b32.cont [4/16] %v6225, 128
      %6299 = vxpose.xlu0.b32.cont [5/16] %v6228, 128
      %6300 = vxpose.xlu0.b32.cont [6/16] %v6231, 128
      %6301 = vxpose.xlu0.b32.cont [7/16] %v6234, 128
      %6302 = vxpose.xlu0.b32.cont [8/16] %v6237, 128
      %6303 = vxpose.xlu0.b32.cont [9/16] %v6240, 128
      %6304 = vxpose.xlu0.b32.cont [10/16] %v6243, 128
      %6305 = vxpose.xlu0.b32.cont [11/16] %v6246, 128
      %6306 = vxpose.xlu0.b32.cont [12/16] %v6249, 128
      %6307 = vxpose.xlu0.b32.cont [13/16] %v6252, 128
      %6308 = vxpose.xlu0.b32.cont [14/16] %v6255, 128
      %6309 = vxpose.xlu0.b32.cont [15/16] %v6258, 128
      %6310 = vxpose.xlu0.b32.end [16/16] %v6261, 128
      %v6311 = vpop.trf.xlu0
      %v6312 = vpop.trf.xlu0
      %v6313 = vpop.trf.xlu0
      %v6314 = vpop.trf.xlu0
      %v6315 = vpop.trf.xlu0
      %v6316 = vpop.trf.xlu0
      %v6317 = vpop.trf.xlu0
      %v6318 = vpop.trf.xlu0
      %v6319 = vpop.trf.xlu0
      %v6320 = vpop.trf.xlu0
      %v6321 = vpop.trf.xlu0
      %v6322 = vpop.trf.xlu0
      %v6323 = vpop.trf.xlu0
      %v6324 = vpop.trf.xlu0
      %v6325 = vpop.trf.xlu0
      %v6326 = vpop.trf.xlu0
      %s6327 = scalar_lea.vmem %s443, 48
      %6328 = vst [vmem:[%s6327] sm:$0xff] %v6279
      %6329 = vst [vmem:[%s6327 + $0x8] sm:$0xff] %v6311
      %s6330 = smul.u32 2, %s23
      %p6331 = scmp.lt.s32.totalorder %s22, 1
      %s6332 = scalar_select %p6331, %s22, 1
      %p6333 = scmp.lt.s32.totalorder %s6330, 1
      %s6334 = scalar_select %p6333, %s6330, 1
      %s6335 = smul.addr %s6332, 8
      %s6336 = sadd.s32 %s6334, %s6335
      %s6337 = smul.addr %s6336, 8
      %s6338 = scalar_lea.vmem %s7, %s6337
      // Predicated region
      $region49: #{up_conv_forward.1} parent=47 // pred_check
        %p6339 = pneg %p234
      $region50: #{up_conv_forward.1} parent=47 // pred_check_branch
        %6341 = sbr.rel (%p6339) target = $region52
      $region51: #{up_conv_forward.1} parent=47 // pred_region
        %s6342 = smul.u32 2, %s23
      $region52: #{up_conv_forward.1} parent=47 // pred_fallthru
        _
    $region48: #{up_conv_forward.1} parent=5 // pred_fallthru
      _
    %p6343 = scmp.le.s32.totalorder 2, %s13
    // Predicated region
    $region53: #{up_conv_forward.1} parent=5 // pred_check
      %p6344 = pneg %p6343
    $region54: #{up_conv_forward.1} parent=5 // pred_check_branch
      %6346 = sbr.rel (%p6344) target = $region56
    $region55: #{up_conv_forward.1} parent=5 // pred_region
      %s6347 = ssub.s32 %s13, 2
      // Predicated region
      $region57: #{up_conv_forward.1} parent=55 // pred_check
        %p6348 = pneg %p240
      $region58: #{up_conv_forward.1} parent=55 // pred_check_branch
        %6350 = sbr.rel (%p6348) target = $region60
      $region59: #{up_conv_forward.1} parent=55 // pred_region
        %s6351 = smul.u32 2, %s25
        %p6352 = scmp.lt.s32.totalorder %s24, 1
        %s6353 = scalar_select %p6352, %s24, 1
        %p6354 = scmp.lt.s32.totalorder %s6351, 1
        %s6355 = scalar_select %p6354, %s6351, 1
        %s6356 = smul.addr %s6353, 8
        %s6357 = sadd.s32 %s6355, %s6356
        %s6358 = smul.addr %s6357, 8
        %s6359 = scalar_lea.vmem %s7, %s6358
      $region60: #{up_conv_forward.1} parent=55 // pred_fallthru
        _
    $region56: #{up_conv_forward.1} parent=5 // pred_fallthru
      _
  $region6: #{up_conv_forward.1} parent=0 // loop_footer
    %s17 = sadd.s32 1, %s13
  $region7: #{up_conv_forward.1} parent=0 // loop_footer_branch
    %12 = sbr.rel target = $region3
  $region8: #{up_conv_forward.1} parent=0 // loop_exit
    _

</llo_original>
